<compile_context>
chip_gen: v7x
topology: tpu7x:2x2x1
jax: 0.10.0
libtpu: 0.0.40
codegen_flags: <defaults>
</compile_context>

<pallas_src>
import functools

import jax
import jax.numpy as jnp
from jax import lax
from jax.experimental import pallas as pl
from jax.experimental.pallas import tpu as pltpu


# ----------------------------- in-kernel math ------------------------------

def _sigmoid(x):
    # One EUP op (tanh); the scale/offset ride the VPU. Exact (no approx recip).
    return 0.5 * (1.0 + jnp.tanh(0.5 * x))


# ------------------------------ fused kernel -------------------------------

def seq2seq_kernel(tf_ref,                       # (T-1,) int32, SMEM (prefetch)
                   src_proj_ref,                 # (S, B, 4H)  precomputed x-proj
                   tgt_proj_ref,                 # (T, B, 4H)  precomputed x-proj
                   enc_whh_ref,                  # (H, 4H)
                   w_comb_ref,                   # (H, 8H) = [dec_whh | W_fold]
                   b_fold_ref,                   # (1, 4H)
                   wout_ref,                     # (H, Dtp)
                   bout_ref,                     # (1, Dtp)
                   out_ref,                      # (T, B, Dtp)
                   *, H, S, T, B, Dtp):
    # Weights hoisted once (small: ~16 vregs total at H=32).
    enc_whh = enc_whh_ref[...]
    w_comb = w_comb_ref[...]
    wout = wout_ref[...]
    # Per-step biases pre-broadcast ONCE (broadcast_in_dim is not CSE'd).
    b_fold = jnp.broadcast_to(b_fold_ref[...], (B, 4 * H))
    bout = jnp.broadcast_to(bout_ref[...], (B, Dtp))

    def cell(gates, c):
        # PyTorch gate order: i, f, g, o.  (H=32 slices need lane realignment;
        # free when the production H is a multiple of 128.)
        i = _sigmoid(gates[:, 0:H])
        f = _sigmoid(gates[:, H:2 * H])
        g = jnp.tanh(gates[:, 2 * H:3 * H])
        o = _sigmoid(gates[:, 3 * H:4 * H])
        c_new = f * c + i * g
        h_new = o * jnp.tanh(c_new)
        return h_new, c_new

    # ----------------------------- encoder --------------------------------
    h = jnp.zeros((B, H), jnp.float32)
    c = jnp.zeros((B, H), jnp.float32)

    def enc_body(s, carry):
        h, c = carry
        gates = src_proj_ref[s] + jnp.dot(
            h, enc_whh, preferred_element_type=jnp.float32)
        return cell(gates, c)

    h, c = lax.fori_loop(0, S, enc_body, (h, c), unroll=True)

    # ----------------------------- decoder --------------------------------
    # outputs[:, 0] stays zero; rows 1..T-1 are overwritten below.
    out_ref[pl.ds(0, 1)] = jnp.zeros((1, B, Dtp), jnp.float32)

    # Gates for decoder step 0: input is always target[:, 0] (projection is
    # precomputed); only the recurrent half of the combined matmul is needed.
    comb0 = jnp.dot(h, w_comb, preferred_element_type=jnp.float32)
    gates0 = tgt_proj_ref[0] + comb0[:, :4 * H]

    def dec_body(t, carry):
        h, c, gates = carry
        h, c = cell(gates, c)
        # Stored output: off the recurrent critical path.
        out = jnp.dot(h, wout, preferred_element_type=jnp.float32) + bout
        out_ref[pl.ds(t + 1, 1)] = out[None]
        # Single chained matmul: recurrent term and folded output->input
        # projection for the next step, fused into one (H, 8H) matmul.
        comb = jnp.dot(h, w_comb, preferred_element_type=jnp.float32)
        rec = comb[:, :4 * H]
        fold = comb[:, 4 * H:] + b_fold
        # Teacher forcing: flag t selects target[t+1]'s projection vs. the
        # projection of the decoder's own output.
        gates_next = rec + jnp.where(tf_ref[t] == 1, tgt_proj_ref[t + 1], fold)
        return h, c, gates_next

    lax.fori_loop(0, T - 1, dec_body, (h, c, gates0), unroll=True)


def seq2seq_pallas(tf_flags, src_proj, tgt_proj, enc_whh, w_comb, b_fold,
                   wout, bout, H):
    S, B, _ = src_proj.shape
    T = tgt_proj.shape[0]
    Dtp = wout.shape[1]
    kernel = functools.partial(seq2seq_kernel, H=H, S=S, T=T, B=B, Dtp=Dtp)

    def vmem_spec():
        return pl.BlockSpec(memory_space=pltpu.MemorySpace.VMEM)

    return pl.pallas_call(
        kernel,
        out_shape=jax.ShapeDtypeStruct((T, B, Dtp), jnp.float32),
        grid_spec=pltpu.PrefetchScalarGridSpec(
            num_scalar_prefetch=1,               # tf_flags -> SMEM
            grid=(1,),
            in_specs=[vmem_spec() for _ in range(7)],
            out_specs=vmem_spec(),
        ),
        compiler_params=pltpu.CompilerParams(
            dimension_semantics=("arbitrary",),
            vmem_limit_bytes=32 * 1024 * 1024),
    )(tf_flags, src_proj, tgt_proj, enc_whh, w_comb, b_fold, wout, bout)


# ------------------------------- wrapper -----------------------------------

def seq2seq_forward(params, source, target, tf_flags):
    """source: (B, S, D_src), target: (B, T, D_tgt) batch-major like PyTorch."""
    H = params["enc_whh"].shape[0]
    B, S, Ds = source.shape
    _, T, Dt = target.shape

    # Hardware-dense padding: batch -> multiple of 8 (f32 sublane); target
    # feature dim of the *output path* -> multiple of 128 (lane-dense stores).
    # Zero padding is inert: padded weight cols are zero, padded batch rows are
    # row-independent garbage that is sliced off, padded output lanes never
    # feed back (the feedback path uses the unpadded folded projection).
    B_pad = max(8, ((B + 7) // 8) * 8)
    Dt_pad = max(128, ((Dt + 127) // 128) * 128)

    src = jnp.zeros((B_pad, S, Ds), jnp.float32).at[:B].set(
        source.astype(jnp.float32))
    tgt = jnp.zeros((B_pad, T, Dt), jnp.float32).at[:B].set(
        target.astype(jnp.float32))
    src_tm = jnp.transpose(src, (1, 0, 2))       # (S, B_pad, Ds)
    tgt_tm = jnp.transpose(tgt, (1, 0, 2))       # (T, B_pad, Dt)

    # Input projections off the recurrent critical path (one batched matmul
    # each, biases folded in).
    src_proj = jnp.einsum("sbd,dh->sbh", src_tm, params["enc_wih"]) + params["enc_b"]
    tgt_proj = jnp.einsum("tbd,dh->tbh", tgt_tm, params["dec_wih"]) + params["dec_b"]

    # Fold the decoder output projection into the next-step input projection.
    w_fold = jnp.dot(params["dec_wout"], params["dec_wih"])               # (H, 4H)
    b_fold = jnp.dot(params["dec_bout"], params["dec_wih"]) + params["dec_b"]
    w_comb = jnp.concatenate([params["dec_whh"], w_fold], axis=1)         # (H, 8H)

    wout = jnp.zeros((H, Dt_pad), jnp.float32).at[:, :Dt].set(params["dec_wout"])
    bout = jnp.zeros((1, Dt_pad), jnp.float32).at[:, :Dt].set(params["dec_bout"])

    out_tm = seq2seq_pallas(tf_flags, src_proj, tgt_proj,
                            params["enc_whh"], w_comb, b_fold, wout, bout, H)

    out = jnp.transpose(out_tm, (1, 0, 2))
    return out[:B, :, :Dt]


# ------------------------------ reference ----------------------------------

def seq2seq_reference(params, source, target, tf_flags):
    """Pure-JAX reference matching the PyTorch forward semantics."""
    H = params["enc_whh"].shape[0]
    B, T, Dt = target.shape
    S = source.shape[1]

    def sigmoid(x):
        return 1.0 / (1.0 + jnp.exp(-x))

    def lstm(x, h, c, wih, whh, b):
        gates = (jnp.dot(x, wih, precision=lax.Precision.HIGHEST)
                 + jnp.dot(h, whh, precision=lax.Precision.HIGHEST) + b)
        i = sigmoid(gates[:, 0:H])
        f = sigmoid(gates[:, H:2 * H])
        g = jnp.tanh(gates[:, 2 * H:3 * H])
        o = sigmoid(gates[:, 3 * H:4 * H])
        c2 = f * c + i * g
        return o * jnp.tanh(c2), c2

    h = jnp.zeros((B, H), jnp.float32)
    c = jnp.zeros((B, H), jnp.float32)
    for s in range(S):
        h, c = lstm(source[:, s], h, c,
                    params["enc_wih"], params["enc_whh"], params["enc_b"])

    outputs = jnp.zeros((B, T, Dt), jnp.float32)
    dec_in = target[:, 0]
    for t in range(T - 1):
        h, c = lstm(dec_in, h, c,
                    params["dec_wih"], params["dec_whh"], params["dec_b"])
        out = jnp.dot(h, params["dec_wout"],
                      precision=lax.Precision.HIGHEST) + params["dec_bout"]
        outputs = outputs.at[:, t + 1].set(out)
        dec_in = jnp.where(tf_flags[t] == 1, target[:, t + 1], out)
    return outputs


def init_params(key, Ds, Dt, H):
    ks = jax.random.split(key, 9)
    s = 0.1
    return {
        "enc_wih": s * jax.random.normal(ks[0], (Ds, 4 * H), jnp.float32),
        "enc_whh": s * jax.random.normal(ks[1], (H, 4 * H), jnp.float32),
        "enc_b": s * jax.random.normal(ks[2], (1, 4 * H), jnp.float32),
        "dec_wih": s * jax.random.normal(ks[3], (Dt, 4 * H), jnp.float32),
        "dec_whh": s * jax.random.normal(ks[4], (H, 4 * H), jnp.float32),
        "dec_b": s * jax.random.normal(ks[5], (1, 4 * H), jnp.float32),
        "dec_wout": s * jax.random.normal(ks[6], (H, Dt), jnp.float32),
        "dec_bout": s * jax.random.normal(ks[7], (1, Dt), jnp.float32),
    }


if __name__ == "__main__":
    B, S, T, Ds, Dt, H = 2, 8, 8, 8, 8, 32
    key = jax.random.PRNGKey(0)
    k_src, k_tgt, k_par, k_tf = jax.random.split(key, 4)

    source = jax.random.normal(k_src, (B, S, Ds), jnp.float32)
    target = jax.random.normal(k_tgt, (B, T, Dt), jnp.float32)
    params = init_params(k_par, Ds, Dt, H)

    # TODO(synk): torch.rand(1) per step is stochastic at run time; here the
    # teacher-forcing decisions are pre-sampled deterministically host-side.
    teacher_forcing_ratio = 0.2
    tf_flags = (jax.random.uniform(k_tf, (T - 1,)) <
                teacher_forcing_ratio).astype(jnp.int32)

    out = seq2seq_forward(params, source, target, tf_flags)
    out = jax.block_until_ready(out)

    ref = seq2seq_reference(params, source, target, tf_flags)
    assert out.shape == (B, T, Dt)
    assert bool(jnp.all(jnp.isfinite(out)))
    assert jnp.allclose(out, ref, atol=2e-2, rtol=2e-2)
    print("KERNEL_OK")
</pallas_src>

<mosaic_0001>
module attributes {stable_mosaic.version = 11 : i64} {
  func.func @seq2seq_kernel(%arg0: i32, %arg1: memref<7xi32, #tpu.memory_space<smem>>, %arg2: memref<8x8x128xf32, #tpu.memory_space<vmem>>, %arg3: memref<8x8x128xf32, #tpu.memory_space<vmem>>, %arg4: memref<32x128xf32, #tpu.memory_space<vmem>>, %arg5: memref<32x256xf32, #tpu.memory_space<vmem>>, %arg6: memref<1x128xf32, #tpu.memory_space<vmem>>, %arg7: memref<32x128xf32, #tpu.memory_space<vmem>>, %arg8: memref<1x128xf32, #tpu.memory_space<vmem>>, %arg9: memref<8x8x128xf32, #tpu.memory_space<vmem>>) attributes {dimension_semantics = [#tpu.dimension_semantics<arbitrary>], iteration_bounds = array<i64: 1>, scalar_prefetch = 1 : i64, scratch_operands = 0 : i64, tpu.core_type = #tpu.core_type<tc>, window_params = [{pipeline_mode = #tpu.pipeline_mode<synchronous>, transform_indices = @transform_0, window_bounds = array<i64: 8, 8, 128>}, {pipeline_mode = #tpu.pipeline_mode<synchronous>, transform_indices = @transform_1, window_bounds = array<i64: 8, 8, 128>}, {pipeline_mode = #tpu.pipeline_mode<synchronous>, transform_indices = @transform_2, window_bounds = array<i64: 32, 128>}, {pipeline_mode = #tpu.pipeline_mode<synchronous>, transform_indices = @transform_3, window_bounds = array<i64: 32, 256>}, {pipeline_mode = #tpu.pipeline_mode<synchronous>, transform_indices = @transform_4, window_bounds = array<i64: 1, 128>}, {pipeline_mode = #tpu.pipeline_mode<synchronous>, transform_indices = @transform_5, window_bounds = array<i64: 32, 128>}, {pipeline_mode = #tpu.pipeline_mode<synchronous>, transform_indices = @transform_6, window_bounds = array<i64: 1, 128>}, {pipeline_mode = #tpu.pipeline_mode<synchronous>, transform_indices = @transform_7, window_bounds = array<i64: 8, 8, 128>}]} {
    %c0 = arith.constant 0 : index
    %c0_0 = arith.constant 0 : index
    %0 = vector.load %arg4[%c0, %c0_0] : memref<32x128xf32, #tpu.memory_space<vmem>>, vector<32x128xf32>
    %c0_1 = arith.constant 0 : index
    %c0_2 = arith.constant 0 : index
    %1 = vector.load %arg5[%c0_1, %c0_2] : memref<32x256xf32, #tpu.memory_space<vmem>>, vector<32x256xf32>
    %c0_3 = arith.constant 0 : index
    %c0_4 = arith.constant 0 : index
    %2 = vector.load %arg7[%c0_3, %c0_4] : memref<32x128xf32, #tpu.memory_space<vmem>>, vector<32x128xf32>
    %c0_5 = arith.constant 0 : index
    %c0_6 = arith.constant 0 : index
    %3 = vector.load %arg6[%c0_5, %c0_6] : memref<1x128xf32, #tpu.memory_space<vmem>>, vector<1x128xf32>
    %4 = vector.shape_cast %3 : vector<1x128xf32> to vector<1x128xf32>
    %5 = vector.broadcast %4 : vector<1x128xf32> to vector<8x128xf32>
    %c0_7 = arith.constant 0 : index
    %c0_8 = arith.constant 0 : index
    %6 = vector.load %arg8[%c0_7, %c0_8] : memref<1x128xf32, #tpu.memory_space<vmem>>, vector<1x128xf32>
    %7 = vector.shape_cast %6 : vector<1x128xf32> to vector<1x128xf32>
    %8 = vector.broadcast %7 : vector<1x128xf32> to vector<8x128xf32>
    %cst = arith.constant 0.000000e+00 : f32
    %9 = vector.broadcast %cst : f32 to vector<8x32xf32>
    %cst_9 = arith.constant 0.000000e+00 : f32
    %10 = vector.broadcast %cst_9 : f32 to vector<8x32xf32>
    %c0_i32 = arith.constant 0 : i32
    %11 = arith.index_cast %c0_i32 : i32 to index
    %c0_10 = arith.constant 0 : index
    %c0_11 = arith.constant 0 : index
    %12 = vector.load %arg2[%11, %c0_10, %c0_11] : memref<8x8x128xf32, #tpu.memory_space<vmem>>, vector<1x8x128xf32>
    %13 = vector.shape_cast %12 : vector<1x8x128xf32> to vector<8x128xf32>
    %cst_12 = arith.constant dense<0.000000e+00> : vector<8x128xf32>
    %14 = tpu.matmul %9, %0, %cst_12 {dimension_numbers = #tpu.dot_dimension_numbers<[1], [0], [0], [1], [0, 0, 1, 1], [], []>} : vector<8x32xf32>, vector<32x128xf32>, vector<8x128xf32> -> vector<8x128xf32>
    %15 = arith.addf %13, %14 : vector<8x128xf32>
    %16 = vector.extract_strided_slice %15 {offsets = [0, 0], sizes = [8, 32], strides = [1, 1]} : vector<8x128xf32> to vector<8x32xf32>
    %cst_13 = arith.constant 5.000000e-01 : f32
    %17 = vector.broadcast %cst_13 : f32 to vector<8x32xf32>
    %18 = arith.mulf %17, %16 : vector<8x32xf32>
    %19 = math.tanh %18 : vector<8x32xf32>
    %cst_14 = arith.constant 1.000000e+00 : f32
    %20 = vector.broadcast %cst_14 : f32 to vector<8x32xf32>
    %21 = arith.addf %20, %19 : vector<8x32xf32>
    %cst_15 = arith.constant 5.000000e-01 : f32
    %22 = vector.broadcast %cst_15 : f32 to vector<8x32xf32>
    %23 = arith.mulf %22, %21 : vector<8x32xf32>
    %24 = vector.extract_strided_slice %15 {offsets = [0, 32], sizes = [8, 32], strides = [1, 1]} : vector<8x128xf32> to vector<8x32xf32>
    %cst_16 = arith.constant 5.000000e-01 : f32
    %25 = vector.broadcast %cst_16 : f32 to vector<8x32xf32>
    %26 = arith.mulf %25, %24 : vector<8x32xf32>
    %27 = math.tanh %26 : vector<8x32xf32>
    %cst_17 = arith.constant 1.000000e+00 : f32
    %28 = vector.broadcast %cst_17 : f32 to vector<8x32xf32>
    %29 = arith.addf %28, %27 : vector<8x32xf32>
    %cst_18 = arith.constant 5.000000e-01 : f32
    %30 = vector.broadcast %cst_18 : f32 to vector<8x32xf32>
    %31 = arith.mulf %30, %29 : vector<8x32xf32>
    %32 = vector.extract_strided_slice %15 {offsets = [0, 64], sizes = [8, 32], strides = [1, 1]} : vector<8x128xf32> to vector<8x32xf32>
    %33 = math.tanh %32 : vector<8x32xf32>
    %34 = vector.extract_strided_slice %15 {offsets = [0, 96], sizes = [8, 32], strides = [1, 1]} : vector<8x128xf32> to vector<8x32xf32>
    %cst_19 = arith.constant 5.000000e-01 : f32
    %35 = vector.broadcast %cst_19 : f32 to vector<8x32xf32>
    %36 = arith.mulf %35, %34 : vector<8x32xf32>
    %37 = math.tanh %36 : vector<8x32xf32>
    %cst_20 = arith.constant 1.000000e+00 : f32
    %38 = vector.broadcast %cst_20 : f32 to vector<8x32xf32>
    %39 = arith.addf %38, %37 : vector<8x32xf32>
    %cst_21 = arith.constant 5.000000e-01 : f32
    %40 = vector.broadcast %cst_21 : f32 to vector<8x32xf32>
    %41 = arith.mulf %40, %39 : vector<8x32xf32>
    %42 = arith.mulf %31, %10 : vector<8x32xf32>
    %43 = arith.mulf %23, %33 : vector<8x32xf32>
    %44 = arith.addf %42, %43 : vector<8x32xf32>
    %45 = math.tanh %44 : vector<8x32xf32>
    %46 = arith.mulf %41, %45 : vector<8x32xf32>
    %c1_i32 = arith.constant 1 : i32
    %47 = arith.index_cast %c1_i32 : i32 to index
    %c0_22 = arith.constant 0 : index
    %c0_23 = arith.constant 0 : index
    %48 = vector.load %arg2[%47, %c0_22, %c0_23] : memref<8x8x128xf32, #tpu.memory_space<vmem>>, vector<1x8x128xf32>
    %49 = vector.shape_cast %48 : vector<1x8x128xf32> to vector<8x128xf32>
    %cst_24 = arith.constant dense<0.000000e+00> : vector<8x128xf32>
    %50 = tpu.matmul %46, %0, %cst_24 {dimension_numbers = #tpu.dot_dimension_numbers<[1], [0], [0], [1], [0, 0, 1, 1], [], []>} : vector<8x32xf32>, vector<32x128xf32>, vector<8x128xf32> -> vector<8x128xf32>
    %51 = arith.addf %49, %50 : vector<8x128xf32>
    %52 = vector.extract_strided_slice %51 {offsets = [0, 0], sizes = [8, 32], strides = [1, 1]} : vector<8x128xf32> to vector<8x32xf32>
    %cst_25 = arith.constant 5.000000e-01 : f32
    %53 = vector.broadcast %cst_25 : f32 to vector<8x32xf32>
    %54 = arith.mulf %53, %52 : vector<8x32xf32>
    %55 = math.tanh %54 : vector<8x32xf32>
    %cst_26 = arith.constant 1.000000e+00 : f32
    %56 = vector.broadcast %cst_26 : f32 to vector<8x32xf32>
    %57 = arith.addf %56, %55 : vector<8x32xf32>
    %cst_27 = arith.constant 5.000000e-01 : f32
    %58 = vector.broadcast %cst_27 : f32 to vector<8x32xf32>
    %59 = arith.mulf %58, %57 : vector<8x32xf32>
    %60 = vector.extract_strided_slice %51 {offsets = [0, 32], sizes = [8, 32], strides = [1, 1]} : vector<8x128xf32> to vector<8x32xf32>
    %cst_28 = arith.constant 5.000000e-01 : f32
    %61 = vector.broadcast %cst_28 : f32 to vector<8x32xf32>
    %62 = arith.mulf %61, %60 : vector<8x32xf32>
    %63 = math.tanh %62 : vector<8x32xf32>
    %cst_29 = arith.constant 1.000000e+00 : f32
    %64 = vector.broadcast %cst_29 : f32 to vector<8x32xf32>
    %65 = arith.addf %64, %63 : vector<8x32xf32>
    %cst_30 = arith.constant 5.000000e-01 : f32
    %66 = vector.broadcast %cst_30 : f32 to vector<8x32xf32>
    %67 = arith.mulf %66, %65 : vector<8x32xf32>
    %68 = vector.extract_strided_slice %51 {offsets = [0, 64], sizes = [8, 32], strides = [1, 1]} : vector<8x128xf32> to vector<8x32xf32>
    %69 = math.tanh %68 : vector<8x32xf32>
    %70 = vector.extract_strided_slice %51 {offsets = [0, 96], sizes = [8, 32], strides = [1, 1]} : vector<8x128xf32> to vector<8x32xf32>
    %cst_31 = arith.constant 5.000000e-01 : f32
    %71 = vector.broadcast %cst_31 : f32 to vector<8x32xf32>
    %72 = arith.mulf %71, %70 : vector<8x32xf32>
    %73 = math.tanh %72 : vector<8x32xf32>
    %cst_32 = arith.constant 1.000000e+00 : f32
    %74 = vector.broadcast %cst_32 : f32 to vector<8x32xf32>
    %75 = arith.addf %74, %73 : vector<8x32xf32>
    %cst_33 = arith.constant 5.000000e-01 : f32
    %76 = vector.broadcast %cst_33 : f32 to vector<8x32xf32>
    %77 = arith.mulf %76, %75 : vector<8x32xf32>
    %78 = arith.mulf %67, %44 : vector<8x32xf32>
    %79 = arith.mulf %59, %69 : vector<8x32xf32>
    %80 = arith.addf %78, %79 : vector<8x32xf32>
    %81 = math.tanh %80 : vector<8x32xf32>
    %82 = arith.mulf %77, %81 : vector<8x32xf32>
    %c2_i32 = arith.constant 2 : i32
    %83 = arith.index_cast %c2_i32 : i32 to index
    %c0_34 = arith.constant 0 : index
    %c0_35 = arith.constant 0 : index
    %84 = vector.load %arg2[%83, %c0_34, %c0_35] : memref<8x8x128xf32, #tpu.memory_space<vmem>>, vector<1x8x128xf32>
    %85 = vector.shape_cast %84 : vector<1x8x128xf32> to vector<8x128xf32>
    %cst_36 = arith.constant dense<0.000000e+00> : vector<8x128xf32>
    %86 = tpu.matmul %82, %0, %cst_36 {dimension_numbers = #tpu.dot_dimension_numbers<[1], [0], [0], [1], [0, 0, 1, 1], [], []>} : vector<8x32xf32>, vector<32x128xf32>, vector<8x128xf32> -> vector<8x128xf32>
    %87 = arith.addf %85, %86 : vector<8x128xf32>
    %88 = vector.extract_strided_slice %87 {offsets = [0, 0], sizes = [8, 32], strides = [1, 1]} : vector<8x128xf32> to vector<8x32xf32>
    %cst_37 = arith.constant 5.000000e-01 : f32
    %89 = vector.broadcast %cst_37 : f32 to vector<8x32xf32>
    %90 = arith.mulf %89, %88 : vector<8x32xf32>
    %91 = math.tanh %90 : vector<8x32xf32>
    %cst_38 = arith.constant 1.000000e+00 : f32
    %92 = vector.broadcast %cst_38 : f32 to vector<8x32xf32>
    %93 = arith.addf %92, %91 : vector<8x32xf32>
    %cst_39 = arith.constant 5.000000e-01 : f32
    %94 = vector.broadcast %cst_39 : f32 to vector<8x32xf32>
    %95 = arith.mulf %94, %93 : vector<8x32xf32>
    %96 = vector.extract_strided_slice %87 {offsets = [0, 32], sizes = [8, 32], strides = [1, 1]} : vector<8x128xf32> to vector<8x32xf32>
    %cst_40 = arith.constant 5.000000e-01 : f32
    %97 = vector.broadcast %cst_40 : f32 to vector<8x32xf32>
    %98 = arith.mulf %97, %96 : vector<8x32xf32>
    %99 = math.tanh %98 : vector<8x32xf32>
    %cst_41 = arith.constant 1.000000e+00 : f32
    %100 = vector.broadcast %cst_41 : f32 to vector<8x32xf32>
    %101 = arith.addf %100, %99 : vector<8x32xf32>
    %cst_42 = arith.constant 5.000000e-01 : f32
    %102 = vector.broadcast %cst_42 : f32 to vector<8x32xf32>
    %103 = arith.mulf %102, %101 : vector<8x32xf32>
    %104 = vector.extract_strided_slice %87 {offsets = [0, 64], sizes = [8, 32], strides = [1, 1]} : vector<8x128xf32> to vector<8x32xf32>
    %105 = math.tanh %104 : vector<8x32xf32>
    %106 = vector.extract_strided_slice %87 {offsets = [0, 96], sizes = [8, 32], strides = [1, 1]} : vector<8x128xf32> to vector<8x32xf32>
    %cst_43 = arith.constant 5.000000e-01 : f32
    %107 = vector.broadcast %cst_43 : f32 to vector<8x32xf32>
    %108 = arith.mulf %107, %106 : vector<8x32xf32>
    %109 = math.tanh %108 : vector<8x32xf32>
    %cst_44 = arith.constant 1.000000e+00 : f32
    %110 = vector.broadcast %cst_44 : f32 to vector<8x32xf32>
    %111 = arith.addf %110, %109 : vector<8x32xf32>
    %cst_45 = arith.constant 5.000000e-01 : f32
    %112 = vector.broadcast %cst_45 : f32 to vector<8x32xf32>
    %113 = arith.mulf %112, %111 : vector<8x32xf32>
    %114 = arith.mulf %103, %80 : vector<8x32xf32>
    %115 = arith.mulf %95, %105 : vector<8x32xf32>
    %116 = arith.addf %114, %115 : vector<8x32xf32>
    %117 = math.tanh %116 : vector<8x32xf32>
    %118 = arith.mulf %113, %117 : vector<8x32xf32>
    %c3_i32 = arith.constant 3 : i32
    %119 = arith.index_cast %c3_i32 : i32 to index
    %c0_46 = arith.constant 0 : index
    %c0_47 = arith.constant 0 : index
    %120 = vector.load %arg2[%119, %c0_46, %c0_47] : memref<8x8x128xf32, #tpu.memory_space<vmem>>, vector<1x8x128xf32>
    %121 = vector.shape_cast %120 : vector<1x8x128xf32> to vector<8x128xf32>
    %cst_48 = arith.constant dense<0.000000e+00> : vector<8x128xf32>
    %122 = tpu.matmul %118, %0, %cst_48 {dimension_numbers = #tpu.dot_dimension_numbers<[1], [0], [0], [1], [0, 0, 1, 1], [], []>} : vector<8x32xf32>, vector<32x128xf32>, vector<8x128xf32> -> vector<8x128xf32>
    %123 = arith.addf %121, %122 : vector<8x128xf32>
    %124 = vector.extract_strided_slice %123 {offsets = [0, 0], sizes = [8, 32], strides = [1, 1]} : vector<8x128xf32> to vector<8x32xf32>
    %cst_49 = arith.constant 5.000000e-01 : f32
    %125 = vector.broadcast %cst_49 : f32 to vector<8x32xf32>
    %126 = arith.mulf %125, %124 : vector<8x32xf32>
    %127 = math.tanh %126 : vector<8x32xf32>
    %cst_50 = arith.constant 1.000000e+00 : f32
    %128 = vector.broadcast %cst_50 : f32 to vector<8x32xf32>
    %129 = arith.addf %128, %127 : vector<8x32xf32>
    %cst_51 = arith.constant 5.000000e-01 : f32
    %130 = vector.broadcast %cst_51 : f32 to vector<8x32xf32>
    %131 = arith.mulf %130, %129 : vector<8x32xf32>
    %132 = vector.extract_strided_slice %123 {offsets = [0, 32], sizes = [8, 32], strides = [1, 1]} : vector<8x128xf32> to vector<8x32xf32>
    %cst_52 = arith.constant 5.000000e-01 : f32
    %133 = vector.broadcast %cst_52 : f32 to vector<8x32xf32>
    %134 = arith.mulf %133, %132 : vector<8x32xf32>
    %135 = math.tanh %134 : vector<8x32xf32>
    %cst_53 = arith.constant 1.000000e+00 : f32
    %136 = vector.broadcast %cst_53 : f32 to vector<8x32xf32>
    %137 = arith.addf %136, %135 : vector<8x32xf32>
    %cst_54 = arith.constant 5.000000e-01 : f32
    %138 = vector.broadcast %cst_54 : f32 to vector<8x32xf32>
    %139 = arith.mulf %138, %137 : vector<8x32xf32>
    %140 = vector.extract_strided_slice %123 {offsets = [0, 64], sizes = [8, 32], strides = [1, 1]} : vector<8x128xf32> to vector<8x32xf32>
    %141 = math.tanh %140 : vector<8x32xf32>
    %142 = vector.extract_strided_slice %123 {offsets = [0, 96], sizes = [8, 32], strides = [1, 1]} : vector<8x128xf32> to vector<8x32xf32>
    %cst_55 = arith.constant 5.000000e-01 : f32
    %143 = vector.broadcast %cst_55 : f32 to vector<8x32xf32>
    %144 = arith.mulf %143, %142 : vector<8x32xf32>
    %145 = math.tanh %144 : vector<8x32xf32>
    %cst_56 = arith.constant 1.000000e+00 : f32
    %146 = vector.broadcast %cst_56 : f32 to vector<8x32xf32>
    %147 = arith.addf %146, %145 : vector<8x32xf32>
    %cst_57 = arith.constant 5.000000e-01 : f32
    %148 = vector.broadcast %cst_57 : f32 to vector<8x32xf32>
    %149 = arith.mulf %148, %147 : vector<8x32xf32>
    %150 = arith.mulf %139, %116 : vector<8x32xf32>
    %151 = arith.mulf %131, %141 : vector<8x32xf32>
    %152 = arith.addf %150, %151 : vector<8x32xf32>
    %153 = math.tanh %152 : vector<8x32xf32>
    %154 = arith.mulf %149, %153 : vector<8x32xf32>
    %c4_i32 = arith.constant 4 : i32
    %155 = arith.index_cast %c4_i32 : i32 to index
    %c0_58 = arith.constant 0 : index
    %c0_59 = arith.constant 0 : index
    %156 = vector.load %arg2[%155, %c0_58, %c0_59] : memref<8x8x128xf32, #tpu.memory_space<vmem>>, vector<1x8x128xf32>
    %157 = vector.shape_cast %156 : vector<1x8x128xf32> to vector<8x128xf32>
    %cst_60 = arith.constant dense<0.000000e+00> : vector<8x128xf32>
    %158 = tpu.matmul %154, %0, %cst_60 {dimension_numbers = #tpu.dot_dimension_numbers<[1], [0], [0], [1], [0, 0, 1, 1], [], []>} : vector<8x32xf32>, vector<32x128xf32>, vector<8x128xf32> -> vector<8x128xf32>
    %159 = arith.addf %157, %158 : vector<8x128xf32>
    %160 = vector.extract_strided_slice %159 {offsets = [0, 0], sizes = [8, 32], strides = [1, 1]} : vector<8x128xf32> to vector<8x32xf32>
    %cst_61 = arith.constant 5.000000e-01 : f32
    %161 = vector.broadcast %cst_61 : f32 to vector<8x32xf32>
    %162 = arith.mulf %161, %160 : vector<8x32xf32>
    %163 = math.tanh %162 : vector<8x32xf32>
    %cst_62 = arith.constant 1.000000e+00 : f32
    %164 = vector.broadcast %cst_62 : f32 to vector<8x32xf32>
    %165 = arith.addf %164, %163 : vector<8x32xf32>
    %cst_63 = arith.constant 5.000000e-01 : f32
    %166 = vector.broadcast %cst_63 : f32 to vector<8x32xf32>
    %167 = arith.mulf %166, %165 : vector<8x32xf32>
    %168 = vector.extract_strided_slice %159 {offsets = [0, 32], sizes = [8, 32], strides = [1, 1]} : vector<8x128xf32> to vector<8x32xf32>
    %cst_64 = arith.constant 5.000000e-01 : f32
    %169 = vector.broadcast %cst_64 : f32 to vector<8x32xf32>
    %170 = arith.mulf %169, %168 : vector<8x32xf32>
    %171 = math.tanh %170 : vector<8x32xf32>
    %cst_65 = arith.constant 1.000000e+00 : f32
    %172 = vector.broadcast %cst_65 : f32 to vector<8x32xf32>
    %173 = arith.addf %172, %171 : vector<8x32xf32>
    %cst_66 = arith.constant 5.000000e-01 : f32
    %174 = vector.broadcast %cst_66 : f32 to vector<8x32xf32>
    %175 = arith.mulf %174, %173 : vector<8x32xf32>
    %176 = vector.extract_strided_slice %159 {offsets = [0, 64], sizes = [8, 32], strides = [1, 1]} : vector<8x128xf32> to vector<8x32xf32>
    %177 = math.tanh %176 : vector<8x32xf32>
    %178 = vector.extract_strided_slice %159 {offsets = [0, 96], sizes = [8, 32], strides = [1, 1]} : vector<8x128xf32> to vector<8x32xf32>
    %cst_67 = arith.constant 5.000000e-01 : f32
    %179 = vector.broadcast %cst_67 : f32 to vector<8x32xf32>
    %180 = arith.mulf %179, %178 : vector<8x32xf32>
    %181 = math.tanh %180 : vector<8x32xf32>
    %cst_68 = arith.constant 1.000000e+00 : f32
    %182 = vector.broadcast %cst_68 : f32 to vector<8x32xf32>
    %183 = arith.addf %182, %181 : vector<8x32xf32>
    %cst_69 = arith.constant 5.000000e-01 : f32
    %184 = vector.broadcast %cst_69 : f32 to vector<8x32xf32>
    %185 = arith.mulf %184, %183 : vector<8x32xf32>
    %186 = arith.mulf %175, %152 : vector<8x32xf32>
    %187 = arith.mulf %167, %177 : vector<8x32xf32>
    %188 = arith.addf %186, %187 : vector<8x32xf32>
    %189 = math.tanh %188 : vector<8x32xf32>
    %190 = arith.mulf %185, %189 : vector<8x32xf32>
    %c5_i32 = arith.constant 5 : i32
    %191 = arith.index_cast %c5_i32 : i32 to index
    %c0_70 = arith.constant 0 : index
    %c0_71 = arith.constant 0 : index
    %192 = vector.load %arg2[%191, %c0_70, %c0_71] : memref<8x8x128xf32, #tpu.memory_space<vmem>>, vector<1x8x128xf32>
    %193 = vector.shape_cast %192 : vector<1x8x128xf32> to vector<8x128xf32>
    %cst_72 = arith.constant dense<0.000000e+00> : vector<8x128xf32>
    %194 = tpu.matmul %190, %0, %cst_72 {dimension_numbers = #tpu.dot_dimension_numbers<[1], [0], [0], [1], [0, 0, 1, 1], [], []>} : vector<8x32xf32>, vector<32x128xf32>, vector<8x128xf32> -> vector<8x128xf32>
    %195 = arith.addf %193, %194 : vector<8x128xf32>
    %196 = vector.extract_strided_slice %195 {offsets = [0, 0], sizes = [8, 32], strides = [1, 1]} : vector<8x128xf32> to vector<8x32xf32>
    %cst_73 = arith.constant 5.000000e-01 : f32
    %197 = vector.broadcast %cst_73 : f32 to vector<8x32xf32>
    %198 = arith.mulf %197, %196 : vector<8x32xf32>
    %199 = math.tanh %198 : vector<8x32xf32>
    %cst_74 = arith.constant 1.000000e+00 : f32
    %200 = vector.broadcast %cst_74 : f32 to vector<8x32xf32>
    %201 = arith.addf %200, %199 : vector<8x32xf32>
    %cst_75 = arith.constant 5.000000e-01 : f32
    %202 = vector.broadcast %cst_75 : f32 to vector<8x32xf32>
    %203 = arith.mulf %202, %201 : vector<8x32xf32>
    %204 = vector.extract_strided_slice %195 {offsets = [0, 32], sizes = [8, 32], strides = [1, 1]} : vector<8x128xf32> to vector<8x32xf32>
    %cst_76 = arith.constant 5.000000e-01 : f32
    %205 = vector.broadcast %cst_76 : f32 to vector<8x32xf32>
    %206 = arith.mulf %205, %204 : vector<8x32xf32>
    %207 = math.tanh %206 : vector<8x32xf32>
    %cst_77 = arith.constant 1.000000e+00 : f32
    %208 = vector.broadcast %cst_77 : f32 to vector<8x32xf32>
    %209 = arith.addf %208, %207 : vector<8x32xf32>
    %cst_78 = arith.constant 5.000000e-01 : f32
    %210 = vector.broadcast %cst_78 : f32 to vector<8x32xf32>
    %211 = arith.mulf %210, %209 : vector<8x32xf32>
    %212 = vector.extract_strided_slice %195 {offsets = [0, 64], sizes = [8, 32], strides = [1, 1]} : vector<8x128xf32> to vector<8x32xf32>
    %213 = math.tanh %212 : vector<8x32xf32>
    %214 = vector.extract_strided_slice %195 {offsets = [0, 96], sizes = [8, 32], strides = [1, 1]} : vector<8x128xf32> to vector<8x32xf32>
    %cst_79 = arith.constant 5.000000e-01 : f32
    %215 = vector.broadcast %cst_79 : f32 to vector<8x32xf32>
    %216 = arith.mulf %215, %214 : vector<8x32xf32>
    %217 = math.tanh %216 : vector<8x32xf32>
    %cst_80 = arith.constant 1.000000e+00 : f32
    %218 = vector.broadcast %cst_80 : f32 to vector<8x32xf32>
    %219 = arith.addf %218, %217 : vector<8x32xf32>
    %cst_81 = arith.constant 5.000000e-01 : f32
    %220 = vector.broadcast %cst_81 : f32 to vector<8x32xf32>
    %221 = arith.mulf %220, %219 : vector<8x32xf32>
    %222 = arith.mulf %211, %188 : vector<8x32xf32>
    %223 = arith.mulf %203, %213 : vector<8x32xf32>
    %224 = arith.addf %222, %223 : vector<8x32xf32>
    %225 = math.tanh %224 : vector<8x32xf32>
    %226 = arith.mulf %221, %225 : vector<8x32xf32>
    %c6_i32 = arith.constant 6 : i32
    %227 = arith.index_cast %c6_i32 : i32 to index
    %c0_82 = arith.constant 0 : index
    %c0_83 = arith.constant 0 : index
    %228 = vector.load %arg2[%227, %c0_82, %c0_83] : memref<8x8x128xf32, #tpu.memory_space<vmem>>, vector<1x8x128xf32>
    %229 = vector.shape_cast %228 : vector<1x8x128xf32> to vector<8x128xf32>
    %cst_84 = arith.constant dense<0.000000e+00> : vector<8x128xf32>
    %230 = tpu.matmul %226, %0, %cst_84 {dimension_numbers = #tpu.dot_dimension_numbers<[1], [0], [0], [1], [0, 0, 1, 1], [], []>} : vector<8x32xf32>, vector<32x128xf32>, vector<8x128xf32> -> vector<8x128xf32>
    %231 = arith.addf %229, %230 : vector<8x128xf32>
    %232 = vector.extract_strided_slice %231 {offsets = [0, 0], sizes = [8, 32], strides = [1, 1]} : vector<8x128xf32> to vector<8x32xf32>
    %cst_85 = arith.constant 5.000000e-01 : f32
    %233 = vector.broadcast %cst_85 : f32 to vector<8x32xf32>
    %234 = arith.mulf %233, %232 : vector<8x32xf32>
    %235 = math.tanh %234 : vector<8x32xf32>
    %cst_86 = arith.constant 1.000000e+00 : f32
    %236 = vector.broadcast %cst_86 : f32 to vector<8x32xf32>
    %237 = arith.addf %236, %235 : vector<8x32xf32>
    %cst_87 = arith.constant 5.000000e-01 : f32
    %238 = vector.broadcast %cst_87 : f32 to vector<8x32xf32>
    %239 = arith.mulf %238, %237 : vector<8x32xf32>
    %240 = vector.extract_strided_slice %231 {offsets = [0, 32], sizes = [8, 32], strides = [1, 1]} : vector<8x128xf32> to vector<8x32xf32>
    %cst_88 = arith.constant 5.000000e-01 : f32
    %241 = vector.broadcast %cst_88 : f32 to vector<8x32xf32>
    %242 = arith.mulf %241, %240 : vector<8x32xf32>
    %243 = math.tanh %242 : vector<8x32xf32>
    %cst_89 = arith.constant 1.000000e+00 : f32
    %244 = vector.broadcast %cst_89 : f32 to vector<8x32xf32>
    %245 = arith.addf %244, %243 : vector<8x32xf32>
    %cst_90 = arith.constant 5.000000e-01 : f32
    %246 = vector.broadcast %cst_90 : f32 to vector<8x32xf32>
    %247 = arith.mulf %246, %245 : vector<8x32xf32>
    %248 = vector.extract_strided_slice %231 {offsets = [0, 64], sizes = [8, 32], strides = [1, 1]} : vector<8x128xf32> to vector<8x32xf32>
    %249 = math.tanh %248 : vector<8x32xf32>
    %250 = vector.extract_strided_slice %231 {offsets = [0, 96], sizes = [8, 32], strides = [1, 1]} : vector<8x128xf32> to vector<8x32xf32>
    %cst_91 = arith.constant 5.000000e-01 : f32
    %251 = vector.broadcast %cst_91 : f32 to vector<8x32xf32>
    %252 = arith.mulf %251, %250 : vector<8x32xf32>
    %253 = math.tanh %252 : vector<8x32xf32>
    %cst_92 = arith.constant 1.000000e+00 : f32
    %254 = vector.broadcast %cst_92 : f32 to vector<8x32xf32>
    %255 = arith.addf %254, %253 : vector<8x32xf32>
    %cst_93 = arith.constant 5.000000e-01 : f32
    %256 = vector.broadcast %cst_93 : f32 to vector<8x32xf32>
    %257 = arith.mulf %256, %255 : vector<8x32xf32>
    %258 = arith.mulf %247, %224 : vector<8x32xf32>
    %259 = arith.mulf %239, %249 : vector<8x32xf32>
    %260 = arith.addf %258, %259 : vector<8x32xf32>
    %261 = math.tanh %260 : vector<8x32xf32>
    %262 = arith.mulf %257, %261 : vector<8x32xf32>
    %c7_i32 = arith.constant 7 : i32
    %263 = arith.index_cast %c7_i32 : i32 to index
    %c0_94 = arith.constant 0 : index
    %c0_95 = arith.constant 0 : index
    %264 = vector.load %arg2[%263, %c0_94, %c0_95] : memref<8x8x128xf32, #tpu.memory_space<vmem>>, vector<1x8x128xf32>
    %265 = vector.shape_cast %264 : vector<1x8x128xf32> to vector<8x128xf32>
    %cst_96 = arith.constant dense<0.000000e+00> : vector<8x128xf32>
    %266 = tpu.matmul %262, %0, %cst_96 {dimension_numbers = #tpu.dot_dimension_numbers<[1], [0], [0], [1], [0, 0, 1, 1], [], []>} : vector<8x32xf32>, vector<32x128xf32>, vector<8x128xf32> -> vector<8x128xf32>
    %267 = arith.addf %265, %266 : vector<8x128xf32>
    %268 = vector.extract_strided_slice %267 {offsets = [0, 0], sizes = [8, 32], strides = [1, 1]} : vector<8x128xf32> to vector<8x32xf32>
    %cst_97 = arith.constant 5.000000e-01 : f32
    %269 = vector.broadcast %cst_97 : f32 to vector<8x32xf32>
    %270 = arith.mulf %269, %268 : vector<8x32xf32>
    %271 = math.tanh %270 : vector<8x32xf32>
    %cst_98 = arith.constant 1.000000e+00 : f32
    %272 = vector.broadcast %cst_98 : f32 to vector<8x32xf32>
    %273 = arith.addf %272, %271 : vector<8x32xf32>
    %cst_99 = arith.constant 5.000000e-01 : f32
    %274 = vector.broadcast %cst_99 : f32 to vector<8x32xf32>
    %275 = arith.mulf %274, %273 : vector<8x32xf32>
    %276 = vector.extract_strided_slice %267 {offsets = [0, 32], sizes = [8, 32], strides = [1, 1]} : vector<8x128xf32> to vector<8x32xf32>
    %cst_100 = arith.constant 5.000000e-01 : f32
    %277 = vector.broadcast %cst_100 : f32 to vector<8x32xf32>
    %278 = arith.mulf %277, %276 : vector<8x32xf32>
    %279 = math.tanh %278 : vector<8x32xf32>
    %cst_101 = arith.constant 1.000000e+00 : f32
    %280 = vector.broadcast %cst_101 : f32 to vector<8x32xf32>
    %281 = arith.addf %280, %279 : vector<8x32xf32>
    %cst_102 = arith.constant 5.000000e-01 : f32
    %282 = vector.broadcast %cst_102 : f32 to vector<8x32xf32>
    %283 = arith.mulf %282, %281 : vector<8x32xf32>
    %284 = vector.extract_strided_slice %267 {offsets = [0, 64], sizes = [8, 32], strides = [1, 1]} : vector<8x128xf32> to vector<8x32xf32>
    %285 = math.tanh %284 : vector<8x32xf32>
    %286 = vector.extract_strided_slice %267 {offsets = [0, 96], sizes = [8, 32], strides = [1, 1]} : vector<8x128xf32> to vector<8x32xf32>
    %cst_103 = arith.constant 5.000000e-01 : f32
    %287 = vector.broadcast %cst_103 : f32 to vector<8x32xf32>
    %288 = arith.mulf %287, %286 : vector<8x32xf32>
    %289 = math.tanh %288 : vector<8x32xf32>
    %cst_104 = arith.constant 1.000000e+00 : f32
    %290 = vector.broadcast %cst_104 : f32 to vector<8x32xf32>
    %291 = arith.addf %290, %289 : vector<8x32xf32>
    %cst_105 = arith.constant 5.000000e-01 : f32
    %292 = vector.broadcast %cst_105 : f32 to vector<8x32xf32>
    %293 = arith.mulf %292, %291 : vector<8x32xf32>
    %294 = arith.mulf %283, %260 : vector<8x32xf32>
    %295 = arith.mulf %275, %285 : vector<8x32xf32>
    %296 = arith.addf %294, %295 : vector<8x32xf32>
    %297 = math.tanh %296 : vector<8x32xf32>
    %298 = arith.mulf %293, %297 : vector<8x32xf32>
    %c8_i32 = arith.constant 8 : i32
    %cst_106 = arith.constant 0.000000e+00 : f32
    %299 = vector.broadcast %cst_106 : f32 to vector<1x8x128xf32>
    %c0_107 = arith.constant 0 : index
    %c0_108 = arith.constant 0 : index
    %c0_109 = arith.constant 0 : index
    %300 = vector.load %arg9[%c0_107, %c0_108, %c0_109] : memref<8x8x128xf32, #tpu.memory_space<vmem>>, vector<1x8x128xf32>
    tpu.vector_store %arg9[%c0_107, %c0_108, %c0_109], %299 {strides = array<i32>} : memref<8x8x128xf32, #tpu.memory_space<vmem>>, vector<1x8x128xf32>,
    %cst_110 = arith.constant dense<0.000000e+00> : vector<8x256xf32>
    %301 = tpu.matmul %298, %1, %cst_110 {dimension_numbers = #tpu.dot_dimension_numbers<[1], [0], [0], [1], [0, 0, 1, 1], [], []>} : vector<8x32xf32>, vector<32x256xf32>, vector<8x256xf32> -> vector<8x256xf32>
    %c0_111 = arith.constant 0 : index
    %c0_112 = arith.constant 0 : index
    %c0_113 = arith.constant 0 : index
    %302 = vector.load %arg3[%c0_111, %c0_112, %c0_113] : memref<8x8x128xf32, #tpu.memory_space<vmem>>, vector<1x8x128xf32>
    %303 = vector.shape_cast %302 : vector<1x8x128xf32> to vector<8x128xf32>
    %304 = vector.extract_strided_slice %301 {offsets = [0, 0], sizes = [8, 128], strides = [1, 1]} : vector<8x256xf32> to vector<8x128xf32>
    %305 = arith.addf %303, %304 : vector<8x128xf32>
    %c0_i32_114 = arith.constant 0 : i32
    %306 = vector.extract_strided_slice %305 {offsets = [0, 0], sizes = [8, 32], strides = [1, 1]} : vector<8x128xf32> to vector<8x32xf32>
    %cst_115 = arith.constant 5.000000e-01 : f32
    %307 = vector.broadcast %cst_115 : f32 to vector<8x32xf32>
    %308 = arith.mulf %307, %306 : vector<8x32xf32>
    %309 = math.tanh %308 : vector<8x32xf32>
    %cst_116 = arith.constant 1.000000e+00 : f32
    %310 = vector.broadcast %cst_116 : f32 to vector<8x32xf32>
    %311 = arith.addf %310, %309 : vector<8x32xf32>
    %cst_117 = arith.constant 5.000000e-01 : f32
    %312 = vector.broadcast %cst_117 : f32 to vector<8x32xf32>
    %313 = arith.mulf %312, %311 : vector<8x32xf32>
    %314 = vector.extract_strided_slice %305 {offsets = [0, 32], sizes = [8, 32], strides = [1, 1]} : vector<8x128xf32> to vector<8x32xf32>
    %cst_118 = arith.constant 5.000000e-01 : f32
    %315 = vector.broadcast %cst_118 : f32 to vector<8x32xf32>
    %316 = arith.mulf %315, %314 : vector<8x32xf32>
    %317 = math.tanh %316 : vector<8x32xf32>
    %cst_119 = arith.constant 1.000000e+00 : f32
    %318 = vector.broadcast %cst_119 : f32 to vector<8x32xf32>
    %319 = arith.addf %318, %317 : vector<8x32xf32>
    %cst_120 = arith.constant 5.000000e-01 : f32
    %320 = vector.broadcast %cst_120 : f32 to vector<8x32xf32>
    %321 = arith.mulf %320, %319 : vector<8x32xf32>
    %322 = vector.extract_strided_slice %305 {offsets = [0, 64], sizes = [8, 32], strides = [1, 1]} : vector<8x128xf32> to vector<8x32xf32>
    %323 = math.tanh %322 : vector<8x32xf32>
    %324 = vector.extract_strided_slice %305 {offsets = [0, 96], sizes = [8, 32], strides = [1, 1]} : vector<8x128xf32> to vector<8x32xf32>
    %cst_121 = arith.constant 5.000000e-01 : f32
    %325 = vector.broadcast %cst_121 : f32 to vector<8x32xf32>
    %326 = arith.mulf %325, %324 : vector<8x32xf32>
    %327 = math.tanh %326 : vector<8x32xf32>
    %cst_122 = arith.constant 1.000000e+00 : f32
    %328 = vector.broadcast %cst_122 : f32 to vector<8x32xf32>
    %329 = arith.addf %328, %327 : vector<8x32xf32>
    %cst_123 = arith.constant 5.000000e-01 : f32
    %330 = vector.broadcast %cst_123 : f32 to vector<8x32xf32>
    %331 = arith.mulf %330, %329 : vector<8x32xf32>
    %332 = arith.mulf %321, %296 : vector<8x32xf32>
    %333 = arith.mulf %313, %323 : vector<8x32xf32>
    %334 = arith.addf %332, %333 : vector<8x32xf32>
    %335 = math.tanh %334 : vector<8x32xf32>
    %336 = arith.mulf %331, %335 : vector<8x32xf32>
    %cst_124 = arith.constant dense<0.000000e+00> : vector<8x128xf32>
    %337 = tpu.matmul %336, %2, %cst_124 {dimension_numbers = #tpu.dot_dimension_numbers<[1], [0], [0], [1], [0, 0, 1, 1], [], []>} : vector<8x32xf32>, vector<32x128xf32>, vector<8x128xf32> -> vector<8x128xf32>
    %338 = arith.addf %337, %8 : vector<8x128xf32>
    %339 = vector.shape_cast %338 : vector<8x128xf32> to vector<1x8x128xf32>
    %c1_i32_125 = arith.constant 1 : i32
    %340 = arith.addi %c0_i32_114, %c1_i32_125 : i32
    %341 = arith.index_cast %340 : i32 to index
    %c0_126 = arith.constant 0 : index
    %c0_127 = arith.constant 0 : index
    %342 = vector.load %arg9[%341, %c0_126, %c0_127] : memref<8x8x128xf32, #tpu.memory_space<vmem>>, vector<1x8x128xf32>
    tpu.vector_store %arg9[%341, %c0_126, %c0_127], %339 {strides = array<i32>} : memref<8x8x128xf32, #tpu.memory_space<vmem>>, vector<1x8x128xf32>,
    %cst_128 = arith.constant dense<0.000000e+00> : vector<8x256xf32>
    %343 = tpu.matmul %336, %1, %cst_128 {dimension_numbers = #tpu.dot_dimension_numbers<[1], [0], [0], [1], [0, 0, 1, 1], [], []>} : vector<8x32xf32>, vector<32x256xf32>, vector<8x256xf32> -> vector<8x256xf32>
    %344 = vector.extract_strided_slice %343 {offsets = [0, 0], sizes = [8, 128], strides = [1, 1]} : vector<8x256xf32> to vector<8x128xf32>
    %345 = vector.extract_strided_slice %343 {offsets = [0, 128], sizes = [8, 128], strides = [1, 1]} : vector<8x256xf32> to vector<8x128xf32>
    %346 = arith.addf %345, %5 : vector<8x128xf32>
    %347 = arith.index_cast %c0_i32_114 : i32 to index
    %348 = memref.load %arg1[%347] : memref<7xi32, #tpu.memory_space<smem>>
    %c1_i32_129 = arith.constant 1 : i32
    %349 = arith.cmpi eq, %348, %c1_i32_129 : i32
    %c1_i32_130 = arith.constant 1 : i32
    %350 = arith.addi %c0_i32_114, %c1_i32_130 : i32
    %351 = arith.index_cast %350 : i32 to index
    %c0_131 = arith.constant 0 : index
    %c0_132 = arith.constant 0 : index
    %352 = vector.load %arg3[%351, %c0_131, %c0_132] : memref<8x8x128xf32, #tpu.memory_space<vmem>>, vector<1x8x128xf32>
    %353 = vector.shape_cast %352 : vector<1x8x128xf32> to vector<8x128xf32>
    %354 = arith.select %349, %353, %346 : vector<8x128xf32>
    %355 = arith.addf %344, %354 : vector<8x128xf32>
    %c1_i32_133 = arith.constant 1 : i32
    %356 = vector.extract_strided_slice %355 {offsets = [0, 0], sizes = [8, 32], strides = [1, 1]} : vector<8x128xf32> to vector<8x32xf32>
    %cst_134 = arith.constant 5.000000e-01 : f32
    %357 = vector.broadcast %cst_134 : f32 to vector<8x32xf32>
    %358 = arith.mulf %357, %356 : vector<8x32xf32>
    %359 = math.tanh %358 : vector<8x32xf32>
    %cst_135 = arith.constant 1.000000e+00 : f32
    %360 = vector.broadcast %cst_135 : f32 to vector<8x32xf32>
    %361 = arith.addf %360, %359 : vector<8x32xf32>
    %cst_136 = arith.constant 5.000000e-01 : f32
    %362 = vector.broadcast %cst_136 : f32 to vector<8x32xf32>
    %363 = arith.mulf %362, %361 : vector<8x32xf32>
    %364 = vector.extract_strided_slice %355 {offsets = [0, 32], sizes = [8, 32], strides = [1, 1]} : vector<8x128xf32> to vector<8x32xf32>
    %cst_137 = arith.constant 5.000000e-01 : f32
    %365 = vector.broadcast %cst_137 : f32 to vector<8x32xf32>
    %366 = arith.mulf %365, %364 : vector<8x32xf32>
    %367 = math.tanh %366 : vector<8x32xf32>
    %cst_138 = arith.constant 1.000000e+00 : f32
    %368 = vector.broadcast %cst_138 : f32 to vector<8x32xf32>
    %369 = arith.addf %368, %367 : vector<8x32xf32>
    %cst_139 = arith.constant 5.000000e-01 : f32
    %370 = vector.broadcast %cst_139 : f32 to vector<8x32xf32>
    %371 = arith.mulf %370, %369 : vector<8x32xf32>
    %372 = vector.extract_strided_slice %355 {offsets = [0, 64], sizes = [8, 32], strides = [1, 1]} : vector<8x128xf32> to vector<8x32xf32>
    %373 = math.tanh %372 : vector<8x32xf32>
    %374 = vector.extract_strided_slice %355 {offsets = [0, 96], sizes = [8, 32], strides = [1, 1]} : vector<8x128xf32> to vector<8x32xf32>
    %cst_140 = arith.constant 5.000000e-01 : f32
    %375 = vector.broadcast %cst_140 : f32 to vector<8x32xf32>
    %376 = arith.mulf %375, %374 : vector<8x32xf32>
    %377 = math.tanh %376 : vector<8x32xf32>
    %cst_141 = arith.constant 1.000000e+00 : f32
    %378 = vector.broadcast %cst_141 : f32 to vector<8x32xf32>
    %379 = arith.addf %378, %377 : vector<8x32xf32>
    %cst_142 = arith.constant 5.000000e-01 : f32
    %380 = vector.broadcast %cst_142 : f32 to vector<8x32xf32>
    %381 = arith.mulf %380, %379 : vector<8x32xf32>
    %382 = arith.mulf %371, %334 : vector<8x32xf32>
    %383 = arith.mulf %363, %373 : vector<8x32xf32>
    %384 = arith.addf %382, %383 : vector<8x32xf32>
    %385 = math.tanh %384 : vector<8x32xf32>
    %386 = arith.mulf %381, %385 : vector<8x32xf32>
    %cst_143 = arith.constant dense<0.000000e+00> : vector<8x128xf32>
    %387 = tpu.matmul %386, %2, %cst_143 {dimension_numbers = #tpu.dot_dimension_numbers<[1], [0], [0], [1], [0, 0, 1, 1], [], []>} : vector<8x32xf32>, vector<32x128xf32>, vector<8x128xf32> -> vector<8x128xf32>
    %388 = arith.addf %387, %8 : vector<8x128xf32>
    %389 = vector.shape_cast %388 : vector<8x128xf32> to vector<1x8x128xf32>
    %c1_i32_144 = arith.constant 1 : i32
    %390 = arith.addi %c1_i32_133, %c1_i32_144 : i32
    %391 = arith.index_cast %390 : i32 to index
    %c0_145 = arith.constant 0 : index
    %c0_146 = arith.constant 0 : index
    %392 = vector.load %arg9[%391, %c0_145, %c0_146] : memref<8x8x128xf32, #tpu.memory_space<vmem>>, vector<1x8x128xf32>
    tpu.vector_store %arg9[%391, %c0_145, %c0_146], %389 {strides = array<i32>} : memref<8x8x128xf32, #tpu.memory_space<vmem>>, vector<1x8x128xf32>,
    %cst_147 = arith.constant dense<0.000000e+00> : vector<8x256xf32>
    %393 = tpu.matmul %386, %1, %cst_147 {dimension_numbers = #tpu.dot_dimension_numbers<[1], [0], [0], [1], [0, 0, 1, 1], [], []>} : vector<8x32xf32>, vector<32x256xf32>, vector<8x256xf32> -> vector<8x256xf32>
    %394 = vector.extract_strided_slice %393 {offsets = [0, 0], sizes = [8, 128], strides = [1, 1]} : vector<8x256xf32> to vector<8x128xf32>
    %395 = vector.extract_strided_slice %393 {offsets = [0, 128], sizes = [8, 128], strides = [1, 1]} : vector<8x256xf32> to vector<8x128xf32>
    %396 = arith.addf %395, %5 : vector<8x128xf32>
    %397 = arith.index_cast %c1_i32_133 : i32 to index
    %398 = memref.load %arg1[%397] : memref<7xi32, #tpu.memory_space<smem>>
    %c1_i32_148 = arith.constant 1 : i32
    %399 = arith.cmpi eq, %398, %c1_i32_148 : i32
    %c1_i32_149 = arith.constant 1 : i32
    %400 = arith.addi %c1_i32_133, %c1_i32_149 : i32
    %401 = arith.index_cast %400 : i32 to index
    %c0_150 = arith.constant 0 : index
    %c0_151 = arith.constant 0 : index
    %402 = vector.load %arg3[%401, %c0_150, %c0_151] : memref<8x8x128xf32, #tpu.memory_space<vmem>>, vector<1x8x128xf32>
    %403 = vector.shape_cast %402 : vector<1x8x128xf32> to vector<8x128xf32>
    %404 = arith.select %399, %403, %396 : vector<8x128xf32>
    %405 = arith.addf %394, %404 : vector<8x128xf32>
    %c2_i32_152 = arith.constant 2 : i32
    %406 = vector.extract_strided_slice %405 {offsets = [0, 0], sizes = [8, 32], strides = [1, 1]} : vector<8x128xf32> to vector<8x32xf32>
    %cst_153 = arith.constant 5.000000e-01 : f32
    %407 = vector.broadcast %cst_153 : f32 to vector<8x32xf32>
    %408 = arith.mulf %407, %406 : vector<8x32xf32>
    %409 = math.tanh %408 : vector<8x32xf32>
    %cst_154 = arith.constant 1.000000e+00 : f32
    %410 = vector.broadcast %cst_154 : f32 to vector<8x32xf32>
    %411 = arith.addf %410, %409 : vector<8x32xf32>
    %cst_155 = arith.constant 5.000000e-01 : f32
    %412 = vector.broadcast %cst_155 : f32 to vector<8x32xf32>
    %413 = arith.mulf %412, %411 : vector<8x32xf32>
    %414 = vector.extract_strided_slice %405 {offsets = [0, 32], sizes = [8, 32], strides = [1, 1]} : vector<8x128xf32> to vector<8x32xf32>
    %cst_156 = arith.constant 5.000000e-01 : f32
    %415 = vector.broadcast %cst_156 : f32 to vector<8x32xf32>
    %416 = arith.mulf %415, %414 : vector<8x32xf32>
    %417 = math.tanh %416 : vector<8x32xf32>
    %cst_157 = arith.constant 1.000000e+00 : f32
    %418 = vector.broadcast %cst_157 : f32 to vector<8x32xf32>
    %419 = arith.addf %418, %417 : vector<8x32xf32>
    %cst_158 = arith.constant 5.000000e-01 : f32
    %420 = vector.broadcast %cst_158 : f32 to vector<8x32xf32>
    %421 = arith.mulf %420, %419 : vector<8x32xf32>
    %422 = vector.extract_strided_slice %405 {offsets = [0, 64], sizes = [8, 32], strides = [1, 1]} : vector<8x128xf32> to vector<8x32xf32>
    %423 = math.tanh %422 : vector<8x32xf32>
    %424 = vector.extract_strided_slice %405 {offsets = [0, 96], sizes = [8, 32], strides = [1, 1]} : vector<8x128xf32> to vector<8x32xf32>
    %cst_159 = arith.constant 5.000000e-01 : f32
    %425 = vector.broadcast %cst_159 : f32 to vector<8x32xf32>
    %426 = arith.mulf %425, %424 : vector<8x32xf32>
    %427 = math.tanh %426 : vector<8x32xf32>
    %cst_160 = arith.constant 1.000000e+00 : f32
    %428 = vector.broadcast %cst_160 : f32 to vector<8x32xf32>
    %429 = arith.addf %428, %427 : vector<8x32xf32>
    %cst_161 = arith.constant 5.000000e-01 : f32
    %430 = vector.broadcast %cst_161 : f32 to vector<8x32xf32>
    %431 = arith.mulf %430, %429 : vector<8x32xf32>
    %432 = arith.mulf %421, %384 : vector<8x32xf32>
    %433 = arith.mulf %413, %423 : vector<8x32xf32>
    %434 = arith.addf %432, %433 : vector<8x32xf32>
    %435 = math.tanh %434 : vector<8x32xf32>
    %436 = arith.mulf %431, %435 : vector<8x32xf32>
    %cst_162 = arith.constant dense<0.000000e+00> : vector<8x128xf32>
    %437 = tpu.matmul %436, %2, %cst_162 {dimension_numbers = #tpu.dot_dimension_numbers<[1], [0], [0], [1], [0, 0, 1, 1], [], []>} : vector<8x32xf32>, vector<32x128xf32>, vector<8x128xf32> -> vector<8x128xf32>
    %438 = arith.addf %437, %8 : vector<8x128xf32>
    %439 = vector.shape_cast %438 : vector<8x128xf32> to vector<1x8x128xf32>
    %c1_i32_163 = arith.constant 1 : i32
    %440 = arith.addi %c2_i32_152, %c1_i32_163 : i32
    %441 = arith.index_cast %440 : i32 to index
    %c0_164 = arith.constant 0 : index
    %c0_165 = arith.constant 0 : index
    %442 = vector.load %arg9[%441, %c0_164, %c0_165] : memref<8x8x128xf32, #tpu.memory_space<vmem>>, vector<1x8x128xf32>
    tpu.vector_store %arg9[%441, %c0_164, %c0_165], %439 {strides = array<i32>} : memref<8x8x128xf32, #tpu.memory_space<vmem>>, vector<1x8x128xf32>,
    %cst_166 = arith.constant dense<0.000000e+00> : vector<8x256xf32>
    %443 = tpu.matmul %436, %1, %cst_166 {dimension_numbers = #tpu.dot_dimension_numbers<[1], [0], [0], [1], [0, 0, 1, 1], [], []>} : vector<8x32xf32>, vector<32x256xf32>, vector<8x256xf32> -> vector<8x256xf32>
    %444 = vector.extract_strided_slice %443 {offsets = [0, 0], sizes = [8, 128], strides = [1, 1]} : vector<8x256xf32> to vector<8x128xf32>
    %445 = vector.extract_strided_slice %443 {offsets = [0, 128], sizes = [8, 128], strides = [1, 1]} : vector<8x256xf32> to vector<8x128xf32>
    %446 = arith.addf %445, %5 : vector<8x128xf32>
    %447 = arith.index_cast %c2_i32_152 : i32 to index
    %448 = memref.load %arg1[%447] : memref<7xi32, #tpu.memory_space<smem>>
    %c1_i32_167 = arith.constant 1 : i32
    %449 = arith.cmpi eq, %448, %c1_i32_167 : i32
    %c1_i32_168 = arith.constant 1 : i32
    %450 = arith.addi %c2_i32_152, %c1_i32_168 : i32
    %451 = arith.index_cast %450 : i32 to index
    %c0_169 = arith.constant 0 : index
    %c0_170 = arith.constant 0 : index
    %452 = vector.load %arg3[%451, %c0_169, %c0_170] : memref<8x8x128xf32, #tpu.memory_space<vmem>>, vector<1x8x128xf32>
    %453 = vector.shape_cast %452 : vector<1x8x128xf32> to vector<8x128xf32>
    %454 = arith.select %449, %453, %446 : vector<8x128xf32>
    %455 = arith.addf %444, %454 : vector<8x128xf32>
    %c3_i32_171 = arith.constant 3 : i32
    %456 = vector.extract_strided_slice %455 {offsets = [0, 0], sizes = [8, 32], strides = [1, 1]} : vector<8x128xf32> to vector<8x32xf32>
    %cst_172 = arith.constant 5.000000e-01 : f32
    %457 = vector.broadcast %cst_172 : f32 to vector<8x32xf32>
    %458 = arith.mulf %457, %456 : vector<8x32xf32>
    %459 = math.tanh %458 : vector<8x32xf32>
    %cst_173 = arith.constant 1.000000e+00 : f32
    %460 = vector.broadcast %cst_173 : f32 to vector<8x32xf32>
    %461 = arith.addf %460, %459 : vector<8x32xf32>
    %cst_174 = arith.constant 5.000000e-01 : f32
    %462 = vector.broadcast %cst_174 : f32 to vector<8x32xf32>
    %463 = arith.mulf %462, %461 : vector<8x32xf32>
    %464 = vector.extract_strided_slice %455 {offsets = [0, 32], sizes = [8, 32], strides = [1, 1]} : vector<8x128xf32> to vector<8x32xf32>
    %cst_175 = arith.constant 5.000000e-01 : f32
    %465 = vector.broadcast %cst_175 : f32 to vector<8x32xf32>
    %466 = arith.mulf %465, %464 : vector<8x32xf32>
    %467 = math.tanh %466 : vector<8x32xf32>
    %cst_176 = arith.constant 1.000000e+00 : f32
    %468 = vector.broadcast %cst_176 : f32 to vector<8x32xf32>
    %469 = arith.addf %468, %467 : vector<8x32xf32>
    %cst_177 = arith.constant 5.000000e-01 : f32
    %470 = vector.broadcast %cst_177 : f32 to vector<8x32xf32>
    %471 = arith.mulf %470, %469 : vector<8x32xf32>
    %472 = vector.extract_strided_slice %455 {offsets = [0, 64], sizes = [8, 32], strides = [1, 1]} : vector<8x128xf32> to vector<8x32xf32>
    %473 = math.tanh %472 : vector<8x32xf32>
    %474 = vector.extract_strided_slice %455 {offsets = [0, 96], sizes = [8, 32], strides = [1, 1]} : vector<8x128xf32> to vector<8x32xf32>
    %cst_178 = arith.constant 5.000000e-01 : f32
    %475 = vector.broadcast %cst_178 : f32 to vector<8x32xf32>
    %476 = arith.mulf %475, %474 : vector<8x32xf32>
    %477 = math.tanh %476 : vector<8x32xf32>
    %cst_179 = arith.constant 1.000000e+00 : f32
    %478 = vector.broadcast %cst_179 : f32 to vector<8x32xf32>
    %479 = arith.addf %478, %477 : vector<8x32xf32>
    %cst_180 = arith.constant 5.000000e-01 : f32
    %480 = vector.broadcast %cst_180 : f32 to vector<8x32xf32>
    %481 = arith.mulf %480, %479 : vector<8x32xf32>
    %482 = arith.mulf %471, %434 : vector<8x32xf32>
    %483 = arith.mulf %463, %473 : vector<8x32xf32>
    %484 = arith.addf %482, %483 : vector<8x32xf32>
    %485 = math.tanh %484 : vector<8x32xf32>
    %486 = arith.mulf %481, %485 : vector<8x32xf32>
    %cst_181 = arith.constant dense<0.000000e+00> : vector<8x128xf32>
    %487 = tpu.matmul %486, %2, %cst_181 {dimension_numbers = #tpu.dot_dimension_numbers<[1], [0], [0], [1], [0, 0, 1, 1], [], []>} : vector<8x32xf32>, vector<32x128xf32>, vector<8x128xf32> -> vector<8x128xf32>
    %488 = arith.addf %487, %8 : vector<8x128xf32>
    %489 = vector.shape_cast %488 : vector<8x128xf32> to vector<1x8x128xf32>
    %c1_i32_182 = arith.constant 1 : i32
    %490 = arith.addi %c3_i32_171, %c1_i32_182 : i32
    %491 = arith.index_cast %490 : i32 to index
    %c0_183 = arith.constant 0 : index
    %c0_184 = arith.constant 0 : index
    %492 = vector.load %arg9[%491, %c0_183, %c0_184] : memref<8x8x128xf32, #tpu.memory_space<vmem>>, vector<1x8x128xf32>
    tpu.vector_store %arg9[%491, %c0_183, %c0_184], %489 {strides = array<i32>} : memref<8x8x128xf32, #tpu.memory_space<vmem>>, vector<1x8x128xf32>,
    %cst_185 = arith.constant dense<0.000000e+00> : vector<8x256xf32>
    %493 = tpu.matmul %486, %1, %cst_185 {dimension_numbers = #tpu.dot_dimension_numbers<[1], [0], [0], [1], [0, 0, 1, 1], [], []>} : vector<8x32xf32>, vector<32x256xf32>, vector<8x256xf32> -> vector<8x256xf32>
    %494 = vector.extract_strided_slice %493 {offsets = [0, 0], sizes = [8, 128], strides = [1, 1]} : vector<8x256xf32> to vector<8x128xf32>
    %495 = vector.extract_strided_slice %493 {offsets = [0, 128], sizes = [8, 128], strides = [1, 1]} : vector<8x256xf32> to vector<8x128xf32>
    %496 = arith.addf %495, %5 : vector<8x128xf32>
    %497 = arith.index_cast %c3_i32_171 : i32 to index
    %498 = memref.load %arg1[%497] : memref<7xi32, #tpu.memory_space<smem>>
    %c1_i32_186 = arith.constant 1 : i32
    %499 = arith.cmpi eq, %498, %c1_i32_186 : i32
    %c1_i32_187 = arith.constant 1 : i32
    %500 = arith.addi %c3_i32_171, %c1_i32_187 : i32
    %501 = arith.index_cast %500 : i32 to index
    %c0_188 = arith.constant 0 : index
    %c0_189 = arith.constant 0 : index
    %502 = vector.load %arg3[%501, %c0_188, %c0_189] : memref<8x8x128xf32, #tpu.memory_space<vmem>>, vector<1x8x128xf32>
    %503 = vector.shape_cast %502 : vector<1x8x128xf32> to vector<8x128xf32>
    %504 = arith.select %499, %503, %496 : vector<8x128xf32>
    %505 = arith.addf %494, %504 : vector<8x128xf32>
    %c4_i32_190 = arith.constant 4 : i32
    %506 = vector.extract_strided_slice %505 {offsets = [0, 0], sizes = [8, 32], strides = [1, 1]} : vector<8x128xf32> to vector<8x32xf32>
    %cst_191 = arith.constant 5.000000e-01 : f32
    %507 = vector.broadcast %cst_191 : f32 to vector<8x32xf32>
    %508 = arith.mulf %507, %506 : vector<8x32xf32>
    %509 = math.tanh %508 : vector<8x32xf32>
    %cst_192 = arith.constant 1.000000e+00 : f32
    %510 = vector.broadcast %cst_192 : f32 to vector<8x32xf32>
    %511 = arith.addf %510, %509 : vector<8x32xf32>
    %cst_193 = arith.constant 5.000000e-01 : f32
    %512 = vector.broadcast %cst_193 : f32 to vector<8x32xf32>
    %513 = arith.mulf %512, %511 : vector<8x32xf32>
    %514 = vector.extract_strided_slice %505 {offsets = [0, 32], sizes = [8, 32], strides = [1, 1]} : vector<8x128xf32> to vector<8x32xf32>
    %cst_194 = arith.constant 5.000000e-01 : f32
    %515 = vector.broadcast %cst_194 : f32 to vector<8x32xf32>
    %516 = arith.mulf %515, %514 : vector<8x32xf32>
    %517 = math.tanh %516 : vector<8x32xf32>
    %cst_195 = arith.constant 1.000000e+00 : f32
    %518 = vector.broadcast %cst_195 : f32 to vector<8x32xf32>
    %519 = arith.addf %518, %517 : vector<8x32xf32>
    %cst_196 = arith.constant 5.000000e-01 : f32
    %520 = vector.broadcast %cst_196 : f32 to vector<8x32xf32>
    %521 = arith.mulf %520, %519 : vector<8x32xf32>
    %522 = vector.extract_strided_slice %505 {offsets = [0, 64], sizes = [8, 32], strides = [1, 1]} : vector<8x128xf32> to vector<8x32xf32>
    %523 = math.tanh %522 : vector<8x32xf32>
    %524 = vector.extract_strided_slice %505 {offsets = [0, 96], sizes = [8, 32], strides = [1, 1]} : vector<8x128xf32> to vector<8x32xf32>
    %cst_197 = arith.constant 5.000000e-01 : f32
    %525 = vector.broadcast %cst_197 : f32 to vector<8x32xf32>
    %526 = arith.mulf %525, %524 : vector<8x32xf32>
    %527 = math.tanh %526 : vector<8x32xf32>
    %cst_198 = arith.constant 1.000000e+00 : f32
    %528 = vector.broadcast %cst_198 : f32 to vector<8x32xf32>
    %529 = arith.addf %528, %527 : vector<8x32xf32>
    %cst_199 = arith.constant 5.000000e-01 : f32
    %530 = vector.broadcast %cst_199 : f32 to vector<8x32xf32>
    %531 = arith.mulf %530, %529 : vector<8x32xf32>
    %532 = arith.mulf %521, %484 : vector<8x32xf32>
    %533 = arith.mulf %513, %523 : vector<8x32xf32>
    %534 = arith.addf %532, %533 : vector<8x32xf32>
    %535 = math.tanh %534 : vector<8x32xf32>
    %536 = arith.mulf %531, %535 : vector<8x32xf32>
    %cst_200 = arith.constant dense<0.000000e+00> : vector<8x128xf32>
    %537 = tpu.matmul %536, %2, %cst_200 {dimension_numbers = #tpu.dot_dimension_numbers<[1], [0], [0], [1], [0, 0, 1, 1], [], []>} : vector<8x32xf32>, vector<32x128xf32>, vector<8x128xf32> -> vector<8x128xf32>
    %538 = arith.addf %537, %8 : vector<8x128xf32>
    %539 = vector.shape_cast %538 : vector<8x128xf32> to vector<1x8x128xf32>
    %c1_i32_201 = arith.constant 1 : i32
    %540 = arith.addi %c4_i32_190, %c1_i32_201 : i32
    %541 = arith.index_cast %540 : i32 to index
    %c0_202 = arith.constant 0 : index
    %c0_203 = arith.constant 0 : index
    %542 = vector.load %arg9[%541, %c0_202, %c0_203] : memref<8x8x128xf32, #tpu.memory_space<vmem>>, vector<1x8x128xf32>
    tpu.vector_store %arg9[%541, %c0_202, %c0_203], %539 {strides = array<i32>} : memref<8x8x128xf32, #tpu.memory_space<vmem>>, vector<1x8x128xf32>,
    %cst_204 = arith.constant dense<0.000000e+00> : vector<8x256xf32>
    %543 = tpu.matmul %536, %1, %cst_204 {dimension_numbers = #tpu.dot_dimension_numbers<[1], [0], [0], [1], [0, 0, 1, 1], [], []>} : vector<8x32xf32>, vector<32x256xf32>, vector<8x256xf32> -> vector<8x256xf32>
    %544 = vector.extract_strided_slice %543 {offsets = [0, 0], sizes = [8, 128], strides = [1, 1]} : vector<8x256xf32> to vector<8x128xf32>
    %545 = vector.extract_strided_slice %543 {offsets = [0, 128], sizes = [8, 128], strides = [1, 1]} : vector<8x256xf32> to vector<8x128xf32>
    %546 = arith.addf %545, %5 : vector<8x128xf32>
    %547 = arith.index_cast %c4_i32_190 : i32 to index
    %548 = memref.load %arg1[%547] : memref<7xi32, #tpu.memory_space<smem>>
    %c1_i32_205 = arith.constant 1 : i32
    %549 = arith.cmpi eq, %548, %c1_i32_205 : i32
    %c1_i32_206 = arith.constant 1 : i32
    %550 = arith.addi %c4_i32_190, %c1_i32_206 : i32
    %551 = arith.index_cast %550 : i32 to index
    %c0_207 = arith.constant 0 : index
    %c0_208 = arith.constant 0 : index
    %552 = vector.load %arg3[%551, %c0_207, %c0_208] : memref<8x8x128xf32, #tpu.memory_space<vmem>>, vector<1x8x128xf32>
    %553 = vector.shape_cast %552 : vector<1x8x128xf32> to vector<8x128xf32>
    %554 = arith.select %549, %553, %546 : vector<8x128xf32>
    %555 = arith.addf %544, %554 : vector<8x128xf32>
    %c5_i32_209 = arith.constant 5 : i32
    %556 = vector.extract_strided_slice %555 {offsets = [0, 0], sizes = [8, 32], strides = [1, 1]} : vector<8x128xf32> to vector<8x32xf32>
    %cst_210 = arith.constant 5.000000e-01 : f32
    %557 = vector.broadcast %cst_210 : f32 to vector<8x32xf32>
    %558 = arith.mulf %557, %556 : vector<8x32xf32>
    %559 = math.tanh %558 : vector<8x32xf32>
    %cst_211 = arith.constant 1.000000e+00 : f32
    %560 = vector.broadcast %cst_211 : f32 to vector<8x32xf32>
    %561 = arith.addf %560, %559 : vector<8x32xf32>
    %cst_212 = arith.constant 5.000000e-01 : f32
    %562 = vector.broadcast %cst_212 : f32 to vector<8x32xf32>
    %563 = arith.mulf %562, %561 : vector<8x32xf32>
    %564 = vector.extract_strided_slice %555 {offsets = [0, 32], sizes = [8, 32], strides = [1, 1]} : vector<8x128xf32> to vector<8x32xf32>
    %cst_213 = arith.constant 5.000000e-01 : f32
    %565 = vector.broadcast %cst_213 : f32 to vector<8x32xf32>
    %566 = arith.mulf %565, %564 : vector<8x32xf32>
    %567 = math.tanh %566 : vector<8x32xf32>
    %cst_214 = arith.constant 1.000000e+00 : f32
    %568 = vector.broadcast %cst_214 : f32 to vector<8x32xf32>
    %569 = arith.addf %568, %567 : vector<8x32xf32>
    %cst_215 = arith.constant 5.000000e-01 : f32
    %570 = vector.broadcast %cst_215 : f32 to vector<8x32xf32>
    %571 = arith.mulf %570, %569 : vector<8x32xf32>
    %572 = vector.extract_strided_slice %555 {offsets = [0, 64], sizes = [8, 32], strides = [1, 1]} : vector<8x128xf32> to vector<8x32xf32>
    %573 = math.tanh %572 : vector<8x32xf32>
    %574 = vector.extract_strided_slice %555 {offsets = [0, 96], sizes = [8, 32], strides = [1, 1]} : vector<8x128xf32> to vector<8x32xf32>
    %cst_216 = arith.constant 5.000000e-01 : f32
    %575 = vector.broadcast %cst_216 : f32 to vector<8x32xf32>
    %576 = arith.mulf %575, %574 : vector<8x32xf32>
    %577 = math.tanh %576 : vector<8x32xf32>
    %cst_217 = arith.constant 1.000000e+00 : f32
    %578 = vector.broadcast %cst_217 : f32 to vector<8x32xf32>
    %579 = arith.addf %578, %577 : vector<8x32xf32>
    %cst_218 = arith.constant 5.000000e-01 : f32
    %580 = vector.broadcast %cst_218 : f32 to vector<8x32xf32>
    %581 = arith.mulf %580, %579 : vector<8x32xf32>
    %582 = arith.mulf %571, %534 : vector<8x32xf32>
    %583 = arith.mulf %563, %573 : vector<8x32xf32>
    %584 = arith.addf %582, %583 : vector<8x32xf32>
    %585 = math.tanh %584 : vector<8x32xf32>
    %586 = arith.mulf %581, %585 : vector<8x32xf32>
    %cst_219 = arith.constant dense<0.000000e+00> : vector<8x128xf32>
    %587 = tpu.matmul %586, %2, %cst_219 {dimension_numbers = #tpu.dot_dimension_numbers<[1], [0], [0], [1], [0, 0, 1, 1], [], []>} : vector<8x32xf32>, vector<32x128xf32>, vector<8x128xf32> -> vector<8x128xf32>
    %588 = arith.addf %587, %8 : vector<8x128xf32>
    %589 = vector.shape_cast %588 : vector<8x128xf32> to vector<1x8x128xf32>
    %c1_i32_220 = arith.constant 1 : i32
    %590 = arith.addi %c5_i32_209, %c1_i32_220 : i32
    %591 = arith.index_cast %590 : i32 to index
    %c0_221 = arith.constant 0 : index
    %c0_222 = arith.constant 0 : index
    %592 = vector.load %arg9[%591, %c0_221, %c0_222] : memref<8x8x128xf32, #tpu.memory_space<vmem>>, vector<1x8x128xf32>
    tpu.vector_store %arg9[%591, %c0_221, %c0_222], %589 {strides = array<i32>} : memref<8x8x128xf32, #tpu.memory_space<vmem>>, vector<1x8x128xf32>,
    %cst_223 = arith.constant dense<0.000000e+00> : vector<8x256xf32>
    %593 = tpu.matmul %586, %1, %cst_223 {dimension_numbers = #tpu.dot_dimension_numbers<[1], [0], [0], [1], [0, 0, 1, 1], [], []>} : vector<8x32xf32>, vector<32x256xf32>, vector<8x256xf32> -> vector<8x256xf32>
    %594 = vector.extract_strided_slice %593 {offsets = [0, 0], sizes = [8, 128], strides = [1, 1]} : vector<8x256xf32> to vector<8x128xf32>
    %595 = vector.extract_strided_slice %593 {offsets = [0, 128], sizes = [8, 128], strides = [1, 1]} : vector<8x256xf32> to vector<8x128xf32>
    %596 = arith.addf %595, %5 : vector<8x128xf32>
    %597 = arith.index_cast %c5_i32_209 : i32 to index
    %598 = memref.load %arg1[%597] : memref<7xi32, #tpu.memory_space<smem>>
    %c1_i32_224 = arith.constant 1 : i32
    %599 = arith.cmpi eq, %598, %c1_i32_224 : i32
    %c1_i32_225 = arith.constant 1 : i32
    %600 = arith.addi %c5_i32_209, %c1_i32_225 : i32
    %601 = arith.index_cast %600 : i32 to index
    %c0_226 = arith.constant 0 : index
    %c0_227 = arith.constant 0 : index
    %602 = vector.load %arg3[%601, %c0_226, %c0_227] : memref<8x8x128xf32, #tpu.memory_space<vmem>>, vector<1x8x128xf32>
    %603 = vector.shape_cast %602 : vector<1x8x128xf32> to vector<8x128xf32>
    %604 = arith.select %599, %603, %596 : vector<8x128xf32>
    %605 = arith.addf %594, %604 : vector<8x128xf32>
    %c6_i32_228 = arith.constant 6 : i32
    %606 = vector.extract_strided_slice %605 {offsets = [0, 0], sizes = [8, 32], strides = [1, 1]} : vector<8x128xf32> to vector<8x32xf32>
    %cst_229 = arith.constant 5.000000e-01 : f32
    %607 = vector.broadcast %cst_229 : f32 to vector<8x32xf32>
    %608 = arith.mulf %607, %606 : vector<8x32xf32>
    %609 = math.tanh %608 : vector<8x32xf32>
    %cst_230 = arith.constant 1.000000e+00 : f32
    %610 = vector.broadcast %cst_230 : f32 to vector<8x32xf32>
    %611 = arith.addf %610, %609 : vector<8x32xf32>
    %cst_231 = arith.constant 5.000000e-01 : f32
    %612 = vector.broadcast %cst_231 : f32 to vector<8x32xf32>
    %613 = arith.mulf %612, %611 : vector<8x32xf32>
    %614 = vector.extract_strided_slice %605 {offsets = [0, 32], sizes = [8, 32], strides = [1, 1]} : vector<8x128xf32> to vector<8x32xf32>
    %cst_232 = arith.constant 5.000000e-01 : f32
    %615 = vector.broadcast %cst_232 : f32 to vector<8x32xf32>
    %616 = arith.mulf %615, %614 : vector<8x32xf32>
    %617 = math.tanh %616 : vector<8x32xf32>
    %cst_233 = arith.constant 1.000000e+00 : f32
    %618 = vector.broadcast %cst_233 : f32 to vector<8x32xf32>
    %619 = arith.addf %618, %617 : vector<8x32xf32>
    %cst_234 = arith.constant 5.000000e-01 : f32
    %620 = vector.broadcast %cst_234 : f32 to vector<8x32xf32>
    %621 = arith.mulf %620, %619 : vector<8x32xf32>
    %622 = vector.extract_strided_slice %605 {offsets = [0, 64], sizes = [8, 32], strides = [1, 1]} : vector<8x128xf32> to vector<8x32xf32>
    %623 = math.tanh %622 : vector<8x32xf32>
    %624 = vector.extract_strided_slice %605 {offsets = [0, 96], sizes = [8, 32], strides = [1, 1]} : vector<8x128xf32> to vector<8x32xf32>
    %cst_235 = arith.constant 5.000000e-01 : f32
    %625 = vector.broadcast %cst_235 : f32 to vector<8x32xf32>
    %626 = arith.mulf %625, %624 : vector<8x32xf32>
    %627 = math.tanh %626 : vector<8x32xf32>
    %cst_236 = arith.constant 1.000000e+00 : f32
    %628 = vector.broadcast %cst_236 : f32 to vector<8x32xf32>
    %629 = arith.addf %628, %627 : vector<8x32xf32>
    %cst_237 = arith.constant 5.000000e-01 : f32
    %630 = vector.broadcast %cst_237 : f32 to vector<8x32xf32>
    %631 = arith.mulf %630, %629 : vector<8x32xf32>
    %632 = arith.mulf %621, %584 : vector<8x32xf32>
    %633 = arith.mulf %613, %623 : vector<8x32xf32>
    %634 = arith.addf %632, %633 : vector<8x32xf32>
    %635 = math.tanh %634 : vector<8x32xf32>
    %636 = arith.mulf %631, %635 : vector<8x32xf32>
    %cst_238 = arith.constant dense<0.000000e+00> : vector<8x128xf32>
    %637 = tpu.matmul %636, %2, %cst_238 {dimension_numbers = #tpu.dot_dimension_numbers<[1], [0], [0], [1], [0, 0, 1, 1], [], []>} : vector<8x32xf32>, vector<32x128xf32>, vector<8x128xf32> -> vector<8x128xf32>
    %638 = arith.addf %637, %8 : vector<8x128xf32>
    %639 = vector.shape_cast %638 : vector<8x128xf32> to vector<1x8x128xf32>
    %c1_i32_239 = arith.constant 1 : i32
    %640 = arith.addi %c6_i32_228, %c1_i32_239 : i32
    %641 = arith.index_cast %640 : i32 to index
    %c0_240 = arith.constant 0 : index
    %c0_241 = arith.constant 0 : index
    %642 = vector.load %arg9[%641, %c0_240, %c0_241] : memref<8x8x128xf32, #tpu.memory_space<vmem>>, vector<1x8x128xf32>
    tpu.vector_store %arg9[%641, %c0_240, %c0_241], %639 {strides = array<i32>} : memref<8x8x128xf32, #tpu.memory_space<vmem>>, vector<1x8x128xf32>,
    %cst_242 = arith.constant dense<0.000000e+00> : vector<8x256xf32>
    %643 = tpu.matmul %636, %1, %cst_242 {dimension_numbers = #tpu.dot_dimension_numbers<[1], [0], [0], [1], [0, 0, 1, 1], [], []>} : vector<8x32xf32>, vector<32x256xf32>, vector<8x256xf32> -> vector<8x256xf32>
    %644 = vector.extract_strided_slice %643 {offsets = [0, 0], sizes = [8, 128], strides = [1, 1]} : vector<8x256xf32> to vector<8x128xf32>
    %645 = vector.extract_strided_slice %643 {offsets = [0, 128], sizes = [8, 128], strides = [1, 1]} : vector<8x256xf32> to vector<8x128xf32>
    %646 = arith.addf %645, %5 : vector<8x128xf32>
    %647 = arith.index_cast %c6_i32_228 : i32 to index
    %648 = memref.load %arg1[%647] : memref<7xi32, #tpu.memory_space<smem>>
    %c1_i32_243 = arith.constant 1 : i32
    %649 = arith.cmpi eq, %648, %c1_i32_243 : i32
    %c1_i32_244 = arith.constant 1 : i32
    %650 = arith.addi %c6_i32_228, %c1_i32_244 : i32
    %651 = arith.index_cast %650 : i32 to index
    %c0_245 = arith.constant 0 : index
    %c0_246 = arith.constant 0 : index
    %652 = vector.load %arg3[%651, %c0_245, %c0_246] : memref<8x8x128xf32, #tpu.memory_space<vmem>>, vector<1x8x128xf32>
    %653 = vector.shape_cast %652 : vector<1x8x128xf32> to vector<8x128xf32>
    %654 = arith.select %649, %653, %646 : vector<8x128xf32>
    %655 = arith.addf %644, %654 : vector<8x128xf32>
    %c7_i32_247 = arith.constant 7 : i32
    return
  }
  func.func @transform_0(%arg0: i32, %arg1: memref<7xi32, #tpu.memory_space<smem>>) -> (i32, i32, i32) {
    %c0_i32 = arith.constant 0 : i32
    %c0_i32_0 = arith.constant 0 : i32
    %c0_i32_1 = arith.constant 0 : i32
    %c0_i32_2 = arith.constant 0 : i32
    return %c0_i32, %c0_i32_0, %c0_i32_1 : i32, i32, i32
  }
  func.func @transform_1(%arg0: i32, %arg1: memref<7xi32, #tpu.memory_space<smem>>) -> (i32, i32, i32) {
    %c0_i32 = arith.constant 0 : i32
    %c0_i32_0 = arith.constant 0 : i32
    %c0_i32_1 = arith.constant 0 : i32
    %c0_i32_2 = arith.constant 0 : i32
    return %c0_i32, %c0_i32_0, %c0_i32_1 : i32, i32, i32
  }
  func.func @transform_2(%arg0: i32, %arg1: memref<7xi32, #tpu.memory_space<smem>>) -> (i32, i32) {
    %c0_i32 = arith.constant 0 : i32
    %c0_i32_0 = arith.constant 0 : i32
    %c0_i32_1 = arith.constant 0 : i32
    return %c0_i32, %c0_i32_0 : i32, i32
  }
  func.func @transform_3(%arg0: i32, %arg1: memref<7xi32, #tpu.memory_space<smem>>) -> (i32, i32) {
    %c0_i32 = arith.constant 0 : i32
    %c0_i32_0 = arith.constant 0 : i32
    %c0_i32_1 = arith.constant 0 : i32
    return %c0_i32, %c0_i32_0 : i32, i32
  }
  func.func @transform_4(%arg0: i32, %arg1: memref<7xi32, #tpu.memory_space<smem>>) -> (i32, i32) {
    %c0_i32 = arith.constant 0 : i32
    %c0_i32_0 = arith.constant 0 : i32
    %c0_i32_1 = arith.constant 0 : i32
    return %c0_i32, %c0_i32_0 : i32, i32
  }
  func.func @transform_5(%arg0: i32, %arg1: memref<7xi32, #tpu.memory_space<smem>>) -> (i32, i32) {
    %c0_i32 = arith.constant 0 : i32
    %c0_i32_0 = arith.constant 0 : i32
    %c0_i32_1 = arith.constant 0 : i32
    return %c0_i32, %c0_i32_0 : i32, i32
  }
  func.func @transform_6(%arg0: i32, %arg1: memref<7xi32, #tpu.memory_space<smem>>) -> (i32, i32) {
    %c0_i32 = arith.constant 0 : i32
    %c0_i32_0 = arith.constant 0 : i32
    %c0_i32_1 = arith.constant 0 : i32
    return %c0_i32, %c0_i32_0 : i32, i32
  }
  func.func @transform_7(%arg0: i32, %arg1: memref<7xi32, #tpu.memory_space<smem>>) -> (i32, i32, i32) {
    %c0_i32 = arith.constant 0 : i32
    %c0_i32_0 = arith.constant 0 : i32
    %c0_i32_1 = arith.constant 0 : i32
    %c0_i32_2 = arith.constant 0 : i32
    return %c0_i32, %c0_i32_0, %c0_i32_1 : i32, i32, i32
  }
}

</mosaic_0001>

<llo_original>
// kernel: tpu_custom_call.1
$region0: #{tpu_custom_call.1}
  #allocation0 [shape = 'u32[]', space=smem, size = 0x4, offset = 0x4, fixed_abs, tag = 'smem constant byte address 0x4 - core index']
  #allocation1 [shape = 'u32[144,128]{1,0:T(1,128)}', space=vmem, size = 0x12000, scoped, tag = 'internal scratch']
  #allocation2 [shape = 's32[1]{0}', space=sflag, size = 0x4, scoped, tag = 'scoped memory for tpu_custom_call.1']
  #allocation3 [shape = 'u8[512]{0}', space=smem, size = 0x200, scoped, tag = 'prefetched SMEM operand 0']
  %s0 = inlined_call_operand.hbm [shape: s32[7], index: 0, kind: input, shape index: {}]
  %s1 = inlined_call_operand.hbm [shape: f32[8,8,128], index: 1, kind: input, shape index: {}]
  %s2 = inlined_call_operand.hbm [shape: f32[8,8,128], index: 2, kind: input, shape index: {}]
  %s3 = inlined_call_operand.hbm [shape: f32[32,128], index: 3, kind: input, shape index: {}]
  %s4 = inlined_call_operand.hbm [shape: f32[32,256], index: 4, kind: input, shape index: {}]
  %s5 = inlined_call_operand.vmem [shape: f32[1,128], index: 5, kind: input, shape index: {}]
  %s6 = inlined_call_operand.hbm [shape: f32[32,128], index: 6, kind: input, shape index: {}]
  %s7 = inlined_call_operand.vmem [shape: f32[1,128], index: 7, kind: input, shape index: {}]
  %s8 = inlined_call_operand.hbm [shape: f32[8,8,128], index: 8, kind: output, shape index: {}]
  %s9 = sld [smem:[#allocation0]]
  $region58: #{tpu_custom_call.1} parent=0
    _
  %s11 = ssub.s32 1, %s9
  %s12 = scalar_select 0, %s11, %s9
  %14 = dma.hbm_to_smem %s0, 16, [#allocation3], [#allocation2]
  %15 = dma.done [#allocation2], 16
  %16 = sfence
  $region1: #{tpu_custom_call.1} parent=0
    #allocation4 [shape = 'u8[32768]{0}', space=vmem, size = 0x8000, scoped, tag = 'input window, operand 1, single buffered']
    #allocation5 [shape = 's32[1]{0}', space=sflag, size = 0x4, scoped, tag = 'scoped memory for tpu_custom_call.1']
    #allocation6 [shape = 's32[1]{0}', space=sflag, size = 0x4, scoped, tag = 'scoped memory for tpu_custom_call.1']
    #allocation7 [shape = 'u8[32768]{0}', space=vmem, size = 0x8000, scoped, tag = 'input window, operand 2, single buffered']
    #allocation8 [shape = 's32[1]{0}', space=sflag, size = 0x4, scoped, tag = 'scoped memory for tpu_custom_call.1']
    #allocation9 [shape = 'u8[16384]{0}', space=vmem, size = 0x4000, scoped, tag = 'input window, operand 3, single buffered']
    #allocation10 [shape = 'u8[32768]{0}', space=vmem, size = 0x8000, scoped, tag = 'input window, operand 4, single buffered']
    #allocation11 [shape = 's32[1]{0}', space=sflag, size = 0x4, scoped, tag = 'scoped memory for tpu_custom_call.1']
    #allocation12 [shape = 'u8[16384]{0}', space=vmem, size = 0x4000, scoped, tag = 'input window, operand 6, single buffered']
    #allocation13 [shape = 'u8[32768]{0}', space=vmem, size = 0x8000, scoped, tag = 'output window, operand 0, single buffered']
    %17 = vsyncpa [#allocation5], 0
    %18 = vsyncpa [#allocation8], 0
    %19 = vsyncpa [#allocation11], 0
    %20 = vsyncpa [#allocation6], 0
    // Predicated region
    $region2: #{tpu_custom_call.1} parent=1 // pred_check
      _
    $region3: #{tpu_custom_call.1} parent=1 // pred_check_branch
      %22 = sbr.rel (0) target = $region5
    $region4: #{tpu_custom_call.1} parent=1 // pred_region
      %s24 = ssub.s32 1024, 1024
      %25 = vsyncadd [#allocation5], %s24
      %s26 = sshll.u32 [#allocation4], 4
      %s27 = int_to_ptr.vmem [resolvable:$true] %s26
      %32 = dma.hbm_to_vmem [thread:$0]  %s1, 1024, %s27, [#allocation5], 128, 128, 8
    $region5: #{tpu_custom_call.1} parent=1 // pred_fallthru
      _
    // Predicated region
    $region6: #{tpu_custom_call.1} parent=1 // pred_check
      _
    $region7: #{tpu_custom_call.1} parent=1 // pred_check_branch
      %34 = sbr.rel (0) target = $region9
    $region8: #{tpu_custom_call.1} parent=1 // pred_region
      %s36 = ssub.s32 1024, 1024
      %37 = vsyncadd [#allocation8], %s36
      %s38 = sshll.u32 [#allocation7], 4
      %s39 = int_to_ptr.vmem [resolvable:$true] %s38
      %44 = dma.hbm_to_vmem [thread:$0]  %s2, 1024, %s39, [#allocation8], 128, 128, 8
    $region9: #{tpu_custom_call.1} parent=1 // pred_fallthru
      _
    // Predicated region
    $region10: #{tpu_custom_call.1} parent=1 // pred_check
      _
    $region11: #{tpu_custom_call.1} parent=1 // pred_check_branch
      %46 = sbr.rel (0) target = $region13
    $region12: #{tpu_custom_call.1} parent=1 // pred_region
      %s48 = ssub.s32 512, 512
      %49 = vsyncadd [#allocation8], %s48
      %s50 = sshll.u32 [#allocation9], 4
      %s51 = int_to_ptr.vmem [resolvable:$true] %s50
      %56 = dma.hbm_to_vmem [thread:$0]  %s3, 512, %s51, [#allocation8], 128, 128, 8
    $region13: #{tpu_custom_call.1} parent=1 // pred_fallthru
      _
    // Predicated region
    $region14: #{tpu_custom_call.1} parent=1 // pred_check
      _
    $region15: #{tpu_custom_call.1} parent=1 // pred_check_branch
      %58 = sbr.rel (0) target = $region17
    $region16: #{tpu_custom_call.1} parent=1 // pred_region
      %s60 = ssub.s32 1024, 1024
      %61 = vsyncadd [#allocation11], %s60
      %s62 = sshll.u32 [#allocation10], 4
      %s63 = int_to_ptr.vmem [resolvable:$true] %s62
      %68 = dma.hbm_to_vmem [thread:$0]  %s4, 1024, %s63, [#allocation11], 256, 256, 16
    $region17: #{tpu_custom_call.1} parent=1 // pred_fallthru
      _
    // Predicated region
    $region18: #{tpu_custom_call.1} parent=1 // pred_check
      _
    $region19: #{tpu_custom_call.1} parent=1 // pred_check_branch
      %70 = sbr.rel (0) target = $region21
    $region20: #{tpu_custom_call.1} parent=1 // pred_region
      _
    $region21: #{tpu_custom_call.1} parent=1 // pred_fallthru
      _
    // Predicated region
    $region22: #{tpu_custom_call.1} parent=1 // pred_check
      _
    $region23: #{tpu_custom_call.1} parent=1 // pred_check_branch
      %72 = sbr.rel (0) target = $region25
    $region24: #{tpu_custom_call.1} parent=1 // pred_region
      %s74 = ssub.s32 512, 512
      %75 = vsyncadd [#allocation11], %s74
      %s76 = sshll.u32 [#allocation12], 4
      %s77 = int_to_ptr.vmem [resolvable:$true] %s76
      %82 = dma.hbm_to_vmem [thread:$0]  %s6, 512, %s77, [#allocation11], 128, 128, 8
    $region25: #{tpu_custom_call.1} parent=1 // pred_fallthru
      _
    // Predicated region
    $region26: #{tpu_custom_call.1} parent=1 // pred_check
      _
    $region27: #{tpu_custom_call.1} parent=1 // pred_check_branch
      %84 = sbr.rel (0) target = $region29
    $region28: #{tpu_custom_call.1} parent=1 // pred_region
      _
    $region29: #{tpu_custom_call.1} parent=1 // pred_fallthru
      _
    // Predicated region
    $region30: #{tpu_custom_call.1} parent=1 // pred_check
      _
    $region31: #{tpu_custom_call.1} parent=1 // pred_check_branch
      %86 = sbr.rel (0) target = $region33
    $region32: #{tpu_custom_call.1} parent=1 // pred_region
      %87 = dma.done [#allocation5], 1024
    $region33: #{tpu_custom_call.1} parent=1 // pred_fallthru
      _
    // Predicated region
    $region34: #{tpu_custom_call.1} parent=1 // pred_check
      _
    $region35: #{tpu_custom_call.1} parent=1 // pred_check_branch
      %89 = sbr.rel (0) target = $region37
    $region36: #{tpu_custom_call.1} parent=1 // pred_region
      %90 = dma.done [#allocation8], 1024
    $region37: #{tpu_custom_call.1} parent=1 // pred_fallthru
      _
    // Predicated region
    $region38: #{tpu_custom_call.1} parent=1 // pred_check
      _
    $region39: #{tpu_custom_call.1} parent=1 // pred_check_branch
      %92 = sbr.rel (0) target = $region41
    $region40: #{tpu_custom_call.1} parent=1 // pred_region
      %93 = dma.done [#allocation8], 512
    $region41: #{tpu_custom_call.1} parent=1 // pred_fallthru
      _
    // Predicated region
    $region42: #{tpu_custom_call.1} parent=1 // pred_check
      _
    $region43: #{tpu_custom_call.1} parent=1 // pred_check_branch
      %95 = sbr.rel (0) target = $region45
    $region44: #{tpu_custom_call.1} parent=1 // pred_region
      %96 = dma.done [#allocation11], 1024
    $region45: #{tpu_custom_call.1} parent=1 // pred_fallthru
      _
    // Predicated region
    $region46: #{tpu_custom_call.1} parent=1 // pred_check
      _
    $region47: #{tpu_custom_call.1} parent=1 // pred_check_branch
      %98 = sbr.rel (0) target = $region49
    $region48: #{tpu_custom_call.1} parent=1 // pred_region
      %99 = dma.done [#allocation11], 512
    $region49: #{tpu_custom_call.1} parent=1 // pred_fallthru
      _
    %v100 = vld [vmem:[#allocation9] sm:$0xff]
    %v101 = vld [vmem:[#allocation9 + $0x8] sm:$0xff]
    %v102 = vld [vmem:[#allocation9 + $0x10] sm:$0xff]
    %v103 = vld [vmem:[#allocation9 + $0x18] sm:$0xff]
    %v104 = vld [vmem:[#allocation10] sm:$0xff]
    %v105 = vld [vmem:[#allocation10 + $0x8] sm:$0xff]
    %v106 = vld [vmem:[#allocation10 + $0x10] sm:$0xff]
    %v107 = vld [vmem:[#allocation10 + $0x18] sm:$0xff]
    %v108 = vld [vmem:[#allocation10 + $0x20] sm:$0xff]
    %v109 = vld [vmem:[#allocation10 + $0x28] sm:$0xff]
    %v110 = vld [vmem:[#allocation10 + $0x30] sm:$0xff]
    %v111 = vld [vmem:[#allocation10 + $0x38] sm:$0xff]
    %v112 = vld [vmem:[#allocation12] sm:$0xff]
    %v113 = vld [vmem:[#allocation12 + $0x8] sm:$0xff]
    %v114 = vld [vmem:[#allocation12 + $0x10] sm:$0xff]
    %v115 = vld [vmem:[#allocation12 + $0x18] sm:$0xff]
    %v116 = vld [vmem:[%s5] sm:$0x1]
    %v118 = vlaneseq
    %v119 = vshrl.u32 %v118, 7
    %v120 = vsub.s32 0, %v119
    %v121 = vrot.slane %v116, %v120
    %v123 = vld [vmem:[%s7] sm:$0x1]
    %v125 = vlaneseq
    %v126 = vshrl.u32 %v125, 7
    %v127 = vsub.s32 0, %v126
    %v128 = vrot.slane %v123, %v127
    %v130 = vld [vmem:[#allocation4] sm:$0xff]
    %vm131 = vcmask 261120
    %v133 = vsel %vm131, 0.0, 0
    %135 = vmatprep.subr.mxu0 0.0
    %136 = vmatpush1.msra.mxu0 %v100
    %137 = vmatprep.subr.mxu0 0.0
    %138 = vmatpush1.msra.mxu0 %v101
    %139 = vmatprep.subr.mxu0 0.0
    %140 = vmatpush1.msra.mxu0 %v102
    %141 = vmatprep.subr.mxu0 0.0
    %142 = vmatpush1.msra.mxu0 %v103
    %143 = vmatprep.subr.mxu0 0.0
    %144 = vmatpush1.msra.mxu0 0.0
    %145 = vmatprep.subr.mxu0 0.0
    %146 = vmatpush1.msra.mxu0 0.0
    %147 = vmatprep.subr.mxu0 0.0
    %148 = vmatpush1.msra.mxu0 0.0
    %149 = vmatprep.subr.mxu0 0.0
    %150 = vmatpush1.msra.mxu0 0.0
    %151 = vmatprep.subr.mxu0 0.0
    %152 = vmatpush1.msra.mxu0 0.0
    %153 = vmatprep.subr.mxu0 0.0
    %154 = vmatpush1.msra.mxu0 0.0
    %155 = vmatprep.subr.mxu0 0.0
    %156 = vmatpush1.msra.mxu0 0.0
    %157 = vmatprep.subr.mxu0 0.0
    %158 = vmatpush1.msra.mxu0 0.0
    %159 = vmatprep.subr.mxu0 0.0
    %160 = vmatpush1.msra.mxu0 0.0
    %161 = vmatprep.subr.mxu0 0.0
    %162 = vmatpush1.msra.mxu0 0.0
    %163 = vmatprep.subr.mxu0 0.0
    %164 = vmatpush1.msra.mxu0 0.0
    %165 = vmatprep.subr.mxu0 0.0
    %166 = vmatpush1.msra.mxu0 0.0
    %167 = vmatprep.subr.mxu0 0.0
    %168 = vmatpush1.msra.mxu0 0.0
    %169 = vmatprep.subr.mxu0 0.0
    %170 = vmatpush1.msra.mxu0 0.0
    %171 = vmatprep.subr.mxu0 0.0
    %172 = vmatpush1.msra.mxu0 0.0
    %173 = vmatprep.subr.mxu0 0.0
    %174 = vmatpush1.msra.mxu0 0.0
    %175 = vmatprep.subr.mxu0 0.0
    %176 = vmatpush1.msra.mxu0 0.0
    %177 = vmatprep.subr.mxu0 0.0
    %178 = vmatpush1.msra.mxu0 0.0
    %179 = vmatprep.subr.mxu0 0.0
    %180 = vmatpush1.msra.mxu0 0.0
    %181 = vmatprep.subr.mxu0 0.0
    %182 = vmatpush1.msra.mxu0 0.0
    %183 = vmatprep.subr.mxu0 0.0
    %184 = vmatpush1.msra.mxu0 0.0
    %185 = vmatprep.subr.mxu0 0.0
    %186 = vmatpush1.msra.mxu0 0.0
    %187 = vmatprep.subr.mxu0 0.0
    %188 = vmatpush1.msra.mxu0 0.0
    %189 = vmatprep.subr.mxu0 0.0
    %190 = vmatpush1.msra.mxu0 0.0
    %191 = vmatprep.subr.mxu0 0.0
    %192 = vmatpush1.msra.mxu0 0.0
    %193 = vmatprep.subr.mxu0 0.0
    %194 = vmatpush1.msra.mxu0 0.0
    %195 = vmatprep.subr.mxu0 0.0
    %196 = vmatpush1.msra.mxu0 0.0
    %197 = vmatprep.subr.mxu0 0.0
    %198 = vmatpush1.msra.mxu0 0.0
    %199 = vmatprep.mubr.f32.mxu0 0.0
    %200 = vmatmul.mubr.f32.gmra.mrb[0].mxu0 %v133
    %v201 = vpop.f32.mrb[0].mxu0
    %v202 = vadd.f32 0.0, %v201
    %v203 = vpop.f32.mrb[0].mxu0
    %204 = vdwg.mxu0
    %v205 = vadd.f32 %v130, %v202
    %v206 = vmul.f32 %v205, 0.5
    %v207 = vtanh.pop %v206
    %v208 = vadd.f32 %v207, 1.0
    %v209 = vmul.f32 %v208, 0.5
    %v210 = vtanh.pop %v205
    %v211 = vmul.f32 %v209, 0.0
    %213 = vrot.lane.b32.xlu0 %v210, 64
    %v214 = vpop.permute.xlu0 %213
    %v216 = vmul.f32 %v209, %v214
    %218 = vrot.lane.b32.xlu0 %v216, 32
    %v219 = vpop.permute.xlu0 %218
    %v221 = vadd.f32 %v211, %v219
    %v222 = vtanh.pop %v221
    %224 = vrot.lane.b32.xlu0 %v222, 64
    %v225 = vpop.permute.xlu0 %224
    %v227 = vmul.f32 %v209, %v225
    %s228 = scalar_lea.vmem [#allocation4], 8
    %v229 = vld [vmem:[%s228] sm:$0xff]
    %231 = vrot.lane.b32.xlu0 %v227, 32
    %v232 = vpop.permute.xlu0 %231
    %v233 = vsel %vm131, %v232, 0
    %235 = vmatprep.subr.mxu0 0.0
    %236 = vmatpush1.msra.mxu0 %v100
    %237 = vmatprep.subr.mxu0 0.0
    %238 = vmatpush1.msra.mxu0 %v101
    %239 = vmatprep.subr.mxu0 0.0
    %240 = vmatpush1.msra.mxu0 %v102
    %241 = vmatprep.subr.mxu0 0.0
    %242 = vmatpush1.msra.mxu0 %v103
    %243 = vmatprep.subr.mxu0 0.0
    %244 = vmatpush1.msra.mxu0 0.0
    %245 = vmatprep.subr.mxu0 0.0
    %246 = vmatpush1.msra.mxu0 0.0
    %247 = vmatprep.subr.mxu0 0.0
    %248 = vmatpush1.msra.mxu0 0.0
    %249 = vmatprep.subr.mxu0 0.0
    %250 = vmatpush1.msra.mxu0 0.0
    %251 = vmatprep.subr.mxu0 0.0
    %252 = vmatpush1.msra.mxu0 0.0
    %253 = vmatprep.subr.mxu0 0.0
    %254 = vmatpush1.msra.mxu0 0.0
    %255 = vmatprep.subr.mxu0 0.0
    %256 = vmatpush1.msra.mxu0 0.0
    %257 = vmatprep.subr.mxu0 0.0
    %258 = vmatpush1.msra.mxu0 0.0
    %259 = vmatprep.subr.mxu0 0.0
    %260 = vmatpush1.msra.mxu0 0.0
    %261 = vmatprep.subr.mxu0 0.0
    %262 = vmatpush1.msra.mxu0 0.0
    %263 = vmatprep.subr.mxu0 0.0
    %264 = vmatpush1.msra.mxu0 0.0
    %265 = vmatprep.subr.mxu0 0.0
    %266 = vmatpush1.msra.mxu0 0.0
    %267 = vmatprep.subr.mxu0 0.0
    %268 = vmatpush1.msra.mxu0 0.0
    %269 = vmatprep.subr.mxu0 0.0
    %270 = vmatpush1.msra.mxu0 0.0
    %271 = vmatprep.subr.mxu0 0.0
    %272 = vmatpush1.msra.mxu0 0.0
    %273 = vmatprep.subr.mxu0 0.0
    %274 = vmatpush1.msra.mxu0 0.0
    %275 = vmatprep.subr.mxu0 0.0
    %276 = vmatpush1.msra.mxu0 0.0
    %277 = vmatprep.subr.mxu0 0.0
    %278 = vmatpush1.msra.mxu0 0.0
    %279 = vmatprep.subr.mxu0 0.0
    %280 = vmatpush1.msra.mxu0 0.0
    %281 = vmatprep.subr.mxu0 0.0
    %282 = vmatpush1.msra.mxu0 0.0
    %283 = vmatprep.subr.mxu0 0.0
    %284 = vmatpush1.msra.mxu0 0.0
    %285 = vmatprep.subr.mxu0 0.0
    %286 = vmatpush1.msra.mxu0 0.0
    %287 = vmatprep.subr.mxu0 0.0
    %288 = vmatpush1.msra.mxu0 0.0
    %289 = vmatprep.subr.mxu0 0.0
    %290 = vmatpush1.msra.mxu0 0.0
    %291 = vmatprep.subr.mxu0 0.0
    %292 = vmatpush1.msra.mxu0 0.0
    %293 = vmatprep.subr.mxu0 0.0
    %294 = vmatpush1.msra.mxu0 0.0
    %295 = vmatprep.subr.mxu0 0.0
    %296 = vmatpush1.msra.mxu0 0.0
    %297 = vmatprep.subr.mxu0 0.0
    %298 = vmatpush1.msra.mxu0 0.0
    %299 = vmatprep.mubr.f32.mxu0 0.0
    %300 = vmatmul.mubr.f32.gmra.mrb[0].mxu0 %v233
    %v301 = vpop.f32.mrb[0].mxu0
    %v302 = vadd.f32 0.0, %v301
    %v303 = vpop.f32.mrb[0].mxu0
    %304 = vdwg.mxu0
    %v305 = vadd.f32 %v229, %v302
    %v306 = vmul.f32 %v305, 0.5
    %v307 = vtanh.pop %v306
    %v308 = vadd.f32 %v307, 1.0
    %v309 = vmul.f32 %v308, 0.5
    %v310 = vtanh.pop %v305
    %v311 = vmul.f32 %v309, %v221
    %313 = vrot.lane.b32.xlu0 %v310, 64
    %v314 = vpop.permute.xlu0 %313
    %v316 = vmul.f32 %v309, %v314
    %318 = vrot.lane.b32.xlu0 %v316, 32
    %v319 = vpop.permute.xlu0 %318
    %v321 = vadd.f32 %v311, %v319
    %v322 = vtanh.pop %v321
    %324 = vrot.lane.b32.xlu0 %v322, 64
    %v325 = vpop.permute.xlu0 %324
    %v327 = vmul.f32 %v309, %v325
    %s328 = scalar_lea.vmem [#allocation4], 16
    %v329 = vld [vmem:[%s328] sm:$0xff]
    %331 = vrot.lane.b32.xlu0 %v327, 32
    %v332 = vpop.permute.xlu0 %331
    %v333 = vsel %vm131, %v332, 0
    %335 = vmatprep.subr.mxu0 0.0
    %336 = vmatpush1.msra.mxu0 %v100
    %337 = vmatprep.subr.mxu0 0.0
    %338 = vmatpush1.msra.mxu0 %v101
    %339 = vmatprep.subr.mxu0 0.0
    %340 = vmatpush1.msra.mxu0 %v102
    %341 = vmatprep.subr.mxu0 0.0
    %342 = vmatpush1.msra.mxu0 %v103
    %343 = vmatprep.subr.mxu0 0.0
    %344 = vmatpush1.msra.mxu0 0.0
    %345 = vmatprep.subr.mxu0 0.0
    %346 = vmatpush1.msra.mxu0 0.0
    %347 = vmatprep.subr.mxu0 0.0
    %348 = vmatpush1.msra.mxu0 0.0
    %349 = vmatprep.subr.mxu0 0.0
    %350 = vmatpush1.msra.mxu0 0.0
    %351 = vmatprep.subr.mxu0 0.0
    %352 = vmatpush1.msra.mxu0 0.0
    %353 = vmatprep.subr.mxu0 0.0
    %354 = vmatpush1.msra.mxu0 0.0
    %355 = vmatprep.subr.mxu0 0.0
    %356 = vmatpush1.msra.mxu0 0.0
    %357 = vmatprep.subr.mxu0 0.0
    %358 = vmatpush1.msra.mxu0 0.0
    %359 = vmatprep.subr.mxu0 0.0
    %360 = vmatpush1.msra.mxu0 0.0
    %361 = vmatprep.subr.mxu0 0.0
    %362 = vmatpush1.msra.mxu0 0.0
    %363 = vmatprep.subr.mxu0 0.0
    %364 = vmatpush1.msra.mxu0 0.0
    %365 = vmatprep.subr.mxu0 0.0
    %366 = vmatpush1.msra.mxu0 0.0
    %367 = vmatprep.subr.mxu0 0.0
    %368 = vmatpush1.msra.mxu0 0.0
    %369 = vmatprep.subr.mxu0 0.0
    %370 = vmatpush1.msra.mxu0 0.0
    %371 = vmatprep.subr.mxu0 0.0
    %372 = vmatpush1.msra.mxu0 0.0
    %373 = vmatprep.subr.mxu0 0.0
    %374 = vmatpush1.msra.mxu0 0.0
    %375 = vmatprep.subr.mxu0 0.0
    %376 = vmatpush1.msra.mxu0 0.0
    %377 = vmatprep.subr.mxu0 0.0
    %378 = vmatpush1.msra.mxu0 0.0
    %379 = vmatprep.subr.mxu0 0.0
    %380 = vmatpush1.msra.mxu0 0.0
    %381 = vmatprep.subr.mxu0 0.0
    %382 = vmatpush1.msra.mxu0 0.0
    %383 = vmatprep.subr.mxu0 0.0
    %384 = vmatpush1.msra.mxu0 0.0
    %385 = vmatprep.subr.mxu0 0.0
    %386 = vmatpush1.msra.mxu0 0.0
    %387 = vmatprep.subr.mxu0 0.0
    %388 = vmatpush1.msra.mxu0 0.0
    %389 = vmatprep.subr.mxu0 0.0
    %390 = vmatpush1.msra.mxu0 0.0
    %391 = vmatprep.subr.mxu0 0.0
    %392 = vmatpush1.msra.mxu0 0.0
    %393 = vmatprep.subr.mxu0 0.0
    %394 = vmatpush1.msra.mxu0 0.0
    %395 = vmatprep.subr.mxu0 0.0
    %396 = vmatpush1.msra.mxu0 0.0
    %397 = vmatprep.subr.mxu0 0.0
    %398 = vmatpush1.msra.mxu0 0.0
    %399 = vmatprep.mubr.f32.mxu0 0.0
    %400 = vmatmul.mubr.f32.gmra.mrb[0].mxu0 %v333
    %v401 = vpop.f32.mrb[0].mxu0
    %v402 = vadd.f32 0.0, %v401
    %v403 = vpop.f32.mrb[0].mxu0
    %404 = vdwg.mxu0
    %v405 = vadd.f32 %v329, %v402
    %v406 = vmul.f32 %v405, 0.5
    %v407 = vtanh.pop %v406
    %v408 = vadd.f32 %v407, 1.0
    %v409 = vmul.f32 %v408, 0.5
    %v410 = vtanh.pop %v405
    %v411 = vmul.f32 %v409, %v321
    %413 = vrot.lane.b32.xlu0 %v410, 64
    %v414 = vpop.permute.xlu0 %413
    %v416 = vmul.f32 %v409, %v414
    %418 = vrot.lane.b32.xlu0 %v416, 32
    %v419 = vpop.permute.xlu0 %418
    %v421 = vadd.f32 %v411, %v419
    %v422 = vtanh.pop %v421
    %424 = vrot.lane.b32.xlu0 %v422, 64
    %v425 = vpop.permute.xlu0 %424
    %v427 = vmul.f32 %v409, %v425
    %s428 = scalar_lea.vmem [#allocation4], 24
    %v429 = vld [vmem:[%s428] sm:$0xff]
    %431 = vrot.lane.b32.xlu0 %v427, 32
    %v432 = vpop.permute.xlu0 %431
    %v433 = vsel %vm131, %v432, 0
    %435 = vmatprep.subr.mxu0 0.0
    %436 = vmatpush1.msra.mxu0 %v100
    %437 = vmatprep.subr.mxu0 0.0
    %438 = vmatpush1.msra.mxu0 %v101
    %439 = vmatprep.subr.mxu0 0.0
    %440 = vmatpush1.msra.mxu0 %v102
    %441 = vmatprep.subr.mxu0 0.0
    %442 = vmatpush1.msra.mxu0 %v103
    %443 = vmatprep.subr.mxu0 0.0
    %444 = vmatpush1.msra.mxu0 0.0
    %445 = vmatprep.subr.mxu0 0.0
    %446 = vmatpush1.msra.mxu0 0.0
    %447 = vmatprep.subr.mxu0 0.0
    %448 = vmatpush1.msra.mxu0 0.0
    %449 = vmatprep.subr.mxu0 0.0
    %450 = vmatpush1.msra.mxu0 0.0
    %451 = vmatprep.subr.mxu0 0.0
    %452 = vmatpush1.msra.mxu0 0.0
    %453 = vmatprep.subr.mxu0 0.0
    %454 = vmatpush1.msra.mxu0 0.0
    %455 = vmatprep.subr.mxu0 0.0
    %456 = vmatpush1.msra.mxu0 0.0
    %457 = vmatprep.subr.mxu0 0.0
    %458 = vmatpush1.msra.mxu0 0.0
    %459 = vmatprep.subr.mxu0 0.0
    %460 = vmatpush1.msra.mxu0 0.0
    %461 = vmatprep.subr.mxu0 0.0
    %462 = vmatpush1.msra.mxu0 0.0
    %463 = vmatprep.subr.mxu0 0.0
    %464 = vmatpush1.msra.mxu0 0.0
    %465 = vmatprep.subr.mxu0 0.0
    %466 = vmatpush1.msra.mxu0 0.0
    %467 = vmatprep.subr.mxu0 0.0
    %468 = vmatpush1.msra.mxu0 0.0
    %469 = vmatprep.subr.mxu0 0.0
    %470 = vmatpush1.msra.mxu0 0.0
    %471 = vmatprep.subr.mxu0 0.0
    %472 = vmatpush1.msra.mxu0 0.0
    %473 = vmatprep.subr.mxu0 0.0
    %474 = vmatpush1.msra.mxu0 0.0
    %475 = vmatprep.subr.mxu0 0.0
    %476 = vmatpush1.msra.mxu0 0.0
    %477 = vmatprep.subr.mxu0 0.0
    %478 = vmatpush1.msra.mxu0 0.0
    %479 = vmatprep.subr.mxu0 0.0
    %480 = vmatpush1.msra.mxu0 0.0
    %481 = vmatprep.subr.mxu0 0.0
    %482 = vmatpush1.msra.mxu0 0.0
    %483 = vmatprep.subr.mxu0 0.0
    %484 = vmatpush1.msra.mxu0 0.0
    %485 = vmatprep.subr.mxu0 0.0
    %486 = vmatpush1.msra.mxu0 0.0
    %487 = vmatprep.subr.mxu0 0.0
    %488 = vmatpush1.msra.mxu0 0.0
    %489 = vmatprep.subr.mxu0 0.0
    %490 = vmatpush1.msra.mxu0 0.0
    %491 = vmatprep.subr.mxu0 0.0
    %492 = vmatpush1.msra.mxu0 0.0
    %493 = vmatprep.subr.mxu0 0.0
    %494 = vmatpush1.msra.mxu0 0.0
    %495 = vmatprep.subr.mxu0 0.0
    %496 = vmatpush1.msra.mxu0 0.0
    %497 = vmatprep.subr.mxu0 0.0
    %498 = vmatpush1.msra.mxu0 0.0
    %499 = vmatprep.mubr.f32.mxu0 0.0
    %500 = vmatmul.mubr.f32.gmra.mrb[0].mxu0 %v433
    %v501 = vpop.f32.mrb[0].mxu0
    %v502 = vadd.f32 0.0, %v501
    %v503 = vpop.f32.mrb[0].mxu0
    %504 = vdwg.mxu0
    %v505 = vadd.f32 %v429, %v502
    %v506 = vmul.f32 %v505, 0.5
    %v507 = vtanh.pop %v506
    %v508 = vadd.f32 %v507, 1.0
    %v509 = vmul.f32 %v508, 0.5
    %v510 = vtanh.pop %v505
    %v511 = vmul.f32 %v509, %v421
    %513 = vrot.lane.b32.xlu0 %v510, 64
    %v514 = vpop.permute.xlu0 %513
    %v516 = vmul.f32 %v509, %v514
    %518 = vrot.lane.b32.xlu0 %v516, 32
    %v519 = vpop.permute.xlu0 %518
    %v521 = vadd.f32 %v511, %v519
    %v522 = vtanh.pop %v521
    %524 = vrot.lane.b32.xlu0 %v522, 64
    %v525 = vpop.permute.xlu0 %524
    %v527 = vmul.f32 %v509, %v525
    %s528 = scalar_lea.vmem [#allocation4], 32
    %v529 = vld [vmem:[%s528] sm:$0xff]
    %531 = vrot.lane.b32.xlu0 %v527, 32
    %v532 = vpop.permute.xlu0 %531
    %v533 = vsel %vm131, %v532, 0
    %535 = vmatprep.subr.mxu0 0.0
    %536 = vmatpush1.msra.mxu0 %v100
    %537 = vmatprep.subr.mxu0 0.0
    %538 = vmatpush1.msra.mxu0 %v101
    %539 = vmatprep.subr.mxu0 0.0
    %540 = vmatpush1.msra.mxu0 %v102
    %541 = vmatprep.subr.mxu0 0.0
    %542 = vmatpush1.msra.mxu0 %v103
    %543 = vmatprep.subr.mxu0 0.0
    %544 = vmatpush1.msra.mxu0 0.0
    %545 = vmatprep.subr.mxu0 0.0
    %546 = vmatpush1.msra.mxu0 0.0
    %547 = vmatprep.subr.mxu0 0.0
    %548 = vmatpush1.msra.mxu0 0.0
    %549 = vmatprep.subr.mxu0 0.0
    %550 = vmatpush1.msra.mxu0 0.0
    %551 = vmatprep.subr.mxu0 0.0
    %552 = vmatpush1.msra.mxu0 0.0
    %553 = vmatprep.subr.mxu0 0.0
    %554 = vmatpush1.msra.mxu0 0.0
    %555 = vmatprep.subr.mxu0 0.0
    %556 = vmatpush1.msra.mxu0 0.0
    %557 = vmatprep.subr.mxu0 0.0
    %558 = vmatpush1.msra.mxu0 0.0
    %559 = vmatprep.subr.mxu0 0.0
    %560 = vmatpush1.msra.mxu0 0.0
    %561 = vmatprep.subr.mxu0 0.0
    %562 = vmatpush1.msra.mxu0 0.0
    %563 = vmatprep.subr.mxu0 0.0
    %564 = vmatpush1.msra.mxu0 0.0
    %565 = vmatprep.subr.mxu0 0.0
    %566 = vmatpush1.msra.mxu0 0.0
    %567 = vmatprep.subr.mxu0 0.0
    %568 = vmatpush1.msra.mxu0 0.0
    %569 = vmatprep.subr.mxu0 0.0
    %570 = vmatpush1.msra.mxu0 0.0
    %571 = vmatprep.subr.mxu0 0.0
    %572 = vmatpush1.msra.mxu0 0.0
    %573 = vmatprep.subr.mxu0 0.0
    %574 = vmatpush1.msra.mxu0 0.0
    %575 = vmatprep.subr.mxu0 0.0
    %576 = vmatpush1.msra.mxu0 0.0
    %577 = vmatprep.subr.mxu0 0.0
    %578 = vmatpush1.msra.mxu0 0.0
    %579 = vmatprep.subr.mxu0 0.0
    %580 = vmatpush1.msra.mxu0 0.0
    %581 = vmatprep.subr.mxu0 0.0
    %582 = vmatpush1.msra.mxu0 0.0
    %583 = vmatprep.subr.mxu0 0.0
    %584 = vmatpush1.msra.mxu0 0.0
    %585 = vmatprep.subr.mxu0 0.0
    %586 = vmatpush1.msra.mxu0 0.0
    %587 = vmatprep.subr.mxu0 0.0
    %588 = vmatpush1.msra.mxu0 0.0
    %589 = vmatprep.subr.mxu0 0.0
    %590 = vmatpush1.msra.mxu0 0.0
    %591 = vmatprep.subr.mxu0 0.0
    %592 = vmatpush1.msra.mxu0 0.0
    %593 = vmatprep.subr.mxu0 0.0
    %594 = vmatpush1.msra.mxu0 0.0
    %595 = vmatprep.subr.mxu0 0.0
    %596 = vmatpush1.msra.mxu0 0.0
    %597 = vmatprep.subr.mxu0 0.0
    %598 = vmatpush1.msra.mxu0 0.0
    %599 = vmatprep.mubr.f32.mxu0 0.0
    %600 = vmatmul.mubr.f32.gmra.mrb[0].mxu0 %v533
    %v601 = vpop.f32.mrb[0].mxu0
    %v602 = vadd.f32 0.0, %v601
    %v603 = vpop.f32.mrb[0].mxu0
    %604 = vdwg.mxu0
    %v605 = vadd.f32 %v529, %v602
    %v606 = vmul.f32 %v605, 0.5
    %v607 = vtanh.pop %v606
    %v608 = vadd.f32 %v607, 1.0
    %v609 = vmul.f32 %v608, 0.5
    %v610 = vtanh.pop %v605
    %v611 = vmul.f32 %v609, %v521
    %613 = vrot.lane.b32.xlu0 %v610, 64
    %v614 = vpop.permute.xlu0 %613
    %v616 = vmul.f32 %v609, %v614
    %618 = vrot.lane.b32.xlu0 %v616, 32
    %v619 = vpop.permute.xlu0 %618
    %v621 = vadd.f32 %v611, %v619
    %v622 = vtanh.pop %v621
    %624 = vrot.lane.b32.xlu0 %v622, 64
    %v625 = vpop.permute.xlu0 %624
    %v627 = vmul.f32 %v609, %v625
    %s628 = scalar_lea.vmem [#allocation4], 40
    %v629 = vld [vmem:[%s628] sm:$0xff]
    %631 = vrot.lane.b32.xlu0 %v627, 32
    %v632 = vpop.permute.xlu0 %631
    %v633 = vsel %vm131, %v632, 0
    %635 = vmatprep.subr.mxu0 0.0
    %636 = vmatpush1.msra.mxu0 %v100
    %637 = vmatprep.subr.mxu0 0.0
    %638 = vmatpush1.msra.mxu0 %v101
    %639 = vmatprep.subr.mxu0 0.0
    %640 = vmatpush1.msra.mxu0 %v102
    %641 = vmatprep.subr.mxu0 0.0
    %642 = vmatpush1.msra.mxu0 %v103
    %643 = vmatprep.subr.mxu0 0.0
    %644 = vmatpush1.msra.mxu0 0.0
    %645 = vmatprep.subr.mxu0 0.0
    %646 = vmatpush1.msra.mxu0 0.0
    %647 = vmatprep.subr.mxu0 0.0
    %648 = vmatpush1.msra.mxu0 0.0
    %649 = vmatprep.subr.mxu0 0.0
    %650 = vmatpush1.msra.mxu0 0.0
    %651 = vmatprep.subr.mxu0 0.0
    %652 = vmatpush1.msra.mxu0 0.0
    %653 = vmatprep.subr.mxu0 0.0
    %654 = vmatpush1.msra.mxu0 0.0
    %655 = vmatprep.subr.mxu0 0.0
    %656 = vmatpush1.msra.mxu0 0.0
    %657 = vmatprep.subr.mxu0 0.0
    %658 = vmatpush1.msra.mxu0 0.0
    %659 = vmatprep.subr.mxu0 0.0
    %660 = vmatpush1.msra.mxu0 0.0
    %661 = vmatprep.subr.mxu0 0.0
    %662 = vmatpush1.msra.mxu0 0.0
    %663 = vmatprep.subr.mxu0 0.0
    %664 = vmatpush1.msra.mxu0 0.0
    %665 = vmatprep.subr.mxu0 0.0
    %666 = vmatpush1.msra.mxu0 0.0
    %667 = vmatprep.subr.mxu0 0.0
    %668 = vmatpush1.msra.mxu0 0.0
    %669 = vmatprep.subr.mxu0 0.0
    %670 = vmatpush1.msra.mxu0 0.0
    %671 = vmatprep.subr.mxu0 0.0
    %672 = vmatpush1.msra.mxu0 0.0
    %673 = vmatprep.subr.mxu0 0.0
    %674 = vmatpush1.msra.mxu0 0.0
    %675 = vmatprep.subr.mxu0 0.0
    %676 = vmatpush1.msra.mxu0 0.0
    %677 = vmatprep.subr.mxu0 0.0
    %678 = vmatpush1.msra.mxu0 0.0
    %679 = vmatprep.subr.mxu0 0.0
    %680 = vmatpush1.msra.mxu0 0.0
    %681 = vmatprep.subr.mxu0 0.0
    %682 = vmatpush1.msra.mxu0 0.0
    %683 = vmatprep.subr.mxu0 0.0
    %684 = vmatpush1.msra.mxu0 0.0
    %685 = vmatprep.subr.mxu0 0.0
    %686 = vmatpush1.msra.mxu0 0.0
    %687 = vmatprep.subr.mxu0 0.0
    %688 = vmatpush1.msra.mxu0 0.0
    %689 = vmatprep.subr.mxu0 0.0
    %690 = vmatpush1.msra.mxu0 0.0
    %691 = vmatprep.subr.mxu0 0.0
    %692 = vmatpush1.msra.mxu0 0.0
    %693 = vmatprep.subr.mxu0 0.0
    %694 = vmatpush1.msra.mxu0 0.0
    %695 = vmatprep.subr.mxu0 0.0
    %696 = vmatpush1.msra.mxu0 0.0
    %697 = vmatprep.subr.mxu0 0.0
    %698 = vmatpush1.msra.mxu0 0.0
    %699 = vmatprep.mubr.f32.mxu0 0.0
    %700 = vmatmul.mubr.f32.gmra.mrb[0].mxu0 %v633
    %v701 = vpop.f32.mrb[0].mxu0
    %v702 = vadd.f32 0.0, %v701
    %v703 = vpop.f32.mrb[0].mxu0
    %704 = vdwg.mxu0
    %v705 = vadd.f32 %v629, %v702
    %v706 = vmul.f32 %v705, 0.5
    %v707 = vtanh.pop %v706
    %v708 = vadd.f32 %v707, 1.0
    %v709 = vmul.f32 %v708, 0.5
    %v710 = vtanh.pop %v705
    %v711 = vmul.f32 %v709, %v621
    %713 = vrot.lane.b32.xlu0 %v710, 64
    %v714 = vpop.permute.xlu0 %713
    %v716 = vmul.f32 %v709, %v714
    %718 = vrot.lane.b32.xlu0 %v716, 32
    %v719 = vpop.permute.xlu0 %718
    %v721 = vadd.f32 %v711, %v719
    %v722 = vtanh.pop %v721
    %724 = vrot.lane.b32.xlu0 %v722, 64
    %v725 = vpop.permute.xlu0 %724
    %v727 = vmul.f32 %v709, %v725
    %s728 = scalar_lea.vmem [#allocation4], 48
    %v729 = vld [vmem:[%s728] sm:$0xff]
    %731 = vrot.lane.b32.xlu0 %v727, 32
    %v732 = vpop.permute.xlu0 %731
    %v733 = vsel %vm131, %v732, 0
    %735 = vmatprep.subr.mxu0 0.0
    %736 = vmatpush1.msra.mxu0 %v100
    %737 = vmatprep.subr.mxu0 0.0
    %738 = vmatpush1.msra.mxu0 %v101
    %739 = vmatprep.subr.mxu0 0.0
    %740 = vmatpush1.msra.mxu0 %v102
    %741 = vmatprep.subr.mxu0 0.0
    %742 = vmatpush1.msra.mxu0 %v103
    %743 = vmatprep.subr.mxu0 0.0
    %744 = vmatpush1.msra.mxu0 0.0
    %745 = vmatprep.subr.mxu0 0.0
    %746 = vmatpush1.msra.mxu0 0.0
    %747 = vmatprep.subr.mxu0 0.0
    %748 = vmatpush1.msra.mxu0 0.0
    %749 = vmatprep.subr.mxu0 0.0
    %750 = vmatpush1.msra.mxu0 0.0
    %751 = vmatprep.subr.mxu0 0.0
    %752 = vmatpush1.msra.mxu0 0.0
    %753 = vmatprep.subr.mxu0 0.0
    %754 = vmatpush1.msra.mxu0 0.0
    %755 = vmatprep.subr.mxu0 0.0
    %756 = vmatpush1.msra.mxu0 0.0
    %757 = vmatprep.subr.mxu0 0.0
    %758 = vmatpush1.msra.mxu0 0.0
    %759 = vmatprep.subr.mxu0 0.0
    %760 = vmatpush1.msra.mxu0 0.0
    %761 = vmatprep.subr.mxu0 0.0
    %762 = vmatpush1.msra.mxu0 0.0
    %763 = vmatprep.subr.mxu0 0.0
    %764 = vmatpush1.msra.mxu0 0.0
    %765 = vmatprep.subr.mxu0 0.0
    %766 = vmatpush1.msra.mxu0 0.0
    %767 = vmatprep.subr.mxu0 0.0
    %768 = vmatpush1.msra.mxu0 0.0
    %769 = vmatprep.subr.mxu0 0.0
    %770 = vmatpush1.msra.mxu0 0.0
    %771 = vmatprep.subr.mxu0 0.0
    %772 = vmatpush1.msra.mxu0 0.0
    %773 = vmatprep.subr.mxu0 0.0
    %774 = vmatpush1.msra.mxu0 0.0
    %775 = vmatprep.subr.mxu0 0.0
    %776 = vmatpush1.msra.mxu0 0.0
    %777 = vmatprep.subr.mxu0 0.0
    %778 = vmatpush1.msra.mxu0 0.0
    %779 = vmatprep.subr.mxu0 0.0
    %780 = vmatpush1.msra.mxu0 0.0
    %781 = vmatprep.subr.mxu0 0.0
    %782 = vmatpush1.msra.mxu0 0.0
    %783 = vmatprep.subr.mxu0 0.0
    %784 = vmatpush1.msra.mxu0 0.0
    %785 = vmatprep.subr.mxu0 0.0
    %786 = vmatpush1.msra.mxu0 0.0
    %787 = vmatprep.subr.mxu0 0.0
    %788 = vmatpush1.msra.mxu0 0.0
    %789 = vmatprep.subr.mxu0 0.0
    %790 = vmatpush1.msra.mxu0 0.0
    %791 = vmatprep.subr.mxu0 0.0
    %792 = vmatpush1.msra.mxu0 0.0
    %793 = vmatprep.subr.mxu0 0.0
    %794 = vmatpush1.msra.mxu0 0.0
    %795 = vmatprep.subr.mxu0 0.0
    %796 = vmatpush1.msra.mxu0 0.0
    %797 = vmatprep.subr.mxu0 0.0
    %798 = vmatpush1.msra.mxu0 0.0
    %799 = vmatprep.mubr.f32.mxu0 0.0
    %800 = vmatmul.mubr.f32.gmra.mrb[0].mxu0 %v733
    %v801 = vpop.f32.mrb[0].mxu0
    %v802 = vadd.f32 0.0, %v801
    %v803 = vpop.f32.mrb[0].mxu0
    %804 = vdwg.mxu0
    %v805 = vadd.f32 %v729, %v802
    %v806 = vmul.f32 %v805, 0.5
    %v807 = vtanh.pop %v806
    %v808 = vadd.f32 %v807, 1.0
    %v809 = vmul.f32 %v808, 0.5
    %v810 = vtanh.pop %v805
    %v811 = vmul.f32 %v809, %v721
    %813 = vrot.lane.b32.xlu0 %v810, 64
    %v814 = vpop.permute.xlu0 %813
    %v816 = vmul.f32 %v809, %v814
    %818 = vrot.lane.b32.xlu0 %v816, 32
    %v819 = vpop.permute.xlu0 %818
    %v821 = vadd.f32 %v811, %v819
    %v822 = vtanh.pop %v821
    %824 = vrot.lane.b32.xlu0 %v822, 64
    %v825 = vpop.permute.xlu0 %824
    %v827 = vmul.f32 %v809, %v825
    %s828 = scalar_lea.vmem [#allocation4], 56
    %v829 = vld [vmem:[%s828] sm:$0xff]
    %831 = vrot.lane.b32.xlu0 %v827, 32
    %v832 = vpop.permute.xlu0 %831
    %v833 = vsel %vm131, %v832, 0
    %835 = vmatprep.subr.mxu0 0.0
    %836 = vmatpush1.msra.mxu0 %v100
    %837 = vmatprep.subr.mxu0 0.0
    %838 = vmatpush1.msra.mxu0 %v101
    %839 = vmatprep.subr.mxu0 0.0
    %840 = vmatpush1.msra.mxu0 %v102
    %841 = vmatprep.subr.mxu0 0.0
    %842 = vmatpush1.msra.mxu0 %v103
    %843 = vmatprep.subr.mxu0 0.0
    %844 = vmatpush1.msra.mxu0 0.0
    %845 = vmatprep.subr.mxu0 0.0
    %846 = vmatpush1.msra.mxu0 0.0
    %847 = vmatprep.subr.mxu0 0.0
    %848 = vmatpush1.msra.mxu0 0.0
    %849 = vmatprep.subr.mxu0 0.0
    %850 = vmatpush1.msra.mxu0 0.0
    %851 = vmatprep.subr.mxu0 0.0
    %852 = vmatpush1.msra.mxu0 0.0
    %853 = vmatprep.subr.mxu0 0.0
    %854 = vmatpush1.msra.mxu0 0.0
    %855 = vmatprep.subr.mxu0 0.0
    %856 = vmatpush1.msra.mxu0 0.0
    %857 = vmatprep.subr.mxu0 0.0
    %858 = vmatpush1.msra.mxu0 0.0
    %859 = vmatprep.subr.mxu0 0.0
    %860 = vmatpush1.msra.mxu0 0.0
    %861 = vmatprep.subr.mxu0 0.0
    %862 = vmatpush1.msra.mxu0 0.0
    %863 = vmatprep.subr.mxu0 0.0
    %864 = vmatpush1.msra.mxu0 0.0
    %865 = vmatprep.subr.mxu0 0.0
    %866 = vmatpush1.msra.mxu0 0.0
    %867 = vmatprep.subr.mxu0 0.0
    %868 = vmatpush1.msra.mxu0 0.0
    %869 = vmatprep.subr.mxu0 0.0
    %870 = vmatpush1.msra.mxu0 0.0
    %871 = vmatprep.subr.mxu0 0.0
    %872 = vmatpush1.msra.mxu0 0.0
    %873 = vmatprep.subr.mxu0 0.0
    %874 = vmatpush1.msra.mxu0 0.0
    %875 = vmatprep.subr.mxu0 0.0
    %876 = vmatpush1.msra.mxu0 0.0
    %877 = vmatprep.subr.mxu0 0.0
    %878 = vmatpush1.msra.mxu0 0.0
    %879 = vmatprep.subr.mxu0 0.0
    %880 = vmatpush1.msra.mxu0 0.0
    %881 = vmatprep.subr.mxu0 0.0
    %882 = vmatpush1.msra.mxu0 0.0
    %883 = vmatprep.subr.mxu0 0.0
    %884 = vmatpush1.msra.mxu0 0.0
    %885 = vmatprep.subr.mxu0 0.0
    %886 = vmatpush1.msra.mxu0 0.0
    %887 = vmatprep.subr.mxu0 0.0
    %888 = vmatpush1.msra.mxu0 0.0
    %889 = vmatprep.subr.mxu0 0.0
    %890 = vmatpush1.msra.mxu0 0.0
    %891 = vmatprep.subr.mxu0 0.0
    %892 = vmatpush1.msra.mxu0 0.0
    %893 = vmatprep.subr.mxu0 0.0
    %894 = vmatpush1.msra.mxu0 0.0
    %895 = vmatprep.subr.mxu0 0.0
    %896 = vmatpush1.msra.mxu0 0.0
    %897 = vmatprep.subr.mxu0 0.0
    %898 = vmatpush1.msra.mxu0 0.0
    %899 = vmatprep.mubr.f32.mxu0 0.0
    %900 = vmatmul.mubr.f32.gmra.mrb[0].mxu0 %v833
    %v901 = vpop.f32.mrb[0].mxu0
    %v902 = vadd.f32 0.0, %v901
    %v903 = vpop.f32.mrb[0].mxu0
    %904 = vdwg.mxu0
    %v905 = vadd.f32 %v829, %v902
    %v906 = vmul.f32 %v905, 0.5
    %v907 = vtanh.pop %v906
    %v908 = vadd.f32 %v907, 1.0
    %v909 = vmul.f32 %v908, 0.5
    %v910 = vtanh.pop %v905
    %v911 = vmul.f32 %v909, %v821
    %913 = vrot.lane.b32.xlu0 %v910, 64
    %v914 = vpop.permute.xlu0 %913
    %v916 = vmul.f32 %v909, %v914
    %918 = vrot.lane.b32.xlu0 %v916, 32
    %v919 = vpop.permute.xlu0 %918
    %v921 = vadd.f32 %v911, %v919
    %v922 = vtanh.pop %v921
    %924 = vrot.lane.b32.xlu0 %v922, 64
    %v925 = vpop.permute.xlu0 %924
    %v927 = vmul.f32 %v909, %v925
    %928 = vst [vmem:[#allocation13] sm:$0xff] 0.0
    %930 = vrot.lane.b32.xlu0 %v927, 32
    %v931 = vpop.permute.xlu0 %930
    %v932 = vsel %vm131, %v931, 0
    %934 = vmatprep.subr.mxu0 %v105
    %935 = vmatpush1.msra.mxu0 %v104
    %936 = vmatprep.subr.mxu0 %v107
    %937 = vmatpush1.msra.mxu0 %v106
    %938 = vmatprep.subr.mxu0 %v109
    %939 = vmatpush1.msra.mxu0 %v108
    %940 = vmatprep.subr.mxu0 %v111
    %941 = vmatpush1.msra.mxu0 %v110
    %942 = vmatprep.subr.mxu0 0.0
    %943 = vmatpush1.msra.mxu0 0.0
    %944 = vmatprep.subr.mxu0 0.0
    %945 = vmatpush1.msra.mxu0 0.0
    %946 = vmatprep.subr.mxu0 0.0
    %947 = vmatpush1.msra.mxu0 0.0
    %948 = vmatprep.subr.mxu0 0.0
    %949 = vmatpush1.msra.mxu0 0.0
    %950 = vmatprep.subr.mxu0 0.0
    %951 = vmatpush1.msra.mxu0 0.0
    %952 = vmatprep.subr.mxu0 0.0
    %953 = vmatpush1.msra.mxu0 0.0
    %954 = vmatprep.subr.mxu0 0.0
    %955 = vmatpush1.msra.mxu0 0.0
    %956 = vmatprep.subr.mxu0 0.0
    %957 = vmatpush1.msra.mxu0 0.0
    %958 = vmatprep.subr.mxu0 0.0
    %959 = vmatpush1.msra.mxu0 0.0
    %960 = vmatprep.subr.mxu0 0.0
    %961 = vmatpush1.msra.mxu0 0.0
    %962 = vmatprep.subr.mxu0 0.0
    %963 = vmatpush1.msra.mxu0 0.0
    %964 = vmatprep.subr.mxu0 0.0
    %965 = vmatpush1.msra.mxu0 0.0
    %966 = vmatprep.subr.mxu0 0.0
    %967 = vmatpush1.msra.mxu0 0.0
    %968 = vmatprep.subr.mxu0 0.0
    %969 = vmatpush1.msra.mxu0 0.0
    %970 = vmatprep.subr.mxu0 0.0
    %971 = vmatpush1.msra.mxu0 0.0
    %972 = vmatprep.subr.mxu0 0.0
    %973 = vmatpush1.msra.mxu0 0.0
    %974 = vmatprep.subr.mxu0 0.0
    %975 = vmatpush1.msra.mxu0 0.0
    %976 = vmatprep.subr.mxu0 0.0
    %977 = vmatpush1.msra.mxu0 0.0
    %978 = vmatprep.subr.mxu0 0.0
    %979 = vmatpush1.msra.mxu0 0.0
    %980 = vmatprep.subr.mxu0 0.0
    %981 = vmatpush1.msra.mxu0 0.0
    %982 = vmatprep.subr.mxu0 0.0
    %983 = vmatpush1.msra.mxu0 0.0
    %984 = vmatprep.subr.mxu0 0.0
    %985 = vmatpush1.msra.mxu0 0.0
    %986 = vmatprep.subr.mxu0 0.0
    %987 = vmatpush1.msra.mxu0 0.0
    %988 = vmatprep.subr.mxu0 0.0
    %989 = vmatpush1.msra.mxu0 0.0
    %990 = vmatprep.subr.mxu0 0.0
    %991 = vmatpush1.msra.mxu0 0.0
    %992 = vmatprep.subr.mxu0 0.0
    %993 = vmatpush1.msra.mxu0 0.0
    %994 = vmatprep.subr.mxu0 0.0
    %995 = vmatpush1.msra.mxu0 0.0
    %996 = vmatprep.subr.mxu0 0.0
    %997 = vmatpush1.msra.mxu0 0.0
    %998 = vmatprep.mubr.f32.mxu0 0.0
    %999 = vmatmul.mubr.f32.gmra.mrb[0].mxu0 %v932
    %v1000 = vpop.f32.mrb[0].mxu0
    %v1001 = vadd.f32 0.0, %v1000
    %v1002 = vpop.f32.mrb[0].mxu0
    %1003 = vdwg.mxu0
    %v1004 = vld [vmem:[#allocation7] sm:$0xff]
    %v1005 = vadd.f32 %v1004, %v1001
    %v1006 = vmul.f32 %v1005, 0.5
    %v1007 = vtanh.pop %v1006
    %v1008 = vadd.f32 %v1007, 1.0
    %v1009 = vmul.f32 %v1008, 0.5
    %v1010 = vtanh.pop %v1005
    %v1011 = vmul.f32 %v1009, %v921
    %1013 = vrot.lane.b32.xlu0 %v1010, 64
    %v1014 = vpop.permute.xlu0 %1013
    %v1016 = vmul.f32 %v1009, %v1014
    %1018 = vrot.lane.b32.xlu0 %v1016, 32
    %v1019 = vpop.permute.xlu0 %1018
    %v1021 = vadd.f32 %v1011, %v1019
    %v1022 = vtanh.pop %v1021
    %1024 = vrot.lane.b32.xlu0 %v1022, 64
    %v1025 = vpop.permute.xlu0 %1024
    %v1027 = vmul.f32 %v1009, %v1025
    %1029 = vrot.lane.b32.xlu0 %v1027, 32
    %v1030 = vpop.permute.xlu0 %1029
    %v1031 = vsel %vm131, %v1030, 0
    %1033 = vmatprep.subr.mxu0 0.0
    %1034 = vmatpush1.msra.mxu0 %v112
    %1035 = vmatprep.subr.mxu0 0.0
    %1036 = vmatpush1.msra.mxu0 %v113
    %1037 = vmatprep.subr.mxu0 0.0
    %1038 = vmatpush1.msra.mxu0 %v114
    %1039 = vmatprep.subr.mxu0 0.0
    %1040 = vmatpush1.msra.mxu0 %v115
    %1041 = vmatprep.subr.mxu0 0.0
    %1042 = vmatpush1.msra.mxu0 0.0
    %1043 = vmatprep.subr.mxu0 0.0
    %1044 = vmatpush1.msra.mxu0 0.0
    %1045 = vmatprep.subr.mxu0 0.0
    %1046 = vmatpush1.msra.mxu0 0.0
    %1047 = vmatprep.subr.mxu0 0.0
    %1048 = vmatpush1.msra.mxu0 0.0
    %1049 = vmatprep.subr.mxu0 0.0
    %1050 = vmatpush1.msra.mxu0 0.0
    %1051 = vmatprep.subr.mxu0 0.0
    %1052 = vmatpush1.msra.mxu0 0.0
    %1053 = vmatprep.subr.mxu0 0.0
    %1054 = vmatpush1.msra.mxu0 0.0
    %1055 = vmatprep.subr.mxu0 0.0
    %1056 = vmatpush1.msra.mxu0 0.0
    %1057 = vmatprep.subr.mxu0 0.0
    %1058 = vmatpush1.msra.mxu0 0.0
    %1059 = vmatprep.subr.mxu0 0.0
    %1060 = vmatpush1.msra.mxu0 0.0
    %1061 = vmatprep.subr.mxu0 0.0
    %1062 = vmatpush1.msra.mxu0 0.0
    %1063 = vmatprep.subr.mxu0 0.0
    %1064 = vmatpush1.msra.mxu0 0.0
    %1065 = vmatprep.subr.mxu0 0.0
    %1066 = vmatpush1.msra.mxu0 0.0
    %1067 = vmatprep.subr.mxu0 0.0
    %1068 = vmatpush1.msra.mxu0 0.0
    %1069 = vmatprep.subr.mxu0 0.0
    %1070 = vmatpush1.msra.mxu0 0.0
    %1071 = vmatprep.subr.mxu0 0.0
    %1072 = vmatpush1.msra.mxu0 0.0
    %1073 = vmatprep.subr.mxu0 0.0
    %1074 = vmatpush1.msra.mxu0 0.0
    %1075 = vmatprep.subr.mxu0 0.0
    %1076 = vmatpush1.msra.mxu0 0.0
    %1077 = vmatprep.subr.mxu0 0.0
    %1078 = vmatpush1.msra.mxu0 0.0
    %1079 = vmatprep.subr.mxu0 0.0
    %1080 = vmatpush1.msra.mxu0 0.0
    %1081 = vmatprep.subr.mxu0 0.0
    %1082 = vmatpush1.msra.mxu0 0.0
    %1083 = vmatprep.subr.mxu0 0.0
    %1084 = vmatpush1.msra.mxu0 0.0
    %1085 = vmatprep.subr.mxu0 0.0
    %1086 = vmatpush1.msra.mxu0 0.0
    %1087 = vmatprep.subr.mxu0 0.0
    %1088 = vmatpush1.msra.mxu0 0.0
    %1089 = vmatprep.subr.mxu0 0.0
    %1090 = vmatpush1.msra.mxu0 0.0
    %1091 = vmatprep.subr.mxu0 0.0
    %1092 = vmatpush1.msra.mxu0 0.0
    %1093 = vmatprep.subr.mxu0 0.0
    %1094 = vmatpush1.msra.mxu0 0.0
    %1095 = vmatprep.subr.mxu0 0.0
    %1096 = vmatpush1.msra.mxu0 0.0
    %1097 = vmatprep.mubr.f32.mxu0 0.0
    %1098 = vmatmul.mubr.f32.gmra.mrb[0].mxu0 %v1031
    %v1099 = vpop.f32.mrb[0].mxu0
    %v1100 = vadd.f32 %v128, %v1099
    %v1101 = vpop.f32.mrb[0].mxu0
    %1102 = vdwg.mxu0
    %s1103 = scalar_lea.vmem [#allocation13], 8
    %1104 = vst [vmem:[%s1103] sm:$0xff] %v1100
    %1105 = vmatprep.subr.mxu0 %v105
    %1106 = vmatpush1.msra.mxu0 %v104
    %1107 = vmatprep.subr.mxu0 %v107
    %1108 = vmatpush1.msra.mxu0 %v106
    %1109 = vmatprep.subr.mxu0 %v109
    %1110 = vmatpush1.msra.mxu0 %v108
    %1111 = vmatprep.subr.mxu0 %v111
    %1112 = vmatpush1.msra.mxu0 %v110
    %1113 = vmatprep.subr.mxu0 0.0
    %1114 = vmatpush1.msra.mxu0 0.0
    %1115 = vmatprep.subr.mxu0 0.0
    %1116 = vmatpush1.msra.mxu0 0.0
    %1117 = vmatprep.subr.mxu0 0.0
    %1118 = vmatpush1.msra.mxu0 0.0
    %1119 = vmatprep.subr.mxu0 0.0
    %1120 = vmatpush1.msra.mxu0 0.0
    %1121 = vmatprep.subr.mxu0 0.0
    %1122 = vmatpush1.msra.mxu0 0.0
    %1123 = vmatprep.subr.mxu0 0.0
    %1124 = vmatpush1.msra.mxu0 0.0
    %1125 = vmatprep.subr.mxu0 0.0
    %1126 = vmatpush1.msra.mxu0 0.0
    %1127 = vmatprep.subr.mxu0 0.0
    %1128 = vmatpush1.msra.mxu0 0.0
    %1129 = vmatprep.subr.mxu0 0.0
    %1130 = vmatpush1.msra.mxu0 0.0
    %1131 = vmatprep.subr.mxu0 0.0
    %1132 = vmatpush1.msra.mxu0 0.0
    %1133 = vmatprep.subr.mxu0 0.0
    %1134 = vmatpush1.msra.mxu0 0.0
    %1135 = vmatprep.subr.mxu0 0.0
    %1136 = vmatpush1.msra.mxu0 0.0
    %1137 = vmatprep.subr.mxu0 0.0
    %1138 = vmatpush1.msra.mxu0 0.0
    %1139 = vmatprep.subr.mxu0 0.0
    %1140 = vmatpush1.msra.mxu0 0.0
    %1141 = vmatprep.subr.mxu0 0.0
    %1142 = vmatpush1.msra.mxu0 0.0
    %1143 = vmatprep.subr.mxu0 0.0
    %1144 = vmatpush1.msra.mxu0 0.0
    %1145 = vmatprep.subr.mxu0 0.0
    %1146 = vmatpush1.msra.mxu0 0.0
    %1147 = vmatprep.subr.mxu0 0.0
    %1148 = vmatpush1.msra.mxu0 0.0
    %1149 = vmatprep.subr.mxu0 0.0
    %1150 = vmatpush1.msra.mxu0 0.0
    %1151 = vmatprep.subr.mxu0 0.0
    %1152 = vmatpush1.msra.mxu0 0.0
    %1153 = vmatprep.subr.mxu0 0.0
    %1154 = vmatpush1.msra.mxu0 0.0
    %1155 = vmatprep.subr.mxu0 0.0
    %1156 = vmatpush1.msra.mxu0 0.0
    %1157 = vmatprep.subr.mxu0 0.0
    %1158 = vmatpush1.msra.mxu0 0.0
    %1159 = vmatprep.subr.mxu0 0.0
    %1160 = vmatpush1.msra.mxu0 0.0
    %1161 = vmatprep.subr.mxu0 0.0
    %1162 = vmatpush1.msra.mxu0 0.0
    %1163 = vmatprep.subr.mxu0 0.0
    %1164 = vmatpush1.msra.mxu0 0.0
    %1165 = vmatprep.subr.mxu0 0.0
    %1166 = vmatpush1.msra.mxu0 0.0
    %1167 = vmatprep.subr.mxu0 0.0
    %1168 = vmatpush1.msra.mxu0 0.0
    %1169 = vmatprep.mubr.f32.mxu0 0.0
    %1170 = vmatmul.mubr.f32.gmra.mrb[0].mxu0 %v1031
    %v1171 = vpop.f32.mrb[0].mxu0
    %v1172 = vadd.f32 0.0, %v1171
    %v1173 = vpop.f32.mrb[0].mxu0
    %v1174 = vadd.f32 0.0, %v1173
    %1175 = vdwg.mxu0
    %v1176 = vadd.f32 %v1174, %v121
    %s1177 = sld [smem:[#allocation3]]
    %p1178 = scmp.eq.s32.totalorder %s1177, 1
    %s1179 = scalar_lea.vmem [#allocation7], 8
    %v1180 = vld [vmem:[%s1179] sm:$0xff]
    %s1181 = scalar_select %p1178, 1, 0
    %v1182 = vstv %s1181
    %vm1183 = vcmp.eq.s32.totalorder %v1182, 1
    %v1184 = vsel %vm1183, %v1180, %v1176
    %v1185 = vadd.f32 %v1172, %v1184
    %v1186 = vmul.f32 %v1185, 0.5
    %v1187 = vtanh.pop %v1186
    %v1188 = vadd.f32 %v1187, 1.0
    %v1189 = vmul.f32 %v1188, 0.5
    %v1190 = vtanh.pop %v1185
    %v1191 = vmul.f32 %v1189, %v1021
    %1193 = vrot.lane.b32.xlu0 %v1190, 64
    %v1194 = vpop.permute.xlu0 %1193
    %v1196 = vmul.f32 %v1189, %v1194
    %1198 = vrot.lane.b32.xlu0 %v1196, 32
    %v1199 = vpop.permute.xlu0 %1198
    %v1201 = vadd.f32 %v1191, %v1199
    %v1202 = vtanh.pop %v1201
    %1204 = vrot.lane.b32.xlu0 %v1202, 64
    %v1205 = vpop.permute.xlu0 %1204
    %v1207 = vmul.f32 %v1189, %v1205
    %1209 = vrot.lane.b32.xlu0 %v1207, 32
    %v1210 = vpop.permute.xlu0 %1209
    %v1211 = vsel %vm131, %v1210, 0
    %1213 = vmatprep.subr.mxu0 0.0
    %1214 = vmatpush1.msra.mxu0 %v112
    %1215 = vmatprep.subr.mxu0 0.0
    %1216 = vmatpush1.msra.mxu0 %v113
    %1217 = vmatprep.subr.mxu0 0.0
    %1218 = vmatpush1.msra.mxu0 %v114
    %1219 = vmatprep.subr.mxu0 0.0
    %1220 = vmatpush1.msra.mxu0 %v115
    %1221 = vmatprep.subr.mxu0 0.0
    %1222 = vmatpush1.msra.mxu0 0.0
    %1223 = vmatprep.subr.mxu0 0.0
    %1224 = vmatpush1.msra.mxu0 0.0
    %1225 = vmatprep.subr.mxu0 0.0
    %1226 = vmatpush1.msra.mxu0 0.0
    %1227 = vmatprep.subr.mxu0 0.0
    %1228 = vmatpush1.msra.mxu0 0.0
    %1229 = vmatprep.subr.mxu0 0.0
    %1230 = vmatpush1.msra.mxu0 0.0
    %1231 = vmatprep.subr.mxu0 0.0
    %1232 = vmatpush1.msra.mxu0 0.0
    %1233 = vmatprep.subr.mxu0 0.0
    %1234 = vmatpush1.msra.mxu0 0.0
    %1235 = vmatprep.subr.mxu0 0.0
    %1236 = vmatpush1.msra.mxu0 0.0
    %1237 = vmatprep.subr.mxu0 0.0
    %1238 = vmatpush1.msra.mxu0 0.0
    %1239 = vmatprep.subr.mxu0 0.0
    %1240 = vmatpush1.msra.mxu0 0.0
    %1241 = vmatprep.subr.mxu0 0.0
    %1242 = vmatpush1.msra.mxu0 0.0
    %1243 = vmatprep.subr.mxu0 0.0
    %1244 = vmatpush1.msra.mxu0 0.0
    %1245 = vmatprep.subr.mxu0 0.0
    %1246 = vmatpush1.msra.mxu0 0.0
    %1247 = vmatprep.subr.mxu0 0.0
    %1248 = vmatpush1.msra.mxu0 0.0
    %1249 = vmatprep.subr.mxu0 0.0
    %1250 = vmatpush1.msra.mxu0 0.0
    %1251 = vmatprep.subr.mxu0 0.0
    %1252 = vmatpush1.msra.mxu0 0.0
    %1253 = vmatprep.subr.mxu0 0.0
    %1254 = vmatpush1.msra.mxu0 0.0
    %1255 = vmatprep.subr.mxu0 0.0
    %1256 = vmatpush1.msra.mxu0 0.0
    %1257 = vmatprep.subr.mxu0 0.0
    %1258 = vmatpush1.msra.mxu0 0.0
    %1259 = vmatprep.subr.mxu0 0.0
    %1260 = vmatpush1.msra.mxu0 0.0
    %1261 = vmatprep.subr.mxu0 0.0
    %1262 = vmatpush1.msra.mxu0 0.0
    %1263 = vmatprep.subr.mxu0 0.0
    %1264 = vmatpush1.msra.mxu0 0.0
    %1265 = vmatprep.subr.mxu0 0.0
    %1266 = vmatpush1.msra.mxu0 0.0
    %1267 = vmatprep.subr.mxu0 0.0
    %1268 = vmatpush1.msra.mxu0 0.0
    %1269 = vmatprep.subr.mxu0 0.0
    %1270 = vmatpush1.msra.mxu0 0.0
    %1271 = vmatprep.subr.mxu0 0.0
    %1272 = vmatpush1.msra.mxu0 0.0
    %1273 = vmatprep.subr.mxu0 0.0
    %1274 = vmatpush1.msra.mxu0 0.0
    %1275 = vmatprep.subr.mxu0 0.0
    %1276 = vmatpush1.msra.mxu0 0.0
    %1277 = vmatprep.mubr.f32.mxu0 0.0
    %1278 = vmatmul.mubr.f32.gmra.mrb[0].mxu0 %v1211
    %v1279 = vpop.f32.mrb[0].mxu0
    %v1280 = vadd.f32 %v128, %v1279
    %v1281 = vpop.f32.mrb[0].mxu0
    %1282 = vdwg.mxu0
    %s1283 = scalar_lea.vmem [#allocation13], 16
    %1284 = vst [vmem:[%s1283] sm:$0xff] %v1280
    %1285 = vmatprep.subr.mxu0 %v105
    %1286 = vmatpush1.msra.mxu0 %v104
    %1287 = vmatprep.subr.mxu0 %v107
    %1288 = vmatpush1.msra.mxu0 %v106
    %1289 = vmatprep.subr.mxu0 %v109
    %1290 = vmatpush1.msra.mxu0 %v108
    %1291 = vmatprep.subr.mxu0 %v111
    %1292 = vmatpush1.msra.mxu0 %v110
    %1293 = vmatprep.subr.mxu0 0.0
    %1294 = vmatpush1.msra.mxu0 0.0
    %1295 = vmatprep.subr.mxu0 0.0
    %1296 = vmatpush1.msra.mxu0 0.0
    %1297 = vmatprep.subr.mxu0 0.0
    %1298 = vmatpush1.msra.mxu0 0.0
    %1299 = vmatprep.subr.mxu0 0.0
    %1300 = vmatpush1.msra.mxu0 0.0
    %1301 = vmatprep.subr.mxu0 0.0
    %1302 = vmatpush1.msra.mxu0 0.0
    %1303 = vmatprep.subr.mxu0 0.0
    %1304 = vmatpush1.msra.mxu0 0.0
    %1305 = vmatprep.subr.mxu0 0.0
    %1306 = vmatpush1.msra.mxu0 0.0
    %1307 = vmatprep.subr.mxu0 0.0
    %1308 = vmatpush1.msra.mxu0 0.0
    %1309 = vmatprep.subr.mxu0 0.0
    %1310 = vmatpush1.msra.mxu0 0.0
    %1311 = vmatprep.subr.mxu0 0.0
    %1312 = vmatpush1.msra.mxu0 0.0
    %1313 = vmatprep.subr.mxu0 0.0
    %1314 = vmatpush1.msra.mxu0 0.0
    %1315 = vmatprep.subr.mxu0 0.0
    %1316 = vmatpush1.msra.mxu0 0.0
    %1317 = vmatprep.subr.mxu0 0.0
    %1318 = vmatpush1.msra.mxu0 0.0
    %1319 = vmatprep.subr.mxu0 0.0
    %1320 = vmatpush1.msra.mxu0 0.0
    %1321 = vmatprep.subr.mxu0 0.0
    %1322 = vmatpush1.msra.mxu0 0.0
    %1323 = vmatprep.subr.mxu0 0.0
    %1324 = vmatpush1.msra.mxu0 0.0
    %1325 = vmatprep.subr.mxu0 0.0
    %1326 = vmatpush1.msra.mxu0 0.0
    %1327 = vmatprep.subr.mxu0 0.0
    %1328 = vmatpush1.msra.mxu0 0.0
    %1329 = vmatprep.subr.mxu0 0.0
    %1330 = vmatpush1.msra.mxu0 0.0
    %1331 = vmatprep.subr.mxu0 0.0
    %1332 = vmatpush1.msra.mxu0 0.0
    %1333 = vmatprep.subr.mxu0 0.0
    %1334 = vmatpush1.msra.mxu0 0.0
    %1335 = vmatprep.subr.mxu0 0.0
    %1336 = vmatpush1.msra.mxu0 0.0
    %1337 = vmatprep.subr.mxu0 0.0
    %1338 = vmatpush1.msra.mxu0 0.0
    %1339 = vmatprep.subr.mxu0 0.0
    %1340 = vmatpush1.msra.mxu0 0.0
    %1341 = vmatprep.subr.mxu0 0.0
    %1342 = vmatpush1.msra.mxu0 0.0
    %1343 = vmatprep.subr.mxu0 0.0
    %1344 = vmatpush1.msra.mxu0 0.0
    %1345 = vmatprep.subr.mxu0 0.0
    %1346 = vmatpush1.msra.mxu0 0.0
    %1347 = vmatprep.subr.mxu0 0.0
    %1348 = vmatpush1.msra.mxu0 0.0
    %1349 = vmatprep.mubr.f32.mxu0 0.0
    %1350 = vmatmul.mubr.f32.gmra.mrb[0].mxu0 %v1211
    %v1351 = vpop.f32.mrb[0].mxu0
    %v1352 = vadd.f32 0.0, %v1351
    %v1353 = vpop.f32.mrb[0].mxu0
    %v1354 = vadd.f32 0.0, %v1353
    %1355 = vdwg.mxu0
    %v1356 = vadd.f32 %v1354, %v121
    %s1357 = sld [smem:[#allocation3 + $0x1]]
    %p1358 = scmp.eq.s32.totalorder %s1357, 1
    %s1359 = scalar_lea.vmem [#allocation7], 16
    %v1360 = vld [vmem:[%s1359] sm:$0xff]
    %s1361 = scalar_select %p1358, 1, 0
    %v1362 = vstv %s1361
    %vm1363 = vcmp.eq.s32.totalorder %v1362, 1
    %v1364 = vsel %vm1363, %v1360, %v1356
    %v1365 = vadd.f32 %v1352, %v1364
    %v1366 = vmul.f32 %v1365, 0.5
    %v1367 = vtanh.pop %v1366
    %v1368 = vadd.f32 %v1367, 1.0
    %v1369 = vmul.f32 %v1368, 0.5
    %v1370 = vtanh.pop %v1365
    %v1371 = vmul.f32 %v1369, %v1201
    %1373 = vrot.lane.b32.xlu0 %v1370, 64
    %v1374 = vpop.permute.xlu0 %1373
    %v1376 = vmul.f32 %v1369, %v1374
    %1378 = vrot.lane.b32.xlu0 %v1376, 32
    %v1379 = vpop.permute.xlu0 %1378
    %v1381 = vadd.f32 %v1371, %v1379
    %v1382 = vtanh.pop %v1381
    %1384 = vrot.lane.b32.xlu0 %v1382, 64
    %v1385 = vpop.permute.xlu0 %1384
    %v1387 = vmul.f32 %v1369, %v1385
    %1389 = vrot.lane.b32.xlu0 %v1387, 32
    %v1390 = vpop.permute.xlu0 %1389
    %v1391 = vsel %vm131, %v1390, 0
    %1393 = vmatprep.subr.mxu0 0.0
    %1394 = vmatpush1.msra.mxu0 %v112
    %1395 = vmatprep.subr.mxu0 0.0
    %1396 = vmatpush1.msra.mxu0 %v113
    %1397 = vmatprep.subr.mxu0 0.0
    %1398 = vmatpush1.msra.mxu0 %v114
    %1399 = vmatprep.subr.mxu0 0.0
    %1400 = vmatpush1.msra.mxu0 %v115
    %1401 = vmatprep.subr.mxu0 0.0
    %1402 = vmatpush1.msra.mxu0 0.0
    %1403 = vmatprep.subr.mxu0 0.0
    %1404 = vmatpush1.msra.mxu0 0.0
    %1405 = vmatprep.subr.mxu0 0.0
    %1406 = vmatpush1.msra.mxu0 0.0
    %1407 = vmatprep.subr.mxu0 0.0
    %1408 = vmatpush1.msra.mxu0 0.0
    %1409 = vmatprep.subr.mxu0 0.0
    %1410 = vmatpush1.msra.mxu0 0.0
    %1411 = vmatprep.subr.mxu0 0.0
    %1412 = vmatpush1.msra.mxu0 0.0
    %1413 = vmatprep.subr.mxu0 0.0
    %1414 = vmatpush1.msra.mxu0 0.0
    %1415 = vmatprep.subr.mxu0 0.0
    %1416 = vmatpush1.msra.mxu0 0.0
    %1417 = vmatprep.subr.mxu0 0.0
    %1418 = vmatpush1.msra.mxu0 0.0
    %1419 = vmatprep.subr.mxu0 0.0
    %1420 = vmatpush1.msra.mxu0 0.0
    %1421 = vmatprep.subr.mxu0 0.0
    %1422 = vmatpush1.msra.mxu0 0.0
    %1423 = vmatprep.subr.mxu0 0.0
    %1424 = vmatpush1.msra.mxu0 0.0
    %1425 = vmatprep.subr.mxu0 0.0
    %1426 = vmatpush1.msra.mxu0 0.0
    %1427 = vmatprep.subr.mxu0 0.0
    %1428 = vmatpush1.msra.mxu0 0.0
    %1429 = vmatprep.subr.mxu0 0.0
    %1430 = vmatpush1.msra.mxu0 0.0
    %1431 = vmatprep.subr.mxu0 0.0
    %1432 = vmatpush1.msra.mxu0 0.0
    %1433 = vmatprep.subr.mxu0 0.0
    %1434 = vmatpush1.msra.mxu0 0.0
    %1435 = vmatprep.subr.mxu0 0.0
    %1436 = vmatpush1.msra.mxu0 0.0
    %1437 = vmatprep.subr.mxu0 0.0
    %1438 = vmatpush1.msra.mxu0 0.0
    %1439 = vmatprep.subr.mxu0 0.0
    %1440 = vmatpush1.msra.mxu0 0.0
    %1441 = vmatprep.subr.mxu0 0.0
    %1442 = vmatpush1.msra.mxu0 0.0
    %1443 = vmatprep.subr.mxu0 0.0
    %1444 = vmatpush1.msra.mxu0 0.0
    %1445 = vmatprep.subr.mxu0 0.0
    %1446 = vmatpush1.msra.mxu0 0.0
    %1447 = vmatprep.subr.mxu0 0.0
    %1448 = vmatpush1.msra.mxu0 0.0
    %1449 = vmatprep.subr.mxu0 0.0
    %1450 = vmatpush1.msra.mxu0 0.0
    %1451 = vmatprep.subr.mxu0 0.0
    %1452 = vmatpush1.msra.mxu0 0.0
    %1453 = vmatprep.subr.mxu0 0.0
    %1454 = vmatpush1.msra.mxu0 0.0
    %1455 = vmatprep.subr.mxu0 0.0
    %1456 = vmatpush1.msra.mxu0 0.0
    %1457 = vmatprep.mubr.f32.mxu0 0.0
    %1458 = vmatmul.mubr.f32.gmra.mrb[0].mxu0 %v1391
    %v1459 = vpop.f32.mrb[0].mxu0
    %v1460 = vadd.f32 %v128, %v1459
    %v1461 = vpop.f32.mrb[0].mxu0
    %1462 = vdwg.mxu0
    %s1463 = scalar_lea.vmem [#allocation13], 24
    %1464 = vst [vmem:[%s1463] sm:$0xff] %v1460
    %1465 = vmatprep.subr.mxu0 %v105
    %1466 = vmatpush1.msra.mxu0 %v104
    %1467 = vmatprep.subr.mxu0 %v107
    %1468 = vmatpush1.msra.mxu0 %v106
    %1469 = vmatprep.subr.mxu0 %v109
    %1470 = vmatpush1.msra.mxu0 %v108
    %1471 = vmatprep.subr.mxu0 %v111
    %1472 = vmatpush1.msra.mxu0 %v110
    %1473 = vmatprep.subr.mxu0 0.0
    %1474 = vmatpush1.msra.mxu0 0.0
    %1475 = vmatprep.subr.mxu0 0.0
    %1476 = vmatpush1.msra.mxu0 0.0
    %1477 = vmatprep.subr.mxu0 0.0
    %1478 = vmatpush1.msra.mxu0 0.0
    %1479 = vmatprep.subr.mxu0 0.0
    %1480 = vmatpush1.msra.mxu0 0.0
    %1481 = vmatprep.subr.mxu0 0.0
    %1482 = vmatpush1.msra.mxu0 0.0
    %1483 = vmatprep.subr.mxu0 0.0
    %1484 = vmatpush1.msra.mxu0 0.0
    %1485 = vmatprep.subr.mxu0 0.0
    %1486 = vmatpush1.msra.mxu0 0.0
    %1487 = vmatprep.subr.mxu0 0.0
    %1488 = vmatpush1.msra.mxu0 0.0
    %1489 = vmatprep.subr.mxu0 0.0
    %1490 = vmatpush1.msra.mxu0 0.0
    %1491 = vmatprep.subr.mxu0 0.0
    %1492 = vmatpush1.msra.mxu0 0.0
    %1493 = vmatprep.subr.mxu0 0.0
    %1494 = vmatpush1.msra.mxu0 0.0
    %1495 = vmatprep.subr.mxu0 0.0
    %1496 = vmatpush1.msra.mxu0 0.0
    %1497 = vmatprep.subr.mxu0 0.0
    %1498 = vmatpush1.msra.mxu0 0.0
    %1499 = vmatprep.subr.mxu0 0.0
    %1500 = vmatpush1.msra.mxu0 0.0
    %1501 = vmatprep.subr.mxu0 0.0
    %1502 = vmatpush1.msra.mxu0 0.0
    %1503 = vmatprep.subr.mxu0 0.0
    %1504 = vmatpush1.msra.mxu0 0.0
    %1505 = vmatprep.subr.mxu0 0.0
    %1506 = vmatpush1.msra.mxu0 0.0
    %1507 = vmatprep.subr.mxu0 0.0
    %1508 = vmatpush1.msra.mxu0 0.0
    %1509 = vmatprep.subr.mxu0 0.0
    %1510 = vmatpush1.msra.mxu0 0.0
    %1511 = vmatprep.subr.mxu0 0.0
    %1512 = vmatpush1.msra.mxu0 0.0
    %1513 = vmatprep.subr.mxu0 0.0
    %1514 = vmatpush1.msra.mxu0 0.0
    %1515 = vmatprep.subr.mxu0 0.0
    %1516 = vmatpush1.msra.mxu0 0.0
    %1517 = vmatprep.subr.mxu0 0.0
    %1518 = vmatpush1.msra.mxu0 0.0
    %1519 = vmatprep.subr.mxu0 0.0
    %1520 = vmatpush1.msra.mxu0 0.0
    %1521 = vmatprep.subr.mxu0 0.0
    %1522 = vmatpush1.msra.mxu0 0.0
    %1523 = vmatprep.subr.mxu0 0.0
    %1524 = vmatpush1.msra.mxu0 0.0
    %1525 = vmatprep.subr.mxu0 0.0
    %1526 = vmatpush1.msra.mxu0 0.0
    %1527 = vmatprep.subr.mxu0 0.0
    %1528 = vmatpush1.msra.mxu0 0.0
    %1529 = vmatprep.mubr.f32.mxu0 0.0
    %1530 = vmatmul.mubr.f32.gmra.mrb[0].mxu0 %v1391
    %v1531 = vpop.f32.mrb[0].mxu0
    %v1532 = vadd.f32 0.0, %v1531
    %v1533 = vpop.f32.mrb[0].mxu0
    %v1534 = vadd.f32 0.0, %v1533
    %1535 = vdwg.mxu0
    %v1536 = vadd.f32 %v1534, %v121
    %s1537 = sld [smem:[#allocation3 + $0x2]]
    %p1538 = scmp.eq.s32.totalorder %s1537, 1
    %s1539 = scalar_lea.vmem [#allocation7], 24
    %v1540 = vld [vmem:[%s1539] sm:$0xff]
    %s1541 = scalar_select %p1538, 1, 0
    %v1542 = vstv %s1541
    %vm1543 = vcmp.eq.s32.totalorder %v1542, 1
    %v1544 = vsel %vm1543, %v1540, %v1536
    %v1545 = vadd.f32 %v1532, %v1544
    %v1546 = vmul.f32 %v1545, 0.5
    %v1547 = vtanh.pop %v1546
    %v1548 = vadd.f32 %v1547, 1.0
    %v1549 = vmul.f32 %v1548, 0.5
    %v1550 = vtanh.pop %v1545
    %v1551 = vmul.f32 %v1549, %v1381
    %1553 = vrot.lane.b32.xlu0 %v1550, 64
    %v1554 = vpop.permute.xlu0 %1553
    %v1556 = vmul.f32 %v1549, %v1554
    %1558 = vrot.lane.b32.xlu0 %v1556, 32
    %v1559 = vpop.permute.xlu0 %1558
    %v1561 = vadd.f32 %v1551, %v1559
    %v1562 = vtanh.pop %v1561
    %1564 = vrot.lane.b32.xlu0 %v1562, 64
    %v1565 = vpop.permute.xlu0 %1564
    %v1567 = vmul.f32 %v1549, %v1565
    %1569 = vrot.lane.b32.xlu0 %v1567, 32
    %v1570 = vpop.permute.xlu0 %1569
    %v1571 = vsel %vm131, %v1570, 0
    %1573 = vmatprep.subr.mxu0 0.0
    %1574 = vmatpush1.msra.mxu0 %v112
    %1575 = vmatprep.subr.mxu0 0.0
    %1576 = vmatpush1.msra.mxu0 %v113
    %1577 = vmatprep.subr.mxu0 0.0
    %1578 = vmatpush1.msra.mxu0 %v114
    %1579 = vmatprep.subr.mxu0 0.0
    %1580 = vmatpush1.msra.mxu0 %v115
    %1581 = vmatprep.subr.mxu0 0.0
    %1582 = vmatpush1.msra.mxu0 0.0
    %1583 = vmatprep.subr.mxu0 0.0
    %1584 = vmatpush1.msra.mxu0 0.0
    %1585 = vmatprep.subr.mxu0 0.0
    %1586 = vmatpush1.msra.mxu0 0.0
    %1587 = vmatprep.subr.mxu0 0.0
    %1588 = vmatpush1.msra.mxu0 0.0
    %1589 = vmatprep.subr.mxu0 0.0
    %1590 = vmatpush1.msra.mxu0 0.0
    %1591 = vmatprep.subr.mxu0 0.0
    %1592 = vmatpush1.msra.mxu0 0.0
    %1593 = vmatprep.subr.mxu0 0.0
    %1594 = vmatpush1.msra.mxu0 0.0
    %1595 = vmatprep.subr.mxu0 0.0
    %1596 = vmatpush1.msra.mxu0 0.0
    %1597 = vmatprep.subr.mxu0 0.0
    %1598 = vmatpush1.msra.mxu0 0.0
    %1599 = vmatprep.subr.mxu0 0.0
    %1600 = vmatpush1.msra.mxu0 0.0
    %1601 = vmatprep.subr.mxu0 0.0
    %1602 = vmatpush1.msra.mxu0 0.0
    %1603 = vmatprep.subr.mxu0 0.0
    %1604 = vmatpush1.msra.mxu0 0.0
    %1605 = vmatprep.subr.mxu0 0.0
    %1606 = vmatpush1.msra.mxu0 0.0
    %1607 = vmatprep.subr.mxu0 0.0
    %1608 = vmatpush1.msra.mxu0 0.0
    %1609 = vmatprep.subr.mxu0 0.0
    %1610 = vmatpush1.msra.mxu0 0.0
    %1611 = vmatprep.subr.mxu0 0.0
    %1612 = vmatpush1.msra.mxu0 0.0
    %1613 = vmatprep.subr.mxu0 0.0
    %1614 = vmatpush1.msra.mxu0 0.0
    %1615 = vmatprep.subr.mxu0 0.0
    %1616 = vmatpush1.msra.mxu0 0.0
    %1617 = vmatprep.subr.mxu0 0.0
    %1618 = vmatpush1.msra.mxu0 0.0
    %1619 = vmatprep.subr.mxu0 0.0
    %1620 = vmatpush1.msra.mxu0 0.0
    %1621 = vmatprep.subr.mxu0 0.0
    %1622 = vmatpush1.msra.mxu0 0.0
    %1623 = vmatprep.subr.mxu0 0.0
    %1624 = vmatpush1.msra.mxu0 0.0
    %1625 = vmatprep.subr.mxu0 0.0
    %1626 = vmatpush1.msra.mxu0 0.0
    %1627 = vmatprep.subr.mxu0 0.0
    %1628 = vmatpush1.msra.mxu0 0.0
    %1629 = vmatprep.subr.mxu0 0.0
    %1630 = vmatpush1.msra.mxu0 0.0
    %1631 = vmatprep.subr.mxu0 0.0
    %1632 = vmatpush1.msra.mxu0 0.0
    %1633 = vmatprep.subr.mxu0 0.0
    %1634 = vmatpush1.msra.mxu0 0.0
    %1635 = vmatprep.subr.mxu0 0.0
    %1636 = vmatpush1.msra.mxu0 0.0
    %1637 = vmatprep.mubr.f32.mxu0 0.0
    %1638 = vmatmul.mubr.f32.gmra.mrb[0].mxu0 %v1571
    %v1639 = vpop.f32.mrb[0].mxu0
    %v1640 = vadd.f32 %v128, %v1639
    %v1641 = vpop.f32.mrb[0].mxu0
    %1642 = vdwg.mxu0
    %s1643 = scalar_lea.vmem [#allocation13], 32
    %1644 = vst [vmem:[%s1643] sm:$0xff] %v1640
    %1645 = vmatprep.subr.mxu0 %v105
    %1646 = vmatpush1.msra.mxu0 %v104
    %1647 = vmatprep.subr.mxu0 %v107
    %1648 = vmatpush1.msra.mxu0 %v106
    %1649 = vmatprep.subr.mxu0 %v109
    %1650 = vmatpush1.msra.mxu0 %v108
    %1651 = vmatprep.subr.mxu0 %v111
    %1652 = vmatpush1.msra.mxu0 %v110
    %1653 = vmatprep.subr.mxu0 0.0
    %1654 = vmatpush1.msra.mxu0 0.0
    %1655 = vmatprep.subr.mxu0 0.0
    %1656 = vmatpush1.msra.mxu0 0.0
    %1657 = vmatprep.subr.mxu0 0.0
    %1658 = vmatpush1.msra.mxu0 0.0
    %1659 = vmatprep.subr.mxu0 0.0
    %1660 = vmatpush1.msra.mxu0 0.0
    %1661 = vmatprep.subr.mxu0 0.0
    %1662 = vmatpush1.msra.mxu0 0.0
    %1663 = vmatprep.subr.mxu0 0.0
    %1664 = vmatpush1.msra.mxu0 0.0
    %1665 = vmatprep.subr.mxu0 0.0
    %1666 = vmatpush1.msra.mxu0 0.0
    %1667 = vmatprep.subr.mxu0 0.0
    %1668 = vmatpush1.msra.mxu0 0.0
    %1669 = vmatprep.subr.mxu0 0.0
    %1670 = vmatpush1.msra.mxu0 0.0
    %1671 = vmatprep.subr.mxu0 0.0
    %1672 = vmatpush1.msra.mxu0 0.0
    %1673 = vmatprep.subr.mxu0 0.0
    %1674 = vmatpush1.msra.mxu0 0.0
    %1675 = vmatprep.subr.mxu0 0.0
    %1676 = vmatpush1.msra.mxu0 0.0
    %1677 = vmatprep.subr.mxu0 0.0
    %1678 = vmatpush1.msra.mxu0 0.0
    %1679 = vmatprep.subr.mxu0 0.0
    %1680 = vmatpush1.msra.mxu0 0.0
    %1681 = vmatprep.subr.mxu0 0.0
    %1682 = vmatpush1.msra.mxu0 0.0
    %1683 = vmatprep.subr.mxu0 0.0
    %1684 = vmatpush1.msra.mxu0 0.0
    %1685 = vmatprep.subr.mxu0 0.0
    %1686 = vmatpush1.msra.mxu0 0.0
    %1687 = vmatprep.subr.mxu0 0.0
    %1688 = vmatpush1.msra.mxu0 0.0
    %1689 = vmatprep.subr.mxu0 0.0
    %1690 = vmatpush1.msra.mxu0 0.0
    %1691 = vmatprep.subr.mxu0 0.0
    %1692 = vmatpush1.msra.mxu0 0.0
    %1693 = vmatprep.subr.mxu0 0.0
    %1694 = vmatpush1.msra.mxu0 0.0
    %1695 = vmatprep.subr.mxu0 0.0
    %1696 = vmatpush1.msra.mxu0 0.0
    %1697 = vmatprep.subr.mxu0 0.0
    %1698 = vmatpush1.msra.mxu0 0.0
    %1699 = vmatprep.subr.mxu0 0.0
    %1700 = vmatpush1.msra.mxu0 0.0
    %1701 = vmatprep.subr.mxu0 0.0
    %1702 = vmatpush1.msra.mxu0 0.0
    %1703 = vmatprep.subr.mxu0 0.0
    %1704 = vmatpush1.msra.mxu0 0.0
    %1705 = vmatprep.subr.mxu0 0.0
    %1706 = vmatpush1.msra.mxu0 0.0
    %1707 = vmatprep.subr.mxu0 0.0
    %1708 = vmatpush1.msra.mxu0 0.0
    %1709 = vmatprep.mubr.f32.mxu0 0.0
    %1710 = vmatmul.mubr.f32.gmra.mrb[0].mxu0 %v1571
    %v1711 = vpop.f32.mrb[0].mxu0
    %v1712 = vadd.f32 0.0, %v1711
    %v1713 = vpop.f32.mrb[0].mxu0
    %v1714 = vadd.f32 0.0, %v1713
    %1715 = vdwg.mxu0
    %v1716 = vadd.f32 %v1714, %v121
    %s1717 = sld [smem:[#allocation3 + $0x3]]
    %p1718 = scmp.eq.s32.totalorder %s1717, 1
    %s1719 = scalar_lea.vmem [#allocation7], 32
    %v1720 = vld [vmem:[%s1719] sm:$0xff]
    %s1721 = scalar_select %p1718, 1, 0
    %v1722 = vstv %s1721
    %vm1723 = vcmp.eq.s32.totalorder %v1722, 1
    %v1724 = vsel %vm1723, %v1720, %v1716
    %v1725 = vadd.f32 %v1712, %v1724
    %v1726 = vmul.f32 %v1725, 0.5
    %v1727 = vtanh.pop %v1726
    %v1728 = vadd.f32 %v1727, 1.0
    %v1729 = vmul.f32 %v1728, 0.5
    %v1730 = vtanh.pop %v1725
    %v1731 = vmul.f32 %v1729, %v1561
    %1733 = vrot.lane.b32.xlu0 %v1730, 64
    %v1734 = vpop.permute.xlu0 %1733
    %v1736 = vmul.f32 %v1729, %v1734
    %1738 = vrot.lane.b32.xlu0 %v1736, 32
    %v1739 = vpop.permute.xlu0 %1738
    %v1741 = vadd.f32 %v1731, %v1739
    %v1742 = vtanh.pop %v1741
    %1744 = vrot.lane.b32.xlu0 %v1742, 64
    %v1745 = vpop.permute.xlu0 %1744
    %v1747 = vmul.f32 %v1729, %v1745
    %1749 = vrot.lane.b32.xlu0 %v1747, 32
    %v1750 = vpop.permute.xlu0 %1749
    %v1751 = vsel %vm131, %v1750, 0
    %1753 = vmatprep.subr.mxu0 0.0
    %1754 = vmatpush1.msra.mxu0 %v112
    %1755 = vmatprep.subr.mxu0 0.0
    %1756 = vmatpush1.msra.mxu0 %v113
    %1757 = vmatprep.subr.mxu0 0.0
    %1758 = vmatpush1.msra.mxu0 %v114
    %1759 = vmatprep.subr.mxu0 0.0
    %1760 = vmatpush1.msra.mxu0 %v115
    %1761 = vmatprep.subr.mxu0 0.0
    %1762 = vmatpush1.msra.mxu0 0.0
    %1763 = vmatprep.subr.mxu0 0.0
    %1764 = vmatpush1.msra.mxu0 0.0
    %1765 = vmatprep.subr.mxu0 0.0
    %1766 = vmatpush1.msra.mxu0 0.0
    %1767 = vmatprep.subr.mxu0 0.0
    %1768 = vmatpush1.msra.mxu0 0.0
    %1769 = vmatprep.subr.mxu0 0.0
    %1770 = vmatpush1.msra.mxu0 0.0
    %1771 = vmatprep.subr.mxu0 0.0
    %1772 = vmatpush1.msra.mxu0 0.0
    %1773 = vmatprep.subr.mxu0 0.0
    %1774 = vmatpush1.msra.mxu0 0.0
    %1775 = vmatprep.subr.mxu0 0.0
    %1776 = vmatpush1.msra.mxu0 0.0
    %1777 = vmatprep.subr.mxu0 0.0
    %1778 = vmatpush1.msra.mxu0 0.0
    %1779 = vmatprep.subr.mxu0 0.0
    %1780 = vmatpush1.msra.mxu0 0.0
    %1781 = vmatprep.subr.mxu0 0.0
    %1782 = vmatpush1.msra.mxu0 0.0
    %1783 = vmatprep.subr.mxu0 0.0
    %1784 = vmatpush1.msra.mxu0 0.0
    %1785 = vmatprep.subr.mxu0 0.0
    %1786 = vmatpush1.msra.mxu0 0.0
    %1787 = vmatprep.subr.mxu0 0.0
    %1788 = vmatpush1.msra.mxu0 0.0
    %1789 = vmatprep.subr.mxu0 0.0
    %1790 = vmatpush1.msra.mxu0 0.0
    %1791 = vmatprep.subr.mxu0 0.0
    %1792 = vmatpush1.msra.mxu0 0.0
    %1793 = vmatprep.subr.mxu0 0.0
    %1794 = vmatpush1.msra.mxu0 0.0
    %1795 = vmatprep.subr.mxu0 0.0
    %1796 = vmatpush1.msra.mxu0 0.0
    %1797 = vmatprep.subr.mxu0 0.0
    %1798 = vmatpush1.msra.mxu0 0.0
    %1799 = vmatprep.subr.mxu0 0.0
    %1800 = vmatpush1.msra.mxu0 0.0
    %1801 = vmatprep.subr.mxu0 0.0
    %1802 = vmatpush1.msra.mxu0 0.0
    %1803 = vmatprep.subr.mxu0 0.0
    %1804 = vmatpush1.msra.mxu0 0.0
    %1805 = vmatprep.subr.mxu0 0.0
    %1806 = vmatpush1.msra.mxu0 0.0
    %1807 = vmatprep.subr.mxu0 0.0
    %1808 = vmatpush1.msra.mxu0 0.0
    %1809 = vmatprep.subr.mxu0 0.0
    %1810 = vmatpush1.msra.mxu0 0.0
    %1811 = vmatprep.subr.mxu0 0.0
    %1812 = vmatpush1.msra.mxu0 0.0
    %1813 = vmatprep.subr.mxu0 0.0
    %1814 = vmatpush1.msra.mxu0 0.0
    %1815 = vmatprep.subr.mxu0 0.0
    %1816 = vmatpush1.msra.mxu0 0.0
    %1817 = vmatprep.mubr.f32.mxu0 0.0
    %1818 = vmatmul.mubr.f32.gmra.mrb[0].mxu0 %v1751
    %v1819 = vpop.f32.mrb[0].mxu0
    %v1820 = vadd.f32 %v128, %v1819
    %v1821 = vpop.f32.mrb[0].mxu0
    %1822 = vdwg.mxu0
    %s1823 = scalar_lea.vmem [#allocation13], 40
    %1824 = vst [vmem:[%s1823] sm:$0xff] %v1820
    %1825 = vmatprep.subr.mxu0 %v105
    %1826 = vmatpush1.msra.mxu0 %v104
    %1827 = vmatprep.subr.mxu0 %v107
    %1828 = vmatpush1.msra.mxu0 %v106
    %1829 = vmatprep.subr.mxu0 %v109
    %1830 = vmatpush1.msra.mxu0 %v108
    %1831 = vmatprep.subr.mxu0 %v111
    %1832 = vmatpush1.msra.mxu0 %v110
    %1833 = vmatprep.subr.mxu0 0.0
    %1834 = vmatpush1.msra.mxu0 0.0
    %1835 = vmatprep.subr.mxu0 0.0
    %1836 = vmatpush1.msra.mxu0 0.0
    %1837 = vmatprep.subr.mxu0 0.0
    %1838 = vmatpush1.msra.mxu0 0.0
    %1839 = vmatprep.subr.mxu0 0.0
    %1840 = vmatpush1.msra.mxu0 0.0
    %1841 = vmatprep.subr.mxu0 0.0
    %1842 = vmatpush1.msra.mxu0 0.0
    %1843 = vmatprep.subr.mxu0 0.0
    %1844 = vmatpush1.msra.mxu0 0.0
    %1845 = vmatprep.subr.mxu0 0.0
    %1846 = vmatpush1.msra.mxu0 0.0
    %1847 = vmatprep.subr.mxu0 0.0
    %1848 = vmatpush1.msra.mxu0 0.0
    %1849 = vmatprep.subr.mxu0 0.0
    %1850 = vmatpush1.msra.mxu0 0.0
    %1851 = vmatprep.subr.mxu0 0.0
    %1852 = vmatpush1.msra.mxu0 0.0
    %1853 = vmatprep.subr.mxu0 0.0
    %1854 = vmatpush1.msra.mxu0 0.0
    %1855 = vmatprep.subr.mxu0 0.0
    %1856 = vmatpush1.msra.mxu0 0.0
    %1857 = vmatprep.subr.mxu0 0.0
    %1858 = vmatpush1.msra.mxu0 0.0
    %1859 = vmatprep.subr.mxu0 0.0
    %1860 = vmatpush1.msra.mxu0 0.0
    %1861 = vmatprep.subr.mxu0 0.0
    %1862 = vmatpush1.msra.mxu0 0.0
    %1863 = vmatprep.subr.mxu0 0.0
    %1864 = vmatpush1.msra.mxu0 0.0
    %1865 = vmatprep.subr.mxu0 0.0
    %1866 = vmatpush1.msra.mxu0 0.0
    %1867 = vmatprep.subr.mxu0 0.0
    %1868 = vmatpush1.msra.mxu0 0.0
    %1869 = vmatprep.subr.mxu0 0.0
    %1870 = vmatpush1.msra.mxu0 0.0
    %1871 = vmatprep.subr.mxu0 0.0
    %1872 = vmatpush1.msra.mxu0 0.0
    %1873 = vmatprep.subr.mxu0 0.0
    %1874 = vmatpush1.msra.mxu0 0.0
    %1875 = vmatprep.subr.mxu0 0.0
    %1876 = vmatpush1.msra.mxu0 0.0
    %1877 = vmatprep.subr.mxu0 0.0
    %1878 = vmatpush1.msra.mxu0 0.0
    %1879 = vmatprep.subr.mxu0 0.0
    %1880 = vmatpush1.msra.mxu0 0.0
    %1881 = vmatprep.subr.mxu0 0.0
    %1882 = vmatpush1.msra.mxu0 0.0
    %1883 = vmatprep.subr.mxu0 0.0
    %1884 = vmatpush1.msra.mxu0 0.0
    %1885 = vmatprep.subr.mxu0 0.0
    %1886 = vmatpush1.msra.mxu0 0.0
    %1887 = vmatprep.subr.mxu0 0.0
    %1888 = vmatpush1.msra.mxu0 0.0
    %1889 = vmatprep.mubr.f32.mxu0 0.0
    %1890 = vmatmul.mubr.f32.gmra.mrb[0].mxu0 %v1751
    %v1891 = vpop.f32.mrb[0].mxu0
    %v1892 = vadd.f32 0.0, %v1891
    %v1893 = vpop.f32.mrb[0].mxu0
    %v1894 = vadd.f32 0.0, %v1893
    %1895 = vdwg.mxu0
    %v1896 = vadd.f32 %v1894, %v121
    %s1897 = sld [smem:[#allocation3 + $0x4]]
    %p1898 = scmp.eq.s32.totalorder %s1897, 1
    %s1899 = scalar_lea.vmem [#allocation7], 40
    %v1900 = vld [vmem:[%s1899] sm:$0xff]
    %s1901 = scalar_select %p1898, 1, 0
    %v1902 = vstv %s1901
    %vm1903 = vcmp.eq.s32.totalorder %v1902, 1
    %v1904 = vsel %vm1903, %v1900, %v1896
    %v1905 = vadd.f32 %v1892, %v1904
    %v1906 = vmul.f32 %v1905, 0.5
    %v1907 = vtanh.pop %v1906
    %v1908 = vadd.f32 %v1907, 1.0
    %v1909 = vmul.f32 %v1908, 0.5
    %v1910 = vtanh.pop %v1905
    %v1911 = vmul.f32 %v1909, %v1741
    %1913 = vrot.lane.b32.xlu0 %v1910, 64
    %v1914 = vpop.permute.xlu0 %1913
    %v1916 = vmul.f32 %v1909, %v1914
    %1918 = vrot.lane.b32.xlu0 %v1916, 32
    %v1919 = vpop.permute.xlu0 %1918
    %v1921 = vadd.f32 %v1911, %v1919
    %v1922 = vtanh.pop %v1921
    %1924 = vrot.lane.b32.xlu0 %v1922, 64
    %v1925 = vpop.permute.xlu0 %1924
    %v1927 = vmul.f32 %v1909, %v1925
    %1929 = vrot.lane.b32.xlu0 %v1927, 32
    %v1930 = vpop.permute.xlu0 %1929
    %v1931 = vsel %vm131, %v1930, 0
    %1933 = vmatprep.subr.mxu0 0.0
    %1934 = vmatpush1.msra.mxu0 %v112
    %1935 = vmatprep.subr.mxu0 0.0
    %1936 = vmatpush1.msra.mxu0 %v113
    %1937 = vmatprep.subr.mxu0 0.0
    %1938 = vmatpush1.msra.mxu0 %v114
    %1939 = vmatprep.subr.mxu0 0.0
    %1940 = vmatpush1.msra.mxu0 %v115
    %1941 = vmatprep.subr.mxu0 0.0
    %1942 = vmatpush1.msra.mxu0 0.0
    %1943 = vmatprep.subr.mxu0 0.0
    %1944 = vmatpush1.msra.mxu0 0.0
    %1945 = vmatprep.subr.mxu0 0.0
    %1946 = vmatpush1.msra.mxu0 0.0
    %1947 = vmatprep.subr.mxu0 0.0
    %1948 = vmatpush1.msra.mxu0 0.0
    %1949 = vmatprep.subr.mxu0 0.0
    %1950 = vmatpush1.msra.mxu0 0.0
    %1951 = vmatprep.subr.mxu0 0.0
    %1952 = vmatpush1.msra.mxu0 0.0
    %1953 = vmatprep.subr.mxu0 0.0
    %1954 = vmatpush1.msra.mxu0 0.0
    %1955 = vmatprep.subr.mxu0 0.0
    %1956 = vmatpush1.msra.mxu0 0.0
    %1957 = vmatprep.subr.mxu0 0.0
    %1958 = vmatpush1.msra.mxu0 0.0
    %1959 = vmatprep.subr.mxu0 0.0
    %1960 = vmatpush1.msra.mxu0 0.0
    %1961 = vmatprep.subr.mxu0 0.0
    %1962 = vmatpush1.msra.mxu0 0.0
    %1963 = vmatprep.subr.mxu0 0.0
    %1964 = vmatpush1.msra.mxu0 0.0
    %1965 = vmatprep.subr.mxu0 0.0
    %1966 = vmatpush1.msra.mxu0 0.0
    %1967 = vmatprep.subr.mxu0 0.0
    %1968 = vmatpush1.msra.mxu0 0.0
    %1969 = vmatprep.subr.mxu0 0.0
    %1970 = vmatpush1.msra.mxu0 0.0
    %1971 = vmatprep.subr.mxu0 0.0
    %1972 = vmatpush1.msra.mxu0 0.0
    %1973 = vmatprep.subr.mxu0 0.0
    %1974 = vmatpush1.msra.mxu0 0.0
    %1975 = vmatprep.subr.mxu0 0.0
    %1976 = vmatpush1.msra.mxu0 0.0
    %1977 = vmatprep.subr.mxu0 0.0
    %1978 = vmatpush1.msra.mxu0 0.0
    %1979 = vmatprep.subr.mxu0 0.0
    %1980 = vmatpush1.msra.mxu0 0.0
    %1981 = vmatprep.subr.mxu0 0.0
    %1982 = vmatpush1.msra.mxu0 0.0
    %1983 = vmatprep.subr.mxu0 0.0
    %1984 = vmatpush1.msra.mxu0 0.0
    %1985 = vmatprep.subr.mxu0 0.0
    %1986 = vmatpush1.msra.mxu0 0.0
    %1987 = vmatprep.subr.mxu0 0.0
    %1988 = vmatpush1.msra.mxu0 0.0
    %1989 = vmatprep.subr.mxu0 0.0
    %1990 = vmatpush1.msra.mxu0 0.0
    %1991 = vmatprep.subr.mxu0 0.0
    %1992 = vmatpush1.msra.mxu0 0.0
    %1993 = vmatprep.subr.mxu0 0.0
    %1994 = vmatpush1.msra.mxu0 0.0
    %1995 = vmatprep.subr.mxu0 0.0
    %1996 = vmatpush1.msra.mxu0 0.0
    %1997 = vmatprep.mubr.f32.mxu0 0.0
    %1998 = vmatmul.mubr.f32.gmra.mrb[0].mxu0 %v1931
    %v1999 = vpop.f32.mrb[0].mxu0
    %v2000 = vadd.f32 %v128, %v1999
    %v2001 = vpop.f32.mrb[0].mxu0
    %2002 = vdwg.mxu0
    %s2003 = scalar_lea.vmem [#allocation13], 48
    %2004 = vst [vmem:[%s2003] sm:$0xff] %v2000
    %2005 = vmatprep.subr.mxu0 %v105
    %2006 = vmatpush1.msra.mxu0 %v104
    %2007 = vmatprep.subr.mxu0 %v107
    %2008 = vmatpush1.msra.mxu0 %v106
    %2009 = vmatprep.subr.mxu0 %v109
    %2010 = vmatpush1.msra.mxu0 %v108
    %2011 = vmatprep.subr.mxu0 %v111
    %2012 = vmatpush1.msra.mxu0 %v110
    %2013 = vmatprep.subr.mxu0 0.0
    %2014 = vmatpush1.msra.mxu0 0.0
    %2015 = vmatprep.subr.mxu0 0.0
    %2016 = vmatpush1.msra.mxu0 0.0
    %2017 = vmatprep.subr.mxu0 0.0
    %2018 = vmatpush1.msra.mxu0 0.0
    %2019 = vmatprep.subr.mxu0 0.0
    %2020 = vmatpush1.msra.mxu0 0.0
    %2021 = vmatprep.subr.mxu0 0.0
    %2022 = vmatpush1.msra.mxu0 0.0
    %2023 = vmatprep.subr.mxu0 0.0
    %2024 = vmatpush1.msra.mxu0 0.0
    %2025 = vmatprep.subr.mxu0 0.0
    %2026 = vmatpush1.msra.mxu0 0.0
    %2027 = vmatprep.subr.mxu0 0.0
    %2028 = vmatpush1.msra.mxu0 0.0
    %2029 = vmatprep.subr.mxu0 0.0
    %2030 = vmatpush1.msra.mxu0 0.0
    %2031 = vmatprep.subr.mxu0 0.0
    %2032 = vmatpush1.msra.mxu0 0.0
    %2033 = vmatprep.subr.mxu0 0.0
    %2034 = vmatpush1.msra.mxu0 0.0
    %2035 = vmatprep.subr.mxu0 0.0
    %2036 = vmatpush1.msra.mxu0 0.0
    %2037 = vmatprep.subr.mxu0 0.0
    %2038 = vmatpush1.msra.mxu0 0.0
    %2039 = vmatprep.subr.mxu0 0.0
    %2040 = vmatpush1.msra.mxu0 0.0
    %2041 = vmatprep.subr.mxu0 0.0
    %2042 = vmatpush1.msra.mxu0 0.0
    %2043 = vmatprep.subr.mxu0 0.0
    %2044 = vmatpush1.msra.mxu0 0.0
    %2045 = vmatprep.subr.mxu0 0.0
    %2046 = vmatpush1.msra.mxu0 0.0
    %2047 = vmatprep.subr.mxu0 0.0
    %2048 = vmatpush1.msra.mxu0 0.0
    %2049 = vmatprep.subr.mxu0 0.0
    %2050 = vmatpush1.msra.mxu0 0.0
    %2051 = vmatprep.subr.mxu0 0.0
    %2052 = vmatpush1.msra.mxu0 0.0
    %2053 = vmatprep.subr.mxu0 0.0
    %2054 = vmatpush1.msra.mxu0 0.0
    %2055 = vmatprep.subr.mxu0 0.0
    %2056 = vmatpush1.msra.mxu0 0.0
    %2057 = vmatprep.subr.mxu0 0.0
    %2058 = vmatpush1.msra.mxu0 0.0
    %2059 = vmatprep.subr.mxu0 0.0
    %2060 = vmatpush1.msra.mxu0 0.0
    %2061 = vmatprep.subr.mxu0 0.0
    %2062 = vmatpush1.msra.mxu0 0.0
    %2063 = vmatprep.subr.mxu0 0.0
    %2064 = vmatpush1.msra.mxu0 0.0
    %2065 = vmatprep.subr.mxu0 0.0
    %2066 = vmatpush1.msra.mxu0 0.0
    %2067 = vmatprep.subr.mxu0 0.0
    %2068 = vmatpush1.msra.mxu0 0.0
    %2069 = vmatprep.mubr.f32.mxu0 0.0
    %2070 = vmatmul.mubr.f32.gmra.mrb[0].mxu0 %v1931
    %v2071 = vpop.f32.mrb[0].mxu0
    %v2072 = vadd.f32 0.0, %v2071
    %v2073 = vpop.f32.mrb[0].mxu0
    %v2074 = vadd.f32 0.0, %v2073
    %2075 = vdwg.mxu0
    %v2076 = vadd.f32 %v2074, %v121
    %s2077 = sld [smem:[#allocation3 + $0x5]]
    %p2078 = scmp.eq.s32.totalorder %s2077, 1
    %s2079 = scalar_lea.vmem [#allocation7], 48
    %v2080 = vld [vmem:[%s2079] sm:$0xff]
    %s2081 = scalar_select %p2078, 1, 0
    %v2082 = vstv %s2081
    %vm2083 = vcmp.eq.s32.totalorder %v2082, 1
    %v2084 = vsel %vm2083, %v2080, %v2076
    %v2085 = vadd.f32 %v2072, %v2084
    %v2086 = vmul.f32 %v2085, 0.5
    %v2087 = vtanh.pop %v2086
    %v2088 = vadd.f32 %v2087, 1.0
    %v2089 = vmul.f32 %v2088, 0.5
    %v2090 = vtanh.pop %v2085
    %v2091 = vmul.f32 %v2089, %v1921
    %2093 = vrot.lane.b32.xlu0 %v2090, 64
    %v2094 = vpop.permute.xlu0 %2093
    %v2096 = vmul.f32 %v2089, %v2094
    %2098 = vrot.lane.b32.xlu0 %v2096, 32
    %v2099 = vpop.permute.xlu0 %2098
    %v2101 = vadd.f32 %v2091, %v2099
    %v2102 = vtanh.pop %v2101
    %2104 = vrot.lane.b32.xlu0 %v2102, 64
    %v2105 = vpop.permute.xlu0 %2104
    %v2107 = vmul.f32 %v2089, %v2105
    %2109 = vrot.lane.b32.xlu0 %v2107, 32
    %v2110 = vpop.permute.xlu0 %2109
    %v2111 = vsel %vm131, %v2110, 0
    %2113 = vmatprep.subr.mxu0 0.0
    %2114 = vmatpush1.msra.mxu0 %v112
    %2115 = vmatprep.subr.mxu0 0.0
    %2116 = vmatpush1.msra.mxu0 %v113
    %2117 = vmatprep.subr.mxu0 0.0
    %2118 = vmatpush1.msra.mxu0 %v114
    %2119 = vmatprep.subr.mxu0 0.0
    %2120 = vmatpush1.msra.mxu0 %v115
    %2121 = vmatprep.subr.mxu0 0.0
    %2122 = vmatpush1.msra.mxu0 0.0
    %2123 = vmatprep.subr.mxu0 0.0
    %2124 = vmatpush1.msra.mxu0 0.0
    %2125 = vmatprep.subr.mxu0 0.0
    %2126 = vmatpush1.msra.mxu0 0.0
    %2127 = vmatprep.subr.mxu0 0.0
    %2128 = vmatpush1.msra.mxu0 0.0
    %2129 = vmatprep.subr.mxu0 0.0
    %2130 = vmatpush1.msra.mxu0 0.0
    %2131 = vmatprep.subr.mxu0 0.0
    %2132 = vmatpush1.msra.mxu0 0.0
    %2133 = vmatprep.subr.mxu0 0.0
    %2134 = vmatpush1.msra.mxu0 0.0
    %2135 = vmatprep.subr.mxu0 0.0
    %2136 = vmatpush1.msra.mxu0 0.0
    %2137 = vmatprep.subr.mxu0 0.0
    %2138 = vmatpush1.msra.mxu0 0.0
    %2139 = vmatprep.subr.mxu0 0.0
    %2140 = vmatpush1.msra.mxu0 0.0
    %2141 = vmatprep.subr.mxu0 0.0
    %2142 = vmatpush1.msra.mxu0 0.0
    %2143 = vmatprep.subr.mxu0 0.0
    %2144 = vmatpush1.msra.mxu0 0.0
    %2145 = vmatprep.subr.mxu0 0.0
    %2146 = vmatpush1.msra.mxu0 0.0
    %2147 = vmatprep.subr.mxu0 0.0
    %2148 = vmatpush1.msra.mxu0 0.0
    %2149 = vmatprep.subr.mxu0 0.0
    %2150 = vmatpush1.msra.mxu0 0.0
    %2151 = vmatprep.subr.mxu0 0.0
    %2152 = vmatpush1.msra.mxu0 0.0
    %2153 = vmatprep.subr.mxu0 0.0
    %2154 = vmatpush1.msra.mxu0 0.0
    %2155 = vmatprep.subr.mxu0 0.0
    %2156 = vmatpush1.msra.mxu0 0.0
    %2157 = vmatprep.subr.mxu0 0.0
    %2158 = vmatpush1.msra.mxu0 0.0
    %2159 = vmatprep.subr.mxu0 0.0
    %2160 = vmatpush1.msra.mxu0 0.0
    %2161 = vmatprep.subr.mxu0 0.0
    %2162 = vmatpush1.msra.mxu0 0.0
    %2163 = vmatprep.subr.mxu0 0.0
    %2164 = vmatpush1.msra.mxu0 0.0
    %2165 = vmatprep.subr.mxu0 0.0
    %2166 = vmatpush1.msra.mxu0 0.0
    %2167 = vmatprep.subr.mxu0 0.0
    %2168 = vmatpush1.msra.mxu0 0.0
    %2169 = vmatprep.subr.mxu0 0.0
    %2170 = vmatpush1.msra.mxu0 0.0
    %2171 = vmatprep.subr.mxu0 0.0
    %2172 = vmatpush1.msra.mxu0 0.0
    %2173 = vmatprep.subr.mxu0 0.0
    %2174 = vmatpush1.msra.mxu0 0.0
    %2175 = vmatprep.subr.mxu0 0.0
    %2176 = vmatpush1.msra.mxu0 0.0
    %2177 = vmatprep.mubr.f32.mxu0 0.0
    %2178 = vmatmul.mubr.f32.gmra.mrb[0].mxu0 %v2111
    %v2179 = vpop.f32.mrb[0].mxu0
    %v2180 = vadd.f32 %v128, %v2179
    %v2181 = vpop.f32.mrb[0].mxu0
    %2182 = vdwg.mxu0
    %s2183 = scalar_lea.vmem [#allocation13], 56
    %2184 = vst [vmem:[%s2183] sm:$0xff] %v2180
    // Predicated region
    $region50: #{tpu_custom_call.1} parent=1 // pred_check
      _
    $region51: #{tpu_custom_call.1} parent=1 // pred_check_branch
      %2186 = sbr.rel (0) target = $region53
    $region52: #{tpu_custom_call.1} parent=1 // pred_region
      %s2188 = ssub.s32 1024, 1024
      %2189 = vsyncadd [#allocation6], %s2188
      %s2190 = sshll.u32 [#allocation13], 4
      %s2191 = int_to_ptr.vmem [resolvable:$true] %s2190
      %2196 = dma.vmem_to_hbm [thread:$0]  %s2191, 1024, %s8, [#allocation6], 128, 128, 8
    $region53: #{tpu_custom_call.1} parent=1 // pred_fallthru
      _
    // Predicated region
    $region54: #{tpu_custom_call.1} parent=1 // pred_check
      _
    $region55: #{tpu_custom_call.1} parent=1 // pred_check_branch
      %2198 = sbr.rel (0) target = $region57
    $region56: #{tpu_custom_call.1} parent=1 // pred_region
      %2199 = dma.done [#allocation6], 1024
    $region57: #{tpu_custom_call.1} parent=1 // pred_fallthru
      _
    %2200 = vsyncpa [#allocation5], 1
    %2201 = vsyncpa [#allocation8], 1
    %2202 = vsyncpa [#allocation11], 1
    %2203 = vsyncpa [#allocation6], 1

</llo_original>
